<compile_context>
chip_gen: v5e
topology: v5e:2x2
jax: 0.10.0
libtpu: 0.0.40
codegen_flags: <defaults>
</compile_context>

<pallas_src>
import jax
import jax.numpy as jnp
from jax.experimental import pallas as pl
from jax.experimental.pallas import tpu as pltpu

KSIZE = 9          # Conv1d kernel size used throughout the model
BN_EPS = 1e-5
FC_TILE_N = 256    # f_out tile width for the big FC layers


# ------------------------- in-kernel building blocks -------------------------

def _conv1_bn_relu(x, w_ref, scale_ref, shift_ref):
    """First conv (C_in == 1) on the VPU: 9 broadcast multiply-adds.

    x: (1, L_in) value; w_ref: (C_out, K); scale/shift refs: (C_out, 1).
    """
    l_in = x.shape[1]
    l_out = l_in - KSIZE + 1
    w = w_ref[...]
    acc = jnp.zeros((w.shape[0], l_out), jnp.float32)
    for k in range(KSIZE):                              # static unroll
        acc = acc + w[:, k:k + 1] * x[:, k:k + l_out]   # (C_out,1)*(1,L_out)
    y = acc * scale_ref[...] + shift_ref[...]
    return jnp.maximum(y, 0.0)


def _conv_bn_relu(x, w_ref, scale_ref, shift_ref):
    """Conv1d (valid) + folded BN affine + ReLU as ONE im2col matmul.

    x: (C_in, L_in) value; w_ref: (C_out, K*C_in) with column order k*C_in+ci;
    scale/shift refs: (C_out, 1).
    """
    l_in = x.shape[1]
    l_out = l_in - KSIZE + 1
    cols = [x[:, k:k + l_out] for k in range(KSIZE)]     # 9 shifted copies
    a = jnp.concatenate(cols, axis=0)                    # (K*C_in, L_out)
    y = jnp.dot(w_ref[...], a, preferred_element_type=jnp.float32)
    y = y * scale_ref[...] + shift_ref[...]
    return jnp.maximum(y, 0.0)


def _maxpool2(x):
    """MaxPool1d(kernel=2, stride=2) along the last (lane) axis of a value.

    The stride-2 selection uses 0/1 selection-matrix matmuls: strided ref
    indexing is rejected by the interpreter and strided value slices are
    fragile in Mosaic, while these tiny dots lower everywhere and the MXU
    cost is negligible.
    """
    l = x.shape[1]
    lo = l // 2
    rows = jax.lax.broadcasted_iota(jnp.int32, (l, lo), 0)
    cols = jax.lax.broadcasted_iota(jnp.int32, (l, lo), 1)
    sel_even = (rows == 2 * cols).astype(x.dtype)        # (l, l//2)
    sel_odd = (rows == 2 * cols + 1).astype(x.dtype)
    a = jnp.dot(x, sel_even, preferred_element_type=jnp.float32)
    b = jnp.dot(x, sel_odd, preferred_element_type=jnp.float32)
    return jnp.maximum(a, b)


# ------------------------------- Pallas kernels ------------------------------

def trunk_kernel(x_ref,
                 w1, s1, h1, w2, s2, h2, w3, s3, h3,
                 w4, s4, h4, w5, s5, h5, w6, s6, h6,
                 o_ref):
    """Entire conv trunk for one batch row; activations stay in vregs/VMEM."""
    x = x_ref[0]                                  # (1, 248)
    x = _conv1_bn_relu(x, w1, s1, h1)             # (32, 240)
    x = _conv_bn_relu(x, w2, s2, h2)              # (32, 232)
    x = _maxpool2(x)                              # (32, 116)
    x = _conv_bn_relu(x, w3, s3, h3)              # (64, 108)
    x = _conv_bn_relu(x, w4, s4, h4)              # (64, 100)
    x = _maxpool2(x)                              # (64, 50)
    x = _conv_bn_relu(x, w5, s5, h5)              # (128, 42)
    x = _conv_bn_relu(x, w6, s6, h6)              # (128, 34)
    x = _maxpool2(x)                              # (128, 17)
    o_ref[0] = x


def linear_relu_kernel(x_ref, w_ref, b_ref, o_ref):
    x = x_ref[...].astype(jnp.bfloat16)           # bf16 MXU operands
    y = jnp.dot(x, w_ref[...], preferred_element_type=jnp.float32)
    o_ref[...] = jnp.maximum(y + b_ref[...], 0.0)  # f32 epilogue


def linear_logsoftmax_kernel(x_ref, w_ref, b_ref, o_ref):
    x = x_ref[...].astype(jnp.bfloat16)
    y = jnp.dot(x, w_ref[...], preferred_element_type=jnp.float32)
    y = y + b_ref[...]
    m = jnp.max(y, axis=-1, keepdims=True)
    lse = m + jnp.log(jnp.sum(jnp.exp(y - m), axis=-1, keepdims=True))
    o_ref[...] = y - lse


# --------------------------------- wrappers ----------------------------------

def conv_trunk(x, conv_params):
    n, _, l_in = x.shape
    c_fin = conv_params[-1][0].shape[0]
    l_fin = l_in
    for _ in range(3):                     # conv,conv,pool  per block
        l_fin = (l_fin - 2 * (KSIZE - 1)) // 2

    flat_args = []
    in_specs = [pl.BlockSpec((1, 1, l_in), lambda i: (i, 0, 0))]
    for w, scale, shift in conv_params:
        flat_args += [w, scale, shift]
        in_specs += [pl.BlockSpec(w.shape, lambda i: (0, 0)),
                     pl.BlockSpec(scale.shape, lambda i: (0, 0)),
                     pl.BlockSpec(shift.shape, lambda i: (0, 0))]

    return pl.pallas_call(
        trunk_kernel,
        out_shape=jax.ShapeDtypeStruct((n, c_fin, l_fin), jnp.float32),
        grid=(n,),
        in_specs=in_specs,
        out_specs=pl.BlockSpec((1, c_fin, l_fin), lambda i: (i, 0, 0)),
        compiler_params=pltpu.CompilerParams(
            dimension_semantics=("parallel",)),
    )(x, *flat_args)


def linear_relu(x, w_bf16, b):
    n, f_in = x.shape
    f_out = w_bf16.shape[1]
    tn = FC_TILE_N
    assert f_out % tn == 0
    return pl.pallas_call(
        linear_relu_kernel,
        out_shape=jax.ShapeDtypeStruct((n, f_out), jnp.float32),
        grid=(f_out // tn,),
        in_specs=[pl.BlockSpec((n, f_in), lambda j: (0, 0)),
                  pl.BlockSpec((f_in, tn), lambda j: (0, j)),
                  pl.BlockSpec((1, tn), lambda j: (0, j))],
        out_specs=pl.BlockSpec((n, tn), lambda j: (0, j)),
        compiler_params=pltpu.CompilerParams(
            dimension_semantics=("parallel",)),
    )(x, w_bf16, b)


def linear_logsoftmax(x, w_bf16, b):
    n = x.shape[0]
    f_out = w_bf16.shape[1]
    return pl.pallas_call(
        linear_logsoftmax_kernel,
        out_shape=jax.ShapeDtypeStruct((n, f_out), jnp.float32),
    )(x, w_bf16, b)


# --------------------------- parameter construction --------------------------

def _fold_bn(conv_b, gamma, beta, run_mean, run_var):
    scale = gamma / jnp.sqrt(run_var + BN_EPS)
    shift = beta - run_mean * scale + conv_b * scale
    return (scale[:, None].astype(jnp.float32),
            shift[:, None].astype(jnp.float32))


def make_params(key):
    """Deterministic synthetic parameters matching Net.__init__ shapes."""
    conv_dims = [(1, 32), (32, 32), (32, 64), (64, 64), (64, 128), (128, 128)]
    params = {"conv": []}
    for c_in, c_out in conv_dims:
        key, kw, kb, kg, kbt, km, kv = jax.random.split(key, 7)
        w = jax.random.normal(kw, (c_out, c_in, KSIZE), jnp.float32) * 0.1
        b = jax.random.normal(kb, (c_out,), jnp.float32) * 0.05
        gamma = 1.0 + 0.1 * jax.random.normal(kg, (c_out,), jnp.float32)
        beta = 0.05 * jax.random.normal(kbt, (c_out,), jnp.float32)
        mean = 0.05 * jax.random.normal(km, (c_out,), jnp.float32)
        var = jax.random.uniform(kv, (c_out,), jnp.float32, 0.5, 1.5)
        scale, shift = _fold_bn(b, gamma, beta, mean, var)
        # im2col weight matrix: (C_out, K*C_in), column order k*C_in + ci.
        w_mat = jnp.transpose(w, (0, 2, 1)).reshape(c_out, KSIZE * c_in)
        params["conv"].append((w_mat, scale, shift))

    fc_dims = [(2176, 1024), (1024, 1024), (1024, 4)]
    params["fc"] = []
    for f_in, f_out in fc_dims:
        key, kw, kb = jax.random.split(key, 3)
        w = jax.random.normal(kw, (f_out, f_in), jnp.float32) / jnp.sqrt(f_in)
        b = jax.random.normal(kb, (f_out,), jnp.float32) * 0.05
        # (F_in, F_out) bf16 operand: halves FC weight HBM traffic (the
        # dominant cost at N=2); accumulation stays f32 in-kernel.
        params["fc"].append((jnp.transpose(w).astype(jnp.bfloat16),
                             b[None, :].astype(jnp.float32)))
    return params


# ----------------------------------- forward ---------------------------------

def net_forward(params, x):
    # Fused conv trunk: conv/BN/ReLU x2 + maxpool, three times, one kernel.
    feats = conv_trunk(x, params["conv"])              # (N, 128, 17)
    n = feats.shape[0]
    feats = jnp.reshape(feats, (n, -1))                # (N, 2176), torch .view order
    # nn.Dropout == identity in inference mode.
    h = linear_relu(feats, *params["fc"][0])           # (N, 1024)
    h = linear_relu(h, *params["fc"][1])               # (N, 1024)
    return linear_logsoftmax(h, *params["fc"][2])      # (N, 4), log_softmax fused


if __name__ == "__main__":
    key = jax.random.PRNGKey(0)
    key, kx = jax.random.split(key)
    # Linear(2176, 1024) after three /2 pools and six k=9 convs implies L=248.
    x = jax.random.normal(kx, (2, 1, 248), jnp.float32)
    params = make_params(key)
    out = net_forward(params, x)
    out = jax.block_until_ready(out)
    assert out.shape == (2, 4) and out.dtype == jnp.float32
    print("KERNEL_OK")
</pallas_src>

<mosaic_0001>
module attributes {stable_mosaic.version = 11 : i64} {
  func.func @trunk_kernel(%arg0: i32, %arg1: memref<1x1x248xf32, #tpu.memory_space<vmem>>, %arg2: memref<32x9xf32, #tpu.memory_space<vmem>>, %arg3: memref<32x1xf32, #tpu.memory_space<vmem>>, %arg4: memref<32x1xf32, #tpu.memory_space<vmem>>, %arg5: memref<32x288xf32, #tpu.memory_space<vmem>>, %arg6: memref<32x1xf32, #tpu.memory_space<vmem>>, %arg7: memref<32x1xf32, #tpu.memory_space<vmem>>, %arg8: memref<64x288xf32, #tpu.memory_space<vmem>>, %arg9: memref<64x1xf32, #tpu.memory_space<vmem>>, %arg10: memref<64x1xf32, #tpu.memory_space<vmem>>, %arg11: memref<64x576xf32, #tpu.memory_space<vmem>>, %arg12: memref<64x1xf32, #tpu.memory_space<vmem>>, %arg13: memref<64x1xf32, #tpu.memory_space<vmem>>, %arg14: memref<128x576xf32, #tpu.memory_space<vmem>>, %arg15: memref<128x1xf32, #tpu.memory_space<vmem>>, %arg16: memref<128x1xf32, #tpu.memory_space<vmem>>, %arg17: memref<128x1152xf32, #tpu.memory_space<vmem>>, %arg18: memref<128x1xf32, #tpu.memory_space<vmem>>, %arg19: memref<128x1xf32, #tpu.memory_space<vmem>>, %arg20: memref<1x128x17xf32, #tpu.memory_space<vmem>>) attributes {dimension_semantics = [#tpu.dimension_semantics<parallel>], iteration_bounds = array<i64: 2>, scalar_prefetch = 0 : i64, scratch_operands = 0 : i64, tpu.core_type = #tpu.core_type<tc>, window_params = [{transform_indices = @transform_0, window_bounds = array<i64: 1, 1, 248>}, {pipeline_mode = #tpu.pipeline_mode<synchronous>, transform_indices = @transform_1, window_bounds = array<i64: 32, 9>}, {pipeline_mode = #tpu.pipeline_mode<synchronous>, transform_indices = @transform_2, window_bounds = array<i64: 32, 1>}, {pipeline_mode = #tpu.pipeline_mode<synchronous>, transform_indices = @transform_3, window_bounds = array<i64: 32, 1>}, {pipeline_mode = #tpu.pipeline_mode<synchronous>, transform_indices = @transform_4, window_bounds = array<i64: 32, 288>}, {pipeline_mode = #tpu.pipeline_mode<synchronous>, transform_indices = @transform_5, window_bounds = array<i64: 32, 1>}, {pipeline_mode = #tpu.pipeline_mode<synchronous>, transform_indices = @transform_6, window_bounds = array<i64: 32, 1>}, {pipeline_mode = #tpu.pipeline_mode<synchronous>, transform_indices = @transform_7, window_bounds = array<i64: 64, 288>}, {pipeline_mode = #tpu.pipeline_mode<synchronous>, transform_indices = @transform_8, window_bounds = array<i64: 64, 1>}, {pipeline_mode = #tpu.pipeline_mode<synchronous>, transform_indices = @transform_9, window_bounds = array<i64: 64, 1>}, {pipeline_mode = #tpu.pipeline_mode<synchronous>, transform_indices = @transform_10, window_bounds = array<i64: 64, 576>}, {pipeline_mode = #tpu.pipeline_mode<synchronous>, transform_indices = @transform_11, window_bounds = array<i64: 64, 1>}, {pipeline_mode = #tpu.pipeline_mode<synchronous>, transform_indices = @transform_12, window_bounds = array<i64: 64, 1>}, {pipeline_mode = #tpu.pipeline_mode<synchronous>, transform_indices = @transform_13, window_bounds = array<i64: 128, 576>}, {pipeline_mode = #tpu.pipeline_mode<synchronous>, transform_indices = @transform_14, window_bounds = array<i64: 128, 1>}, {pipeline_mode = #tpu.pipeline_mode<synchronous>, transform_indices = @transform_15, window_bounds = array<i64: 128, 1>}, {pipeline_mode = #tpu.pipeline_mode<synchronous>, transform_indices = @transform_16, window_bounds = array<i64: 128, 1152>}, {pipeline_mode = #tpu.pipeline_mode<synchronous>, transform_indices = @transform_17, window_bounds = array<i64: 128, 1>}, {pipeline_mode = #tpu.pipeline_mode<synchronous>, transform_indices = @transform_18, window_bounds = array<i64: 128, 1>}, {transform_indices = @transform_19, window_bounds = array<i64: 1, 128, 17>}]} {
    %c0 = arith.constant 0 : index
    %c0_0 = arith.constant 0 : index
    %c0_1 = arith.constant 0 : index
    %0 = vector.load %arg1[%c0, %c0_0, %c0_1] : memref<1x1x248xf32, #tpu.memory_space<vmem>>, vector<1x1x248xf32>
    %1 = vector.shape_cast %0 : vector<1x1x248xf32> to vector<1x248xf32>
    %c0_2 = arith.constant 0 : index
    %c0_3 = arith.constant 0 : index
    %2 = vector.load %arg2[%c0_2, %c0_3] : memref<32x9xf32, #tpu.memory_space<vmem>>, vector<32x9xf32>
    %cst = arith.constant 0.000000e+00 : f32
    %3 = vector.broadcast %cst : f32 to vector<32x240xf32>
    %4 = vector.extract_strided_slice %2 {offsets = [0, 0], sizes = [32, 1], strides = [1, 1]} : vector<32x9xf32> to vector<32x1xf32>
    %5 = vector.extract_strided_slice %1 {offsets = [0, 0], sizes = [1, 240], strides = [1, 1]} : vector<1x248xf32> to vector<1x240xf32>
    %6 = vector.broadcast %4 : vector<32x1xf32> to vector<32x240xf32>
    %7 = vector.broadcast %5 : vector<1x240xf32> to vector<32x240xf32>
    %8 = arith.mulf %6, %7 : vector<32x240xf32>
    %9 = arith.addf %3, %8 : vector<32x240xf32>
    %10 = vector.extract_strided_slice %2 {offsets = [0, 1], sizes = [32, 1], strides = [1, 1]} : vector<32x9xf32> to vector<32x1xf32>
    %11 = vector.extract_strided_slice %1 {offsets = [0, 1], sizes = [1, 240], strides = [1, 1]} : vector<1x248xf32> to vector<1x240xf32>
    %12 = vector.broadcast %10 : vector<32x1xf32> to vector<32x240xf32>
    %13 = vector.broadcast %11 : vector<1x240xf32> to vector<32x240xf32>
    %14 = arith.mulf %12, %13 : vector<32x240xf32>
    %15 = arith.addf %9, %14 : vector<32x240xf32>
    %16 = vector.extract_strided_slice %2 {offsets = [0, 2], sizes = [32, 1], strides = [1, 1]} : vector<32x9xf32> to vector<32x1xf32>
    %17 = vector.extract_strided_slice %1 {offsets = [0, 2], sizes = [1, 240], strides = [1, 1]} : vector<1x248xf32> to vector<1x240xf32>
    %18 = vector.broadcast %16 : vector<32x1xf32> to vector<32x240xf32>
    %19 = vector.broadcast %17 : vector<1x240xf32> to vector<32x240xf32>
    %20 = arith.mulf %18, %19 : vector<32x240xf32>
    %21 = arith.addf %15, %20 : vector<32x240xf32>
    %22 = vector.extract_strided_slice %2 {offsets = [0, 3], sizes = [32, 1], strides = [1, 1]} : vector<32x9xf32> to vector<32x1xf32>
    %23 = vector.extract_strided_slice %1 {offsets = [0, 3], sizes = [1, 240], strides = [1, 1]} : vector<1x248xf32> to vector<1x240xf32>
    %24 = vector.broadcast %22 : vector<32x1xf32> to vector<32x240xf32>
    %25 = vector.broadcast %23 : vector<1x240xf32> to vector<32x240xf32>
    %26 = arith.mulf %24, %25 : vector<32x240xf32>
    %27 = arith.addf %21, %26 : vector<32x240xf32>
    %28 = vector.extract_strided_slice %2 {offsets = [0, 4], sizes = [32, 1], strides = [1, 1]} : vector<32x9xf32> to vector<32x1xf32>
    %29 = vector.extract_strided_slice %1 {offsets = [0, 4], sizes = [1, 240], strides = [1, 1]} : vector<1x248xf32> to vector<1x240xf32>
    %30 = vector.broadcast %28 : vector<32x1xf32> to vector<32x240xf32>
    %31 = vector.broadcast %29 : vector<1x240xf32> to vector<32x240xf32>
    %32 = arith.mulf %30, %31 : vector<32x240xf32>
    %33 = arith.addf %27, %32 : vector<32x240xf32>
    %34 = vector.extract_strided_slice %2 {offsets = [0, 5], sizes = [32, 1], strides = [1, 1]} : vector<32x9xf32> to vector<32x1xf32>
    %35 = vector.extract_strided_slice %1 {offsets = [0, 5], sizes = [1, 240], strides = [1, 1]} : vector<1x248xf32> to vector<1x240xf32>
    %36 = vector.broadcast %34 : vector<32x1xf32> to vector<32x240xf32>
    %37 = vector.broadcast %35 : vector<1x240xf32> to vector<32x240xf32>
    %38 = arith.mulf %36, %37 : vector<32x240xf32>
    %39 = arith.addf %33, %38 : vector<32x240xf32>
    %40 = vector.extract_strided_slice %2 {offsets = [0, 6], sizes = [32, 1], strides = [1, 1]} : vector<32x9xf32> to vector<32x1xf32>
    %41 = vector.extract_strided_slice %1 {offsets = [0, 6], sizes = [1, 240], strides = [1, 1]} : vector<1x248xf32> to vector<1x240xf32>
    %42 = vector.broadcast %40 : vector<32x1xf32> to vector<32x240xf32>
    %43 = vector.broadcast %41 : vector<1x240xf32> to vector<32x240xf32>
    %44 = arith.mulf %42, %43 : vector<32x240xf32>
    %45 = arith.addf %39, %44 : vector<32x240xf32>
    %46 = vector.extract_strided_slice %2 {offsets = [0, 7], sizes = [32, 1], strides = [1, 1]} : vector<32x9xf32> to vector<32x1xf32>
    %47 = vector.extract_strided_slice %1 {offsets = [0, 7], sizes = [1, 240], strides = [1, 1]} : vector<1x248xf32> to vector<1x240xf32>
    %48 = vector.broadcast %46 : vector<32x1xf32> to vector<32x240xf32>
    %49 = vector.broadcast %47 : vector<1x240xf32> to vector<32x240xf32>
    %50 = arith.mulf %48, %49 : vector<32x240xf32>
    %51 = arith.addf %45, %50 : vector<32x240xf32>
    %52 = vector.extract_strided_slice %2 {offsets = [0, 8], sizes = [32, 1], strides = [1, 1]} : vector<32x9xf32> to vector<32x1xf32>
    %53 = vector.extract_strided_slice %1 {offsets = [0, 8], sizes = [1, 240], strides = [1, 1]} : vector<1x248xf32> to vector<1x240xf32>
    %54 = vector.broadcast %52 : vector<32x1xf32> to vector<32x240xf32>
    %55 = vector.broadcast %53 : vector<1x240xf32> to vector<32x240xf32>
    %56 = arith.mulf %54, %55 : vector<32x240xf32>
    %57 = arith.addf %51, %56 : vector<32x240xf32>
    %c0_4 = arith.constant 0 : index
    %c0_5 = arith.constant 0 : index
    %58 = vector.load %arg3[%c0_4, %c0_5] : memref<32x1xf32, #tpu.memory_space<vmem>>, vector<32x1xf32>
    %59 = vector.broadcast %58 : vector<32x1xf32> to vector<32x240xf32>
    %60 = arith.mulf %57, %59 : vector<32x240xf32>
    %c0_6 = arith.constant 0 : index
    %c0_7 = arith.constant 0 : index
    %61 = vector.load %arg4[%c0_6, %c0_7] : memref<32x1xf32, #tpu.memory_space<vmem>>, vector<32x1xf32>
    %62 = vector.broadcast %61 : vector<32x1xf32> to vector<32x240xf32>
    %63 = arith.addf %60, %62 : vector<32x240xf32>
    %cst_8 = arith.constant 0.000000e+00 : f32
    %64 = vector.broadcast %cst_8 : f32 to vector<32x240xf32>
    %65 = arith.maximumf %63, %64 : vector<32x240xf32>
    %66 = vector.extract_strided_slice %65 {offsets = [0, 0], sizes = [32, 232], strides = [1, 1]} : vector<32x240xf32> to vector<32x232xf32>
    %67 = vector.extract_strided_slice %65 {offsets = [0, 1], sizes = [32, 232], strides = [1, 1]} : vector<32x240xf32> to vector<32x232xf32>
    %68 = vector.extract_strided_slice %65 {offsets = [0, 2], sizes = [32, 232], strides = [1, 1]} : vector<32x240xf32> to vector<32x232xf32>
    %69 = vector.extract_strided_slice %65 {offsets = [0, 3], sizes = [32, 232], strides = [1, 1]} : vector<32x240xf32> to vector<32x232xf32>
    %70 = vector.extract_strided_slice %65 {offsets = [0, 4], sizes = [32, 232], strides = [1, 1]} : vector<32x240xf32> to vector<32x232xf32>
    %71 = vector.extract_strided_slice %65 {offsets = [0, 5], sizes = [32, 232], strides = [1, 1]} : vector<32x240xf32> to vector<32x232xf32>
    %72 = vector.extract_strided_slice %65 {offsets = [0, 6], sizes = [32, 232], strides = [1, 1]} : vector<32x240xf32> to vector<32x232xf32>
    %73 = vector.extract_strided_slice %65 {offsets = [0, 7], sizes = [32, 232], strides = [1, 1]} : vector<32x240xf32> to vector<32x232xf32>
    %74 = vector.extract_strided_slice %65 {offsets = [0, 8], sizes = [32, 232], strides = [1, 1]} : vector<32x240xf32> to vector<32x232xf32>
    %75 = tpu.concatenate %66, %67, %68, %69, %70, %71, %72, %73, %74 in 0 : vector<32x232xf32>, vector<32x232xf32>, vector<32x232xf32>, vector<32x232xf32>, vector<32x232xf32>, vector<32x232xf32>, vector<32x232xf32>, vector<32x232xf32>, vector<32x232xf32> -> vector<288x232xf32>
    %c0_9 = arith.constant 0 : index
    %c0_10 = arith.constant 0 : index
    %76 = vector.load %arg5[%c0_9, %c0_10] : memref<32x288xf32, #tpu.memory_space<vmem>>, vector<32x288xf32>
    %cst_11 = arith.constant dense<0.000000e+00> : vector<32x232xf32>
    %77 = tpu.matmul %76, %75, %cst_11 {dimension_numbers = #tpu.dot_dimension_numbers<[1], [0], [0], [1], [0, 0, 1, 1], [], []>} : vector<32x288xf32>, vector<288x232xf32>, vector<32x232xf32> -> vector<32x232xf32>
    %c0_12 = arith.constant 0 : index
    %c0_13 = arith.constant 0 : index
    %78 = vector.load %arg6[%c0_12, %c0_13] : memref<32x1xf32, #tpu.memory_space<vmem>>, vector<32x1xf32>
    %79 = vector.broadcast %78 : vector<32x1xf32> to vector<32x232xf32>
    %80 = arith.mulf %77, %79 : vector<32x232xf32>
    %c0_14 = arith.constant 0 : index
    %c0_15 = arith.constant 0 : index
    %81 = vector.load %arg7[%c0_14, %c0_15] : memref<32x1xf32, #tpu.memory_space<vmem>>, vector<32x1xf32>
    %82 = vector.broadcast %81 : vector<32x1xf32> to vector<32x232xf32>
    %83 = arith.addf %80, %82 : vector<32x232xf32>
    %cst_16 = arith.constant 0.000000e+00 : f32
    %84 = vector.broadcast %cst_16 : f32 to vector<32x232xf32>
    %85 = arith.maximumf %83, %84 : vector<32x232xf32>
    %86 = tpu.iota {dimensions = array<i32: 0>} : vector<232x116xi32>
    %87 = tpu.iota {dimensions = array<i32: 1>} : vector<232x116xi32>
    %c2_i32 = arith.constant 2 : i32
    %88 = vector.broadcast %c2_i32 : i32 to vector<232x116xi32>
    %89 = arith.muli %88, %87 : vector<232x116xi32>
    %90 = arith.cmpi eq, %86, %89 : vector<232x116xi32>
    %91 = arith.extui %90 : vector<232x116xi1> to vector<232x116xi32>
    %92 = arith.sitofp %91 : vector<232x116xi32> to vector<232x116xf32>
    %c2_i32_17 = arith.constant 2 : i32
    %93 = vector.broadcast %c2_i32_17 : i32 to vector<232x116xi32>
    %94 = arith.muli %93, %87 : vector<232x116xi32>
    %c1_i32 = arith.constant 1 : i32
    %95 = vector.broadcast %c1_i32 : i32 to vector<232x116xi32>
    %96 = arith.addi %94, %95 : vector<232x116xi32>
    %97 = arith.cmpi eq, %86, %96 : vector<232x116xi32>
    %98 = arith.extui %97 : vector<232x116xi1> to vector<232x116xi32>
    %99 = arith.sitofp %98 : vector<232x116xi32> to vector<232x116xf32>
    %cst_18 = arith.constant dense<0.000000e+00> : vector<32x116xf32>
    %100 = tpu.matmul %85, %92, %cst_18 {dimension_numbers = #tpu.dot_dimension_numbers<[1], [0], [0], [1], [0, 0, 1, 1], [], []>} : vector<32x232xf32>, vector<232x116xf32>, vector<32x116xf32> -> vector<32x116xf32>
    %cst_19 = arith.constant dense<0.000000e+00> : vector<32x116xf32>
    %101 = tpu.matmul %85, %99, %cst_19 {dimension_numbers = #tpu.dot_dimension_numbers<[1], [0], [0], [1], [0, 0, 1, 1], [], []>} : vector<32x232xf32>, vector<232x116xf32>, vector<32x116xf32> -> vector<32x116xf32>
    %102 = arith.maximumf %100, %101 : vector<32x116xf32>
    %103 = vector.extract_strided_slice %102 {offsets = [0, 0], sizes = [32, 108], strides = [1, 1]} : vector<32x116xf32> to vector<32x108xf32>
    %104 = vector.extract_strided_slice %102 {offsets = [0, 1], sizes = [32, 108], strides = [1, 1]} : vector<32x116xf32> to vector<32x108xf32>
    %105 = vector.extract_strided_slice %102 {offsets = [0, 2], sizes = [32, 108], strides = [1, 1]} : vector<32x116xf32> to vector<32x108xf32>
    %106 = vector.extract_strided_slice %102 {offsets = [0, 3], sizes = [32, 108], strides = [1, 1]} : vector<32x116xf32> to vector<32x108xf32>
    %107 = vector.extract_strided_slice %102 {offsets = [0, 4], sizes = [32, 108], strides = [1, 1]} : vector<32x116xf32> to vector<32x108xf32>
    %108 = vector.extract_strided_slice %102 {offsets = [0, 5], sizes = [32, 108], strides = [1, 1]} : vector<32x116xf32> to vector<32x108xf32>
    %109 = vector.extract_strided_slice %102 {offsets = [0, 6], sizes = [32, 108], strides = [1, 1]} : vector<32x116xf32> to vector<32x108xf32>
    %110 = vector.extract_strided_slice %102 {offsets = [0, 7], sizes = [32, 108], strides = [1, 1]} : vector<32x116xf32> to vector<32x108xf32>
    %111 = vector.extract_strided_slice %102 {offsets = [0, 8], sizes = [32, 108], strides = [1, 1]} : vector<32x116xf32> to vector<32x108xf32>
    %112 = tpu.concatenate %103, %104, %105, %106, %107, %108, %109, %110, %111 in 0 : vector<32x108xf32>, vector<32x108xf32>, vector<32x108xf32>, vector<32x108xf32>, vector<32x108xf32>, vector<32x108xf32>, vector<32x108xf32>, vector<32x108xf32>, vector<32x108xf32> -> vector<288x108xf32>
    %c0_20 = arith.constant 0 : index
    %c0_21 = arith.constant 0 : index
    %113 = vector.load %arg8[%c0_20, %c0_21] : memref<64x288xf32, #tpu.memory_space<vmem>>, vector<64x288xf32>
    %cst_22 = arith.constant dense<0.000000e+00> : vector<64x108xf32>
    %114 = tpu.matmul %113, %112, %cst_22 {dimension_numbers = #tpu.dot_dimension_numbers<[1], [0], [0], [1], [0, 0, 1, 1], [], []>} : vector<64x288xf32>, vector<288x108xf32>, vector<64x108xf32> -> vector<64x108xf32>
    %c0_23 = arith.constant 0 : index
    %c0_24 = arith.constant 0 : index
    %115 = vector.load %arg9[%c0_23, %c0_24] : memref<64x1xf32, #tpu.memory_space<vmem>>, vector<64x1xf32>
    %116 = vector.broadcast %115 : vector<64x1xf32> to vector<64x108xf32>
    %117 = arith.mulf %114, %116 : vector<64x108xf32>
    %c0_25 = arith.constant 0 : index
    %c0_26 = arith.constant 0 : index
    %118 = vector.load %arg10[%c0_25, %c0_26] : memref<64x1xf32, #tpu.memory_space<vmem>>, vector<64x1xf32>
    %119 = vector.broadcast %118 : vector<64x1xf32> to vector<64x108xf32>
    %120 = arith.addf %117, %119 : vector<64x108xf32>
    %cst_27 = arith.constant 0.000000e+00 : f32
    %121 = vector.broadcast %cst_27 : f32 to vector<64x108xf32>
    %122 = arith.maximumf %120, %121 : vector<64x108xf32>
    %123 = vector.extract_strided_slice %122 {offsets = [0, 0], sizes = [64, 100], strides = [1, 1]} : vector<64x108xf32> to vector<64x100xf32>
    %124 = vector.extract_strided_slice %122 {offsets = [0, 1], sizes = [64, 100], strides = [1, 1]} : vector<64x108xf32> to vector<64x100xf32>
    %125 = vector.extract_strided_slice %122 {offsets = [0, 2], sizes = [64, 100], strides = [1, 1]} : vector<64x108xf32> to vector<64x100xf32>
    %126 = vector.extract_strided_slice %122 {offsets = [0, 3], sizes = [64, 100], strides = [1, 1]} : vector<64x108xf32> to vector<64x100xf32>
    %127 = vector.extract_strided_slice %122 {offsets = [0, 4], sizes = [64, 100], strides = [1, 1]} : vector<64x108xf32> to vector<64x100xf32>
    %128 = vector.extract_strided_slice %122 {offsets = [0, 5], sizes = [64, 100], strides = [1, 1]} : vector<64x108xf32> to vector<64x100xf32>
    %129 = vector.extract_strided_slice %122 {offsets = [0, 6], sizes = [64, 100], strides = [1, 1]} : vector<64x108xf32> to vector<64x100xf32>
    %130 = vector.extract_strided_slice %122 {offsets = [0, 7], sizes = [64, 100], strides = [1, 1]} : vector<64x108xf32> to vector<64x100xf32>
    %131 = vector.extract_strided_slice %122 {offsets = [0, 8], sizes = [64, 100], strides = [1, 1]} : vector<64x108xf32> to vector<64x100xf32>
    %132 = tpu.concatenate %123, %124, %125, %126, %127, %128, %129, %130, %131 in 0 : vector<64x100xf32>, vector<64x100xf32>, vector<64x100xf32>, vector<64x100xf32>, vector<64x100xf32>, vector<64x100xf32>, vector<64x100xf32>, vector<64x100xf32>, vector<64x100xf32> -> vector<576x100xf32>
    %c0_28 = arith.constant 0 : index
    %c0_29 = arith.constant 0 : index
    %133 = vector.load %arg11[%c0_28, %c0_29] : memref<64x576xf32, #tpu.memory_space<vmem>>, vector<64x576xf32>
    %cst_30 = arith.constant dense<0.000000e+00> : vector<64x100xf32>
    %134 = tpu.matmul %133, %132, %cst_30 {dimension_numbers = #tpu.dot_dimension_numbers<[1], [0], [0], [1], [0, 0, 1, 1], [], []>} : vector<64x576xf32>, vector<576x100xf32>, vector<64x100xf32> -> vector<64x100xf32>
    %c0_31 = arith.constant 0 : index
    %c0_32 = arith.constant 0 : index
    %135 = vector.load %arg12[%c0_31, %c0_32] : memref<64x1xf32, #tpu.memory_space<vmem>>, vector<64x1xf32>
    %136 = vector.broadcast %135 : vector<64x1xf32> to vector<64x100xf32>
    %137 = arith.mulf %134, %136 : vector<64x100xf32>
    %c0_33 = arith.constant 0 : index
    %c0_34 = arith.constant 0 : index
    %138 = vector.load %arg13[%c0_33, %c0_34] : memref<64x1xf32, #tpu.memory_space<vmem>>, vector<64x1xf32>
    %139 = vector.broadcast %138 : vector<64x1xf32> to vector<64x100xf32>
    %140 = arith.addf %137, %139 : vector<64x100xf32>
    %cst_35 = arith.constant 0.000000e+00 : f32
    %141 = vector.broadcast %cst_35 : f32 to vector<64x100xf32>
    %142 = arith.maximumf %140, %141 : vector<64x100xf32>
    %143 = tpu.iota {dimensions = array<i32: 0>} : vector<100x50xi32>
    %144 = tpu.iota {dimensions = array<i32: 1>} : vector<100x50xi32>
    %c2_i32_36 = arith.constant 2 : i32
    %145 = vector.broadcast %c2_i32_36 : i32 to vector<100x50xi32>
    %146 = arith.muli %145, %144 : vector<100x50xi32>
    %147 = arith.cmpi eq, %143, %146 : vector<100x50xi32>
    %148 = arith.extui %147 : vector<100x50xi1> to vector<100x50xi32>
    %149 = arith.sitofp %148 : vector<100x50xi32> to vector<100x50xf32>
    %c2_i32_37 = arith.constant 2 : i32
    %150 = vector.broadcast %c2_i32_37 : i32 to vector<100x50xi32>
    %151 = arith.muli %150, %144 : vector<100x50xi32>
    %c1_i32_38 = arith.constant 1 : i32
    %152 = vector.broadcast %c1_i32_38 : i32 to vector<100x50xi32>
    %153 = arith.addi %151, %152 : vector<100x50xi32>
    %154 = arith.cmpi eq, %143, %153 : vector<100x50xi32>
    %155 = arith.extui %154 : vector<100x50xi1> to vector<100x50xi32>
    %156 = arith.sitofp %155 : vector<100x50xi32> to vector<100x50xf32>
    %cst_39 = arith.constant dense<0.000000e+00> : vector<64x50xf32>
    %157 = tpu.matmul %142, %149, %cst_39 {dimension_numbers = #tpu.dot_dimension_numbers<[1], [0], [0], [1], [0, 0, 1, 1], [], []>} : vector<64x100xf32>, vector<100x50xf32>, vector<64x50xf32> -> vector<64x50xf32>
    %cst_40 = arith.constant dense<0.000000e+00> : vector<64x50xf32>
    %158 = tpu.matmul %142, %156, %cst_40 {dimension_numbers = #tpu.dot_dimension_numbers<[1], [0], [0], [1], [0, 0, 1, 1], [], []>} : vector<64x100xf32>, vector<100x50xf32>, vector<64x50xf32> -> vector<64x50xf32>
    %159 = arith.maximumf %157, %158 : vector<64x50xf32>
    %160 = vector.extract_strided_slice %159 {offsets = [0, 0], sizes = [64, 42], strides = [1, 1]} : vector<64x50xf32> to vector<64x42xf32>
    %161 = vector.extract_strided_slice %159 {offsets = [0, 1], sizes = [64, 42], strides = [1, 1]} : vector<64x50xf32> to vector<64x42xf32>
    %162 = vector.extract_strided_slice %159 {offsets = [0, 2], sizes = [64, 42], strides = [1, 1]} : vector<64x50xf32> to vector<64x42xf32>
    %163 = vector.extract_strided_slice %159 {offsets = [0, 3], sizes = [64, 42], strides = [1, 1]} : vector<64x50xf32> to vector<64x42xf32>
    %164 = vector.extract_strided_slice %159 {offsets = [0, 4], sizes = [64, 42], strides = [1, 1]} : vector<64x50xf32> to vector<64x42xf32>
    %165 = vector.extract_strided_slice %159 {offsets = [0, 5], sizes = [64, 42], strides = [1, 1]} : vector<64x50xf32> to vector<64x42xf32>
    %166 = vector.extract_strided_slice %159 {offsets = [0, 6], sizes = [64, 42], strides = [1, 1]} : vector<64x50xf32> to vector<64x42xf32>
    %167 = vector.extract_strided_slice %159 {offsets = [0, 7], sizes = [64, 42], strides = [1, 1]} : vector<64x50xf32> to vector<64x42xf32>
    %168 = vector.extract_strided_slice %159 {offsets = [0, 8], sizes = [64, 42], strides = [1, 1]} : vector<64x50xf32> to vector<64x42xf32>
    %169 = tpu.concatenate %160, %161, %162, %163, %164, %165, %166, %167, %168 in 0 : vector<64x42xf32>, vector<64x42xf32>, vector<64x42xf32>, vector<64x42xf32>, vector<64x42xf32>, vector<64x42xf32>, vector<64x42xf32>, vector<64x42xf32>, vector<64x42xf32> -> vector<576x42xf32>
    %c0_41 = arith.constant 0 : index
    %c0_42 = arith.constant 0 : index
    %170 = vector.load %arg14[%c0_41, %c0_42] : memref<128x576xf32, #tpu.memory_space<vmem>>, vector<128x576xf32>
    %cst_43 = arith.constant dense<0.000000e+00> : vector<128x42xf32>
    %171 = tpu.matmul %170, %169, %cst_43 {dimension_numbers = #tpu.dot_dimension_numbers<[1], [0], [0], [1], [0, 0, 1, 1], [], []>} : vector<128x576xf32>, vector<576x42xf32>, vector<128x42xf32> -> vector<128x42xf32>
    %c0_44 = arith.constant 0 : index
    %c0_45 = arith.constant 0 : index
    %172 = vector.load %arg15[%c0_44, %c0_45] : memref<128x1xf32, #tpu.memory_space<vmem>>, vector<128x1xf32>
    %173 = vector.broadcast %172 : vector<128x1xf32> to vector<128x42xf32>
    %174 = arith.mulf %171, %173 : vector<128x42xf32>
    %c0_46 = arith.constant 0 : index
    %c0_47 = arith.constant 0 : index
    %175 = vector.load %arg16[%c0_46, %c0_47] : memref<128x1xf32, #tpu.memory_space<vmem>>, vector<128x1xf32>
    %176 = vector.broadcast %175 : vector<128x1xf32> to vector<128x42xf32>
    %177 = arith.addf %174, %176 : vector<128x42xf32>
    %cst_48 = arith.constant 0.000000e+00 : f32
    %178 = vector.broadcast %cst_48 : f32 to vector<128x42xf32>
    %179 = arith.maximumf %177, %178 : vector<128x42xf32>
    %180 = vector.extract_strided_slice %179 {offsets = [0, 0], sizes = [128, 34], strides = [1, 1]} : vector<128x42xf32> to vector<128x34xf32>
    %181 = vector.extract_strided_slice %179 {offsets = [0, 1], sizes = [128, 34], strides = [1, 1]} : vector<128x42xf32> to vector<128x34xf32>
    %182 = vector.extract_strided_slice %179 {offsets = [0, 2], sizes = [128, 34], strides = [1, 1]} : vector<128x42xf32> to vector<128x34xf32>
    %183 = vector.extract_strided_slice %179 {offsets = [0, 3], sizes = [128, 34], strides = [1, 1]} : vector<128x42xf32> to vector<128x34xf32>
    %184 = vector.extract_strided_slice %179 {offsets = [0, 4], sizes = [128, 34], strides = [1, 1]} : vector<128x42xf32> to vector<128x34xf32>
    %185 = vector.extract_strided_slice %179 {offsets = [0, 5], sizes = [128, 34], strides = [1, 1]} : vector<128x42xf32> to vector<128x34xf32>
    %186 = vector.extract_strided_slice %179 {offsets = [0, 6], sizes = [128, 34], strides = [1, 1]} : vector<128x42xf32> to vector<128x34xf32>
    %187 = vector.extract_strided_slice %179 {offsets = [0, 7], sizes = [128, 34], strides = [1, 1]} : vector<128x42xf32> to vector<128x34xf32>
    %188 = vector.extract_strided_slice %179 {offsets = [0, 8], sizes = [128, 34], strides = [1, 1]} : vector<128x42xf32> to vector<128x34xf32>
    %189 = tpu.concatenate %180, %181, %182, %183, %184, %185, %186, %187, %188 in 0 : vector<128x34xf32>, vector<128x34xf32>, vector<128x34xf32>, vector<128x34xf32>, vector<128x34xf32>, vector<128x34xf32>, vector<128x34xf32>, vector<128x34xf32>, vector<128x34xf32> -> vector<1152x34xf32>
    %c0_49 = arith.constant 0 : index
    %c0_50 = arith.constant 0 : index
    %190 = vector.load %arg17[%c0_49, %c0_50] : memref<128x1152xf32, #tpu.memory_space<vmem>>, vector<128x1152xf32>
    %cst_51 = arith.constant dense<0.000000e+00> : vector<128x34xf32>
    %191 = tpu.matmul %190, %189, %cst_51 {dimension_numbers = #tpu.dot_dimension_numbers<[1], [0], [0], [1], [0, 0, 1, 1], [], []>} : vector<128x1152xf32>, vector<1152x34xf32>, vector<128x34xf32> -> vector<128x34xf32>
    %c0_52 = arith.constant 0 : index
    %c0_53 = arith.constant 0 : index
    %192 = vector.load %arg18[%c0_52, %c0_53] : memref<128x1xf32, #tpu.memory_space<vmem>>, vector<128x1xf32>
    %193 = vector.broadcast %192 : vector<128x1xf32> to vector<128x34xf32>
    %194 = arith.mulf %191, %193 : vector<128x34xf32>
    %c0_54 = arith.constant 0 : index
    %c0_55 = arith.constant 0 : index
    %195 = vector.load %arg19[%c0_54, %c0_55] : memref<128x1xf32, #tpu.memory_space<vmem>>, vector<128x1xf32>
    %196 = vector.broadcast %195 : vector<128x1xf32> to vector<128x34xf32>
    %197 = arith.addf %194, %196 : vector<128x34xf32>
    %cst_56 = arith.constant 0.000000e+00 : f32
    %198 = vector.broadcast %cst_56 : f32 to vector<128x34xf32>
    %199 = arith.maximumf %197, %198 : vector<128x34xf32>
    %200 = tpu.iota {dimensions = array<i32: 0>} : vector<34x17xi32>
    %201 = tpu.iota {dimensions = array<i32: 1>} : vector<34x17xi32>
    %c2_i32_57 = arith.constant 2 : i32
    %202 = vector.broadcast %c2_i32_57 : i32 to vector<34x17xi32>
    %203 = arith.muli %202, %201 : vector<34x17xi32>
    %204 = arith.cmpi eq, %200, %203 : vector<34x17xi32>
    %205 = arith.extui %204 : vector<34x17xi1> to vector<34x17xi32>
    %206 = arith.sitofp %205 : vector<34x17xi32> to vector<34x17xf32>
    %c2_i32_58 = arith.constant 2 : i32
    %207 = vector.broadcast %c2_i32_58 : i32 to vector<34x17xi32>
    %208 = arith.muli %207, %201 : vector<34x17xi32>
    %c1_i32_59 = arith.constant 1 : i32
    %209 = vector.broadcast %c1_i32_59 : i32 to vector<34x17xi32>
    %210 = arith.addi %208, %209 : vector<34x17xi32>
    %211 = arith.cmpi eq, %200, %210 : vector<34x17xi32>
    %212 = arith.extui %211 : vector<34x17xi1> to vector<34x17xi32>
    %213 = arith.sitofp %212 : vector<34x17xi32> to vector<34x17xf32>
    %cst_60 = arith.constant dense<0.000000e+00> : vector<128x17xf32>
    %214 = tpu.matmul %199, %206, %cst_60 {dimension_numbers = #tpu.dot_dimension_numbers<[1], [0], [0], [1], [0, 0, 1, 1], [], []>} : vector<128x34xf32>, vector<34x17xf32>, vector<128x17xf32> -> vector<128x17xf32>
    %cst_61 = arith.constant dense<0.000000e+00> : vector<128x17xf32>
    %215 = tpu.matmul %199, %213, %cst_61 {dimension_numbers = #tpu.dot_dimension_numbers<[1], [0], [0], [1], [0, 0, 1, 1], [], []>} : vector<128x34xf32>, vector<34x17xf32>, vector<128x17xf32> -> vector<128x17xf32>
    %216 = arith.maximumf %214, %215 : vector<128x17xf32>
    %c0_62 = arith.constant 0 : index
    %c0_63 = arith.constant 0 : index
    %c0_64 = arith.constant 0 : index
    %217 = vector.load %arg20[%c0_62, %c0_63, %c0_64] : memref<1x128x17xf32, #tpu.memory_space<vmem>>, vector<1x128x17xf32>
    %218 = vector.shape_cast %217 : vector<1x128x17xf32> to vector<128x17xf32>
    %219 = vector.shape_cast %216 : vector<128x17xf32> to vector<1x128x17xf32>
    tpu.vector_store %arg20[%c0_62, %c0_63, %c0_64], %219 {strides = array<i32>} : memref<1x128x17xf32, #tpu.memory_space<vmem>>, vector<1x128x17xf32>,
    return
  }
  func.func @transform_0(%arg0: i32) -> (i32, i32, i32) {
    %c0_i32 = arith.constant 0 : i32
    %c0_i32_0 = arith.constant 0 : i32
    %c0_i32_1 = arith.constant 0 : i32
    return %arg0, %c0_i32, %c0_i32_0 : i32, i32, i32
  }
  func.func @transform_1(%arg0: i32) -> (i32, i32) {
    %c0_i32 = arith.constant 0 : i32
    %c0_i32_0 = arith.constant 0 : i32
    %c0_i32_1 = arith.constant 0 : i32
    return %c0_i32, %c0_i32_0 : i32, i32
  }
  func.func @transform_2(%arg0: i32) -> (i32, i32) {
    %c0_i32 = arith.constant 0 : i32
    %c0_i32_0 = arith.constant 0 : i32
    %c0_i32_1 = arith.constant 0 : i32
    return %c0_i32, %c0_i32_0 : i32, i32
  }
  func.func @transform_3(%arg0: i32) -> (i32, i32) {
    %c0_i32 = arith.constant 0 : i32
    %c0_i32_0 = arith.constant 0 : i32
    %c0_i32_1 = arith.constant 0 : i32
    return %c0_i32, %c0_i32_0 : i32, i32
  }
  func.func @transform_4(%arg0: i32) -> (i32, i32) {
    %c0_i32 = arith.constant 0 : i32
    %c0_i32_0 = arith.constant 0 : i32
    %c0_i32_1 = arith.constant 0 : i32
    return %c0_i32, %c0_i32_0 : i32, i32
  }
  func.func @transform_5(%arg0: i32) -> (i32, i32) {
    %c0_i32 = arith.constant 0 : i32
    %c0_i32_0 = arith.constant 0 : i32
    %c0_i32_1 = arith.constant 0 : i32
    return %c0_i32, %c0_i32_0 : i32, i32
  }
  func.func @transform_6(%arg0: i32) -> (i32, i32) {
    %c0_i32 = arith.constant 0 : i32
    %c0_i32_0 = arith.constant 0 : i32
    %c0_i32_1 = arith.constant 0 : i32
    return %c0_i32, %c0_i32_0 : i32, i32
  }
  func.func @transform_7(%arg0: i32) -> (i32, i32) {
    %c0_i32 = arith.constant 0 : i32
    %c0_i32_0 = arith.constant 0 : i32
    %c0_i32_1 = arith.constant 0 : i32
    return %c0_i32, %c0_i32_0 : i32, i32
  }
  func.func @transform_8(%arg0: i32) -> (i32, i32) {
    %c0_i32 = arith.constant 0 : i32
    %c0_i32_0 = arith.constant 0 : i32
    %c0_i32_1 = arith.constant 0 : i32
    return %c0_i32, %c0_i32_0 : i32, i32
  }
  func.func @transform_9(%arg0: i32) -> (i32, i32) {
    %c0_i32 = arith.constant 0 : i32
    %c0_i32_0 = arith.constant 0 : i32
    %c0_i32_1 = arith.constant 0 : i32
    return %c0_i32, %c0_i32_0 : i32, i32
  }
  func.func @transform_10(%arg0: i32) -> (i32, i32) {
    %c0_i32 = arith.constant 0 : i32
    %c0_i32_0 = arith.constant 0 : i32
    %c0_i32_1 = arith.constant 0 : i32
    return %c0_i32, %c0_i32_0 : i32, i32
  }
  func.func @transform_11(%arg0: i32) -> (i32, i32) {
    %c0_i32 = arith.constant 0 : i32
    %c0_i32_0 = arith.constant 0 : i32
    %c0_i32_1 = arith.constant 0 : i32
    return %c0_i32, %c0_i32_0 : i32, i32
  }
  func.func @transform_12(%arg0: i32) -> (i32, i32) {
    %c0_i32 = arith.constant 0 : i32
    %c0_i32_0 = arith.constant 0 : i32
    %c0_i32_1 = arith.constant 0 : i32
    return %c0_i32, %c0_i32_0 : i32, i32
  }
  func.func @transform_13(%arg0: i32) -> (i32, i32) {
    %c0_i32 = arith.constant 0 : i32
    %c0_i32_0 = arith.constant 0 : i32
    %c0_i32_1 = arith.constant 0 : i32
    return %c0_i32, %c0_i32_0 : i32, i32
  }
  func.func @transform_14(%arg0: i32) -> (i32, i32) {
    %c0_i32 = arith.constant 0 : i32
    %c0_i32_0 = arith.constant 0 : i32
    %c0_i32_1 = arith.constant 0 : i32
    return %c0_i32, %c0_i32_0 : i32, i32
  }
  func.func @transform_15(%arg0: i32) -> (i32, i32) {
    %c0_i32 = arith.constant 0 : i32
    %c0_i32_0 = arith.constant 0 : i32
    %c0_i32_1 = arith.constant 0 : i32
    return %c0_i32, %c0_i32_0 : i32, i32
  }
  func.func @transform_16(%arg0: i32) -> (i32, i32) {
    %c0_i32 = arith.constant 0 : i32
    %c0_i32_0 = arith.constant 0 : i32
    %c0_i32_1 = arith.constant 0 : i32
    return %c0_i32, %c0_i32_0 : i32, i32
  }
  func.func @transform_17(%arg0: i32) -> (i32, i32) {
    %c0_i32 = arith.constant 0 : i32
    %c0_i32_0 = arith.constant 0 : i32
    %c0_i32_1 = arith.constant 0 : i32
    return %c0_i32, %c0_i32_0 : i32, i32
  }
  func.func @transform_18(%arg0: i32) -> (i32, i32) {
    %c0_i32 = arith.constant 0 : i32
    %c0_i32_0 = arith.constant 0 : i32
    %c0_i32_1 = arith.constant 0 : i32
    return %c0_i32, %c0_i32_0 : i32, i32
  }
  func.func @transform_19(%arg0: i32) -> (i32, i32, i32) {
    %c0_i32 = arith.constant 0 : i32
    %c0_i32_0 = arith.constant 0 : i32
    %c0_i32_1 = arith.constant 0 : i32
    return %arg0, %c0_i32, %c0_i32_0 : i32, i32, i32
  }
}

</mosaic_0001>

<llo_original>
// kernel: tpu_custom_call.1
$region0: #{tpu_custom_call.1}
  #allocation0 [shape = 'u32[]', space=smem, size = 0x4, offset = 0x4, fixed_abs, tag = 'smem constant byte address 0x4 - core index']
  #allocation1 [shape = 'u32[72,128]{1,0:T(1,128)}', space=vmem, size = 0x9000, scoped, tag = 'internal scratch']
  %s0 = inlined_call_operand.vmem [shape: f32[2,1,248], index: 0, kind: input, shape index: {}]
  %s1 = inlined_call_operand.vmem [shape: f32[32,9], index: 1, kind: input, shape index: {}]
  %s2 = inlined_call_operand.vmem [shape: f32[32,1], index: 2, kind: input, shape index: {}]
  %s3 = inlined_call_operand.vmem [shape: f32[32,1], index: 3, kind: input, shape index: {}]
  %s4 = inlined_call_operand.vmem [shape: f32[32,288], index: 4, kind: input, shape index: {}]
  %s5 = inlined_call_operand.vmem [shape: f32[32,1], index: 5, kind: input, shape index: {}]
  %s6 = inlined_call_operand.vmem [shape: f32[32,1], index: 6, kind: input, shape index: {}]
  %s7 = inlined_call_operand.hbm [shape: f32[64,288], index: 7, kind: input, shape index: {}]
  %s8 = inlined_call_operand.vmem [shape: f32[64,1], index: 8, kind: input, shape index: {}]
  %s9 = inlined_call_operand.vmem [shape: f32[64,1], index: 9, kind: input, shape index: {}]
  %s10 = inlined_call_operand.vmem [shape: f32[64,576], index: 10, kind: input, shape index: {}]
  %s11 = inlined_call_operand.vmem [shape: f32[64,1], index: 11, kind: input, shape index: {}]
  %s12 = inlined_call_operand.vmem [shape: f32[64,1], index: 12, kind: input, shape index: {}]
  %s13 = inlined_call_operand.vmem [shape: f32[128,576], index: 13, kind: input, shape index: {}]
  %s14 = inlined_call_operand.vmem [shape: f32[128,1], index: 14, kind: input, shape index: {}]
  %s15 = inlined_call_operand.vmem [shape: f32[128,1], index: 15, kind: input, shape index: {}]
  %s16 = inlined_call_operand.vmem [shape: f32[128,1152], index: 16, kind: input, shape index: {}]
  %s17 = inlined_call_operand.vmem [shape: f32[128,1], index: 17, kind: input, shape index: {}]
  %s18 = inlined_call_operand.vmem [shape: f32[128,1], index: 18, kind: input, shape index: {}]
  %s19 = inlined_call_operand.vmem [shape: f32[2,128,17], index: 19, kind: output, shape index: {}]
  %s20 = sld [smem:[#allocation0]]
  $region113: #{tpu_custom_call.1} parent=0
    _
  %s22 = ssub.s32 1, %s20
  %s23 = scalar_select 0, %s22, %s20
  $region1: #{tpu_custom_call.1} parent=0
    #allocation2 [shape = 'u8[98304]{0}', space=vmem, size = 0x18000, scoped, tag = 'input window, operand 7, single buffered']
    #allocation3 [shape = 's32[2]{0}', space=sflag, size = 0x8, scoped, tag = 'scoped memory for tpu_custom_call.1']
    %24 = vsyncpa [#allocation3], 0
    loop: start=0, step=1, limit=4
    $region2: #{tpu_custom_call.1} parent=1 // loop_pre_header
      _
    $region3: #{tpu_custom_call.1} parent=1 // loop_header
      %s26 = sphi 0, %s30
      %p27 = scmp.ge.s32.totalorder %s26, 4
      %s36 = sphi 0, %s38
      %s39 = sphi 0, %s36
      %s40 = sphi 0, %s39
      %s56 = sphi 0, %s40
      %s60 = sphi 0, %s60
      %s62 = sphi 0, %s60
      %s63 = sphi 0, %s62
      %s77 = sphi 0, %s63
      %s81 = sphi 0, %s81
      %s83 = sphi 0, %s81
      %s84 = sphi 0, %s83
      %s98 = sphi 0, %s84
      %s102 = sphi 0, %s102
      %s104 = sphi 0, %s102
      %s105 = sphi 0, %s104
      %s119 = sphi 0, %s105
      %s123 = sphi 0, %s123
      %s125 = sphi 0, %s123
      %s126 = sphi 0, %s125
      %s140 = sphi 0, %s126
      %s144 = sphi 0, %s144
      %s146 = sphi 0, %s144
      %s147 = sphi 0, %s146
      %s161 = sphi 0, %s147
      %s165 = sphi 0, %s165
      %s167 = sphi 0, %s165
      %s168 = sphi 0, %s167
      %s182 = sphi 0, %s168
      %s186 = sphi 0, %s186
      %s188 = sphi 0, %s186
      %s189 = sphi 0, %s188
      %s203 = sphi 0, %s189
      %s207 = sphi 0, %s207
      %s209 = sphi 0, %s207
      %s210 = sphi 0, %s209
      %s224 = sphi 0, %s210
      %s228 = sphi 0, %s228
      %s230 = sphi 0, %s228
      %s231 = sphi 0, %s230
      %s245 = sphi 0, %s231
      %s249 = sphi 0, %s249
      %s251 = sphi 0, %s249
      %s252 = sphi 0, %s251
      %s266 = sphi 0, %s252
      %s270 = sphi 0, %s270
      %s272 = sphi 0, %s270
      %s273 = sphi 0, %s272
      %s287 = sphi 0, %s273
      %s291 = sphi 0, %s291
      %s293 = sphi 0, %s291
      %s294 = sphi 0, %s293
      %s308 = sphi 0, %s294
      %s312 = sphi 0, %s312
      %s314 = sphi 0, %s312
      %s315 = sphi 0, %s314
      %s329 = sphi 0, %s315
      %s333 = sphi 0, %s333
      %s335 = sphi 0, %s333
      %s336 = sphi 0, %s335
      %s350 = sphi 0, %s336
      %s354 = sphi 0, %s354
      %s356 = sphi 0, %s354
      %s357 = sphi 0, %s356
      %s371 = sphi 0, %s357
      %s375 = sphi 0, %s375
      %s377 = sphi 0, %s375
      %s378 = sphi 0, %s377
      %s392 = sphi 0, %s378
      %s396 = sphi 0, %s396
      %s398 = sphi 0, %s396
      %s399 = sphi 0, %s398
      %s413 = sphi 0, %s399
      %s417 = sphi 0, %s417
      %s419 = sphi 0, %s417
      %s420 = sphi 0, %s419
      %s434 = sphi 0, %s420
      %s440 = sphi 0, %s442
      %s443 = sphi 0, %s440
      %s444 = sphi 0, %s443
      %s460 = sphi 0, %s444
    $region4: #{tpu_custom_call.1} parent=1 // loop_header_branch
      %29 = sbr.rel (%p27) target = $region8
    $region5: #{tpu_custom_call.1} parent=1 // loop_body
      %s31 = ssub.s32 %s26, 1
      %s32 = ssub.s32 %s26, 2
      %s33 = sadd.s32 %s26, 1
      %s34 = ssub.s32 %s26, %s33
      %p35 = scmp.eq.s32.totalorder %s34, 0
      %s37 = sadd.s32 %s36, 1
      %s38 = scalar_select %p35, %s36, %s37
      %p41 = pneg %p35
      %p42 = scmp.eq.s32.totalorder %s26, 1
      %p43 = por %p41, %p42
      %p44 = scmp.ne.s32.totalorder %s36, %s39
      %p45 = scmp.eq.s32.totalorder %s26, 0
      %p46 = por %p44, %p45
      %p47 = scmp.ne.s32.totalorder %s36, %s39
      %p48 = scmp.eq.s32.totalorder %s31, 1
      %p49 = por %p47, %p48
      %p50 = scmp.ne.s32.totalorder %s39, %s40
      %p51 = scmp.eq.s32.totalorder %s31, 0
      %p52 = por %p50, %p51
      %p53 = scmp.ne.s32.totalorder %s39, %s40
      %p54 = scmp.eq.s32.totalorder %s32, 1
      %p55 = por %p53, %p54
      %p57 = scmp.ne.s32.totalorder %s40, %s56
      %p58 = scmp.eq.s32.totalorder %s32, 0
      %p59 = por %p57, %p58
      %s61 = sadd.s32 %s60, 1
      %p64 = scmp.eq.s32.totalorder %s26, 1
      %p65 = scmp.ne.s32.totalorder %s60, %s62
      %p66 = scmp.eq.s32.totalorder %s26, 0
      %p67 = por %p65, %p66
      %p68 = scmp.ne.s32.totalorder %s60, %s62
      %p69 = scmp.eq.s32.totalorder %s31, 1
      %p70 = por %p68, %p69
      %p71 = scmp.ne.s32.totalorder %s62, %s63
      %p72 = scmp.eq.s32.totalorder %s31, 0
      %p73 = por %p71, %p72
      %p74 = scmp.ne.s32.totalorder %s62, %s63
      %p75 = scmp.eq.s32.totalorder %s32, 1
      %p76 = por %p74, %p75
      %p78 = scmp.ne.s32.totalorder %s63, %s77
      %p79 = scmp.eq.s32.totalorder %s32, 0
      %p80 = por %p78, %p79
      %s82 = sadd.s32 %s81, 1
      %p85 = scmp.eq.s32.totalorder %s26, 1
      %p86 = scmp.ne.s32.totalorder %s81, %s83
      %p87 = scmp.eq.s32.totalorder %s26, 0
      %p88 = por %p86, %p87
      %p89 = scmp.ne.s32.totalorder %s81, %s83
      %p90 = scmp.eq.s32.totalorder %s31, 1
      %p91 = por %p89, %p90
      %p92 = scmp.ne.s32.totalorder %s83, %s84
      %p93 = scmp.eq.s32.totalorder %s31, 0
      %p94 = por %p92, %p93
      %p95 = scmp.ne.s32.totalorder %s83, %s84
      %p96 = scmp.eq.s32.totalorder %s32, 1
      %p97 = por %p95, %p96
      %p99 = scmp.ne.s32.totalorder %s84, %s98
      %p100 = scmp.eq.s32.totalorder %s32, 0
      %p101 = por %p99, %p100
      %s103 = sadd.s32 %s102, 1
      %p106 = scmp.eq.s32.totalorder %s26, 1
      %p107 = scmp.ne.s32.totalorder %s102, %s104
      %p108 = scmp.eq.s32.totalorder %s26, 0
      %p109 = por %p107, %p108
      %p110 = scmp.ne.s32.totalorder %s102, %s104
      %p111 = scmp.eq.s32.totalorder %s31, 1
      %p112 = por %p110, %p111
      %p113 = scmp.ne.s32.totalorder %s104, %s105
      %p114 = scmp.eq.s32.totalorder %s31, 0
      %p115 = por %p113, %p114
      %p116 = scmp.ne.s32.totalorder %s104, %s105
      %p117 = scmp.eq.s32.totalorder %s32, 1
      %p118 = por %p116, %p117
      %p120 = scmp.ne.s32.totalorder %s105, %s119
      %p121 = scmp.eq.s32.totalorder %s32, 0
      %p122 = por %p120, %p121
      %s124 = sadd.s32 %s123, 1
      %p127 = scmp.eq.s32.totalorder %s26, 1
      %p128 = scmp.ne.s32.totalorder %s123, %s125
      %p129 = scmp.eq.s32.totalorder %s26, 0
      %p130 = por %p128, %p129
      %p131 = scmp.ne.s32.totalorder %s123, %s125
      %p132 = scmp.eq.s32.totalorder %s31, 1
      %p133 = por %p131, %p132
      %p134 = scmp.ne.s32.totalorder %s125, %s126
      %p135 = scmp.eq.s32.totalorder %s31, 0
      %p136 = por %p134, %p135
      %p137 = scmp.ne.s32.totalorder %s125, %s126
      %p138 = scmp.eq.s32.totalorder %s32, 1
      %p139 = por %p137, %p138
      %p141 = scmp.ne.s32.totalorder %s126, %s140
      %p142 = scmp.eq.s32.totalorder %s32, 0
      %p143 = por %p141, %p142
      %s145 = sadd.s32 %s144, 1
      %p148 = scmp.eq.s32.totalorder %s26, 1
      %p149 = scmp.ne.s32.totalorder %s144, %s146
      %p150 = scmp.eq.s32.totalorder %s26, 0
      %p151 = por %p149, %p150
      %p152 = scmp.ne.s32.totalorder %s144, %s146
      %p153 = scmp.eq.s32.totalorder %s31, 1
      %p154 = por %p152, %p153
      %p155 = scmp.ne.s32.totalorder %s146, %s147
      %p156 = scmp.eq.s32.totalorder %s31, 0
      %p157 = por %p155, %p156
      %p158 = scmp.ne.s32.totalorder %s146, %s147
      %p159 = scmp.eq.s32.totalorder %s32, 1
      %p160 = por %p158, %p159
      %p162 = scmp.ne.s32.totalorder %s147, %s161
      %p163 = scmp.eq.s32.totalorder %s32, 0
      %p164 = por %p162, %p163
      %s166 = sadd.s32 %s165, 1
      %p169 = scmp.eq.s32.totalorder %s26, 1
      %p170 = scmp.ne.s32.totalorder %s165, %s167
      %p171 = scmp.eq.s32.totalorder %s26, 0
      %p172 = por %p170, %p171
      %p173 = scmp.ne.s32.totalorder %s165, %s167
      %p174 = scmp.eq.s32.totalorder %s31, 1
      %p175 = por %p173, %p174
      %p176 = scmp.ne.s32.totalorder %s167, %s168
      %p177 = scmp.eq.s32.totalorder %s31, 0
      %p178 = por %p176, %p177
      %p179 = scmp.ne.s32.totalorder %s167, %s168
      %p180 = scmp.eq.s32.totalorder %s32, 1
      %p181 = por %p179, %p180
      %p183 = scmp.ne.s32.totalorder %s168, %s182
      %p184 = scmp.eq.s32.totalorder %s32, 0
      %p185 = por %p183, %p184
      %s187 = sadd.s32 %s186, 1
      %p190 = scmp.eq.s32.totalorder %s26, 1
      %p191 = scmp.ne.s32.totalorder %s186, %s188
      %p192 = scmp.eq.s32.totalorder %s26, 0
      %p193 = por %p191, %p192
      %p194 = scmp.ne.s32.totalorder %s186, %s188
      %p195 = scmp.eq.s32.totalorder %s31, 1
      %p196 = por %p194, %p195
      %p197 = scmp.ne.s32.totalorder %s188, %s189
      %p198 = scmp.eq.s32.totalorder %s31, 0
      %p199 = por %p197, %p198
      %p200 = scmp.ne.s32.totalorder %s188, %s189
      %p201 = scmp.eq.s32.totalorder %s32, 1
      %p202 = por %p200, %p201
      %p204 = scmp.ne.s32.totalorder %s189, %s203
      %p205 = scmp.eq.s32.totalorder %s32, 0
      %p206 = por %p204, %p205
      %s208 = sadd.s32 %s207, 1
      %p211 = scmp.eq.s32.totalorder %s26, 1
      %p212 = scmp.ne.s32.totalorder %s207, %s209
      %p213 = scmp.eq.s32.totalorder %s26, 0
      %p214 = por %p212, %p213
      %p215 = scmp.ne.s32.totalorder %s207, %s209
      %p216 = scmp.eq.s32.totalorder %s31, 1
      %p217 = por %p215, %p216
      %p218 = scmp.ne.s32.totalorder %s209, %s210
      %p219 = scmp.eq.s32.totalorder %s31, 0
      %p220 = por %p218, %p219
      %p221 = scmp.ne.s32.totalorder %s209, %s210
      %p222 = scmp.eq.s32.totalorder %s32, 1
      %p223 = por %p221, %p222
      %p225 = scmp.ne.s32.totalorder %s210, %s224
      %p226 = scmp.eq.s32.totalorder %s32, 0
      %p227 = por %p225, %p226
      %s229 = sadd.s32 %s228, 1
      %p232 = scmp.eq.s32.totalorder %s26, 1
      %p233 = scmp.ne.s32.totalorder %s228, %s230
      %p234 = scmp.eq.s32.totalorder %s26, 0
      %p235 = por %p233, %p234
      %p236 = scmp.ne.s32.totalorder %s228, %s230
      %p237 = scmp.eq.s32.totalorder %s31, 1
      %p238 = por %p236, %p237
      %p239 = scmp.ne.s32.totalorder %s230, %s231
      %p240 = scmp.eq.s32.totalorder %s31, 0
      %p241 = por %p239, %p240
      %p242 = scmp.ne.s32.totalorder %s230, %s231
      %p243 = scmp.eq.s32.totalorder %s32, 1
      %p244 = por %p242, %p243
      %p246 = scmp.ne.s32.totalorder %s231, %s245
      %p247 = scmp.eq.s32.totalorder %s32, 0
      %p248 = por %p246, %p247
      %s250 = sadd.s32 %s249, 1
      %p253 = scmp.eq.s32.totalorder %s26, 1
      %p254 = scmp.ne.s32.totalorder %s249, %s251
      %p255 = scmp.eq.s32.totalorder %s26, 0
      %p256 = por %p254, %p255
      %p257 = scmp.ne.s32.totalorder %s249, %s251
      %p258 = scmp.eq.s32.totalorder %s31, 1
      %p259 = por %p257, %p258
      %p260 = scmp.ne.s32.totalorder %s251, %s252
      %p261 = scmp.eq.s32.totalorder %s31, 0
      %p262 = por %p260, %p261
      %p263 = scmp.ne.s32.totalorder %s251, %s252
      %p264 = scmp.eq.s32.totalorder %s32, 1
      %p265 = por %p263, %p264
      %p267 = scmp.ne.s32.totalorder %s252, %s266
      %p268 = scmp.eq.s32.totalorder %s32, 0
      %p269 = por %p267, %p268
      %s271 = sadd.s32 %s270, 1
      %p274 = scmp.eq.s32.totalorder %s26, 1
      %p275 = scmp.ne.s32.totalorder %s270, %s272
      %p276 = scmp.eq.s32.totalorder %s26, 0
      %p277 = por %p275, %p276
      %p278 = scmp.ne.s32.totalorder %s270, %s272
      %p279 = scmp.eq.s32.totalorder %s31, 1
      %p280 = por %p278, %p279
      %p281 = scmp.ne.s32.totalorder %s272, %s273
      %p282 = scmp.eq.s32.totalorder %s31, 0
      %p283 = por %p281, %p282
      %p284 = scmp.ne.s32.totalorder %s272, %s273
      %p285 = scmp.eq.s32.totalorder %s32, 1
      %p286 = por %p284, %p285
      %p288 = scmp.ne.s32.totalorder %s273, %s287
      %p289 = scmp.eq.s32.totalorder %s32, 0
      %p290 = por %p288, %p289
      %s292 = sadd.s32 %s291, 1
      %p295 = scmp.eq.s32.totalorder %s26, 1
      %p296 = scmp.ne.s32.totalorder %s291, %s293
      %p297 = scmp.eq.s32.totalorder %s26, 0
      %p298 = por %p296, %p297
      %p299 = scmp.ne.s32.totalorder %s291, %s293
      %p300 = scmp.eq.s32.totalorder %s31, 1
      %p301 = por %p299, %p300
      %p302 = scmp.ne.s32.totalorder %s293, %s294
      %p303 = scmp.eq.s32.totalorder %s31, 0
      %p304 = por %p302, %p303
      %p305 = scmp.ne.s32.totalorder %s293, %s294
      %p306 = scmp.eq.s32.totalorder %s32, 1
      %p307 = por %p305, %p306
      %p309 = scmp.ne.s32.totalorder %s294, %s308
      %p310 = scmp.eq.s32.totalorder %s32, 0
      %p311 = por %p309, %p310
      %s313 = sadd.s32 %s312, 1
      %p316 = scmp.eq.s32.totalorder %s26, 1
      %p317 = scmp.ne.s32.totalorder %s312, %s314
      %p318 = scmp.eq.s32.totalorder %s26, 0
      %p319 = por %p317, %p318
      %p320 = scmp.ne.s32.totalorder %s312, %s314
      %p321 = scmp.eq.s32.totalorder %s31, 1
      %p322 = por %p320, %p321
      %p323 = scmp.ne.s32.totalorder %s314, %s315
      %p324 = scmp.eq.s32.totalorder %s31, 0
      %p325 = por %p323, %p324
      %p326 = scmp.ne.s32.totalorder %s314, %s315
      %p327 = scmp.eq.s32.totalorder %s32, 1
      %p328 = por %p326, %p327
      %p330 = scmp.ne.s32.totalorder %s315, %s329
      %p331 = scmp.eq.s32.totalorder %s32, 0
      %p332 = por %p330, %p331
      %s334 = sadd.s32 %s333, 1
      %p337 = scmp.eq.s32.totalorder %s26, 1
      %p338 = scmp.ne.s32.totalorder %s333, %s335
      %p339 = scmp.eq.s32.totalorder %s26, 0
      %p340 = por %p338, %p339
      %p341 = scmp.ne.s32.totalorder %s333, %s335
      %p342 = scmp.eq.s32.totalorder %s31, 1
      %p343 = por %p341, %p342
      %p344 = scmp.ne.s32.totalorder %s335, %s336
      %p345 = scmp.eq.s32.totalorder %s31, 0
      %p346 = por %p344, %p345
      %p347 = scmp.ne.s32.totalorder %s335, %s336
      %p348 = scmp.eq.s32.totalorder %s32, 1
      %p349 = por %p347, %p348
      %p351 = scmp.ne.s32.totalorder %s336, %s350
      %p352 = scmp.eq.s32.totalorder %s32, 0
      %p353 = por %p351, %p352
      %s355 = sadd.s32 %s354, 1
      %p358 = scmp.eq.s32.totalorder %s26, 1
      %p359 = scmp.ne.s32.totalorder %s354, %s356
      %p360 = scmp.eq.s32.totalorder %s26, 0
      %p361 = por %p359, %p360
      %p362 = scmp.ne.s32.totalorder %s354, %s356
      %p363 = scmp.eq.s32.totalorder %s31, 1
      %p364 = por %p362, %p363
      %p365 = scmp.ne.s32.totalorder %s356, %s357
      %p366 = scmp.eq.s32.totalorder %s31, 0
      %p367 = por %p365, %p366
      %p368 = scmp.ne.s32.totalorder %s356, %s357
      %p369 = scmp.eq.s32.totalorder %s32, 1
      %p370 = por %p368, %p369
      %p372 = scmp.ne.s32.totalorder %s357, %s371
      %p373 = scmp.eq.s32.totalorder %s32, 0
      %p374 = por %p372, %p373
      %s376 = sadd.s32 %s375, 1
      %p379 = scmp.eq.s32.totalorder %s26, 1
      %p380 = scmp.ne.s32.totalorder %s375, %s377
      %p381 = scmp.eq.s32.totalorder %s26, 0
      %p382 = por %p380, %p381
      %p383 = scmp.ne.s32.totalorder %s375, %s377
      %p384 = scmp.eq.s32.totalorder %s31, 1
      %p385 = por %p383, %p384
      %p386 = scmp.ne.s32.totalorder %s377, %s378
      %p387 = scmp.eq.s32.totalorder %s31, 0
      %p388 = por %p386, %p387
      %p389 = scmp.ne.s32.totalorder %s377, %s378
      %p390 = scmp.eq.s32.totalorder %s32, 1
      %p391 = por %p389, %p390
      %p393 = scmp.ne.s32.totalorder %s378, %s392
      %p394 = scmp.eq.s32.totalorder %s32, 0
      %p395 = por %p393, %p394
      %s397 = sadd.s32 %s396, 1
      %p400 = scmp.eq.s32.totalorder %s26, 1
      %p401 = scmp.ne.s32.totalorder %s396, %s398
      %p402 = scmp.eq.s32.totalorder %s26, 0
      %p403 = por %p401, %p402
      %p404 = scmp.ne.s32.totalorder %s396, %s398
      %p405 = scmp.eq.s32.totalorder %s31, 1
      %p406 = por %p404, %p405
      %p407 = scmp.ne.s32.totalorder %s398, %s399
      %p408 = scmp.eq.s32.totalorder %s31, 0
      %p409 = por %p407, %p408
      %p410 = scmp.ne.s32.totalorder %s398, %s399
      %p411 = scmp.eq.s32.totalorder %s32, 1
      %p412 = por %p410, %p411
      %p414 = scmp.ne.s32.totalorder %s399, %s413
      %p415 = scmp.eq.s32.totalorder %s32, 0
      %p416 = por %p414, %p415
      %s418 = sadd.s32 %s417, 1
      %p421 = scmp.eq.s32.totalorder %s26, 1
      %p422 = scmp.ne.s32.totalorder %s417, %s419
      %p423 = scmp.eq.s32.totalorder %s26, 0
      %p424 = por %p422, %p423
      %p425 = scmp.ne.s32.totalorder %s417, %s419
      %p426 = scmp.eq.s32.totalorder %s31, 1
      %p427 = por %p425, %p426
      %p428 = scmp.ne.s32.totalorder %s419, %s420
      %p429 = scmp.eq.s32.totalorder %s31, 0
      %p430 = por %p428, %p429
      %p431 = scmp.ne.s32.totalorder %s419, %s420
      %p432 = scmp.eq.s32.totalorder %s32, 1
      %p433 = por %p431, %p432
      %p435 = scmp.ne.s32.totalorder %s420, %s434
      %p436 = scmp.eq.s32.totalorder %s32, 0
      %p437 = por %p435, %p436
      %s438 = ssub.s32 %s26, %s33
      %p439 = scmp.eq.s32.totalorder %s438, 0
      %s441 = sadd.s32 %s440, 1
      %s442 = scalar_select %p439, %s440, %s441
      %p445 = pneg %p439
      %p446 = scmp.eq.s32.totalorder %s26, 1
      %p447 = por %p445, %p446
      %p448 = scmp.ne.s32.totalorder %s440, %s443
      %p449 = scmp.eq.s32.totalorder %s26, 0
      %p450 = por %p448, %p449
      %p451 = scmp.ne.s32.totalorder %s440, %s443
      %p452 = scmp.eq.s32.totalorder %s31, 1
      %p453 = por %p451, %p452
      %p454 = scmp.ne.s32.totalorder %s443, %s444
      %p455 = scmp.eq.s32.totalorder %s31, 0
      %p456 = por %p454, %p455
      %p457 = scmp.ne.s32.totalorder %s443, %s444
      %p458 = scmp.eq.s32.totalorder %s32, 1
      %p459 = por %p457, %p458
      %p461 = scmp.ne.s32.totalorder %s444, %s460
      %p462 = scmp.eq.s32.totalorder %s32, 0
      %p463 = por %p461, %p462
      %p464 = scmp.le.s32.totalorder 1, %s26
      %p465 = scmp.lt.s32.totalorder %s26, 3
      %p466 = pnand %p464, %p465
      %p467 = pneg %p466
      // Predicated region
      $region9: #{tpu_custom_call.1} parent=5 // pred_check
        _
      $region10: #{tpu_custom_call.1} parent=5 // pred_check_branch
        %469 = sbr.rel (%p466) target = $region12
      $region11: #{tpu_custom_call.1} parent=5 // pred_region
        %s470 = ssub.s32 %s26, 1
        // Predicated region
        $region13: #{tpu_custom_call.1} parent=11 // pred_check
          %p471 = pneg %p73
        $region14: #{tpu_custom_call.1} parent=11 // pred_check_branch
          %473 = sbr.rel (%p471) target = $region16
        $region15: #{tpu_custom_call.1} parent=11 // pred_region
          _
        $region16: #{tpu_custom_call.1} parent=11 // pred_fallthru
          _
        // Predicated region
        $region17: #{tpu_custom_call.1} parent=11 // pred_check
          %p474 = pneg %p94
        $region18: #{tpu_custom_call.1} parent=11 // pred_check_branch
          %476 = sbr.rel (%p474) target = $region20
        $region19: #{tpu_custom_call.1} parent=11 // pred_region
          _
        $region20: #{tpu_custom_call.1} parent=11 // pred_fallthru
          _
        // Predicated region
        $region21: #{tpu_custom_call.1} parent=11 // pred_check
          %p477 = pneg %p115
        $region22: #{tpu_custom_call.1} parent=11 // pred_check_branch
          %479 = sbr.rel (%p477) target = $region24
        $region23: #{tpu_custom_call.1} parent=11 // pred_region
          _
        $region24: #{tpu_custom_call.1} parent=11 // pred_fallthru
          _
        // Predicated region
        $region25: #{tpu_custom_call.1} parent=11 // pred_check
          %p480 = pneg %p136
        $region26: #{tpu_custom_call.1} parent=11 // pred_check_branch
          %482 = sbr.rel (%p480) target = $region28
        $region27: #{tpu_custom_call.1} parent=11 // pred_region
          _
        $region28: #{tpu_custom_call.1} parent=11 // pred_fallthru
          _
        // Predicated region
        $region29: #{tpu_custom_call.1} parent=11 // pred_check
          %p483 = pneg %p157
        $region30: #{tpu_custom_call.1} parent=11 // pred_check_branch
          %485 = sbr.rel (%p483) target = $region32
        $region31: #{tpu_custom_call.1} parent=11 // pred_region
          _
        $region32: #{tpu_custom_call.1} parent=11 // pred_fallthru
          _
        // Predicated region
        $region33: #{tpu_custom_call.1} parent=11 // pred_check
          %p486 = pneg %p178
        $region34: #{tpu_custom_call.1} parent=11 // pred_check_branch
          %488 = sbr.rel (%p486) target = $region36
        $region35: #{tpu_custom_call.1} parent=11 // pred_region
          _
        $region36: #{tpu_custom_call.1} parent=11 // pred_fallthru
          _
        // Predicated region
        $region37: #{tpu_custom_call.1} parent=11 // pred_check
          %p489 = pneg %p199
        $region38: #{tpu_custom_call.1} parent=11 // pred_check_branch
          %491 = sbr.rel (%p489) target = $region40
        $region39: #{tpu_custom_call.1} parent=11 // pred_region
          %493 = vsyncadd [#allocation3], 0
          %s494 = sshll.u32 %s7, 4
          %s495 = int_to_ptr.hbm [resolvable:$true] %s494
          %s496 = sshll.u32 [#allocation2], 4
          %s497 = int_to_ptr.vmem [resolvable:$true] %s496
          %502 = dma.hbm_to_vmem [thread:$0]  %s495, 3072, %s497, [#allocation3], 384, 384, 24
        $region40: #{tpu_custom_call.1} parent=11 // pred_fallthru
          _
        // Predicated region
        $region41: #{tpu_custom_call.1} parent=11 // pred_check
          %p503 = pneg %p220
        $region42: #{tpu_custom_call.1} parent=11 // pred_check_branch
          %505 = sbr.rel (%p503) target = $region44
        $region43: #{tpu_custom_call.1} parent=11 // pred_region
          _
        $region44: #{tpu_custom_call.1} parent=11 // pred_fallthru
          _
        // Predicated region
        $region45: #{tpu_custom_call.1} parent=11 // pred_check
          %p506 = pneg %p241
        $region46: #{tpu_custom_call.1} parent=11 // pred_check_branch
          %508 = sbr.rel (%p506) target = $region48
        $region47: #{tpu_custom_call.1} parent=11 // pred_region
          _
        $region48: #{tpu_custom_call.1} parent=11 // pred_fallthru
          _
        // Predicated region
        $region49: #{tpu_custom_call.1} parent=11 // pred_check
          %p509 = pneg %p262
        $region50: #{tpu_custom_call.1} parent=11 // pred_check_branch
          %511 = sbr.rel (%p509) target = $region52
        $region51: #{tpu_custom_call.1} parent=11 // pred_region
          _
        $region52: #{tpu_custom_call.1} parent=11 // pred_fallthru
          _
        // Predicated region
        $region53: #{tpu_custom_call.1} parent=11 // pred_check
          %p512 = pneg %p283
        $region54: #{tpu_custom_call.1} parent=11 // pred_check_branch
          %514 = sbr.rel (%p512) target = $region56
        $region55: #{tpu_custom_call.1} parent=11 // pred_region
          _
        $region56: #{tpu_custom_call.1} parent=11 // pred_fallthru
          _
        // Predicated region
        $region57: #{tpu_custom_call.1} parent=11 // pred_check
          %p515 = pneg %p304
        $region58: #{tpu_custom_call.1} parent=11 // pred_check_branch
          %517 = sbr.rel (%p515) target = $region60
        $region59: #{tpu_custom_call.1} parent=11 // pred_region
          _
        $region60: #{tpu_custom_call.1} parent=11 // pred_fallthru
          _
        // Predicated region
        $region61: #{tpu_custom_call.1} parent=11 // pred_check
          %p518 = pneg %p325
        $region62: #{tpu_custom_call.1} parent=11 // pred_check_branch
          %520 = sbr.rel (%p518) target = $region64
        $region63: #{tpu_custom_call.1} parent=11 // pred_region
          _
        $region64: #{tpu_custom_call.1} parent=11 // pred_fallthru
          _
        // Predicated region
        $region65: #{tpu_custom_call.1} parent=11 // pred_check
          %p521 = pneg %p346
        $region66: #{tpu_custom_call.1} parent=11 // pred_check_branch
          %523 = sbr.rel (%p521) target = $region68
        $region67: #{tpu_custom_call.1} parent=11 // pred_region
          _
        $region68: #{tpu_custom_call.1} parent=11 // pred_fallthru
          _
        // Predicated region
        $region69: #{tpu_custom_call.1} parent=11 // pred_check
          %p524 = pneg %p367
        $region70: #{tpu_custom_call.1} parent=11 // pred_check_branch
          %526 = sbr.rel (%p524) target = $region72
        $region71: #{tpu_custom_call.1} parent=11 // pred_region
          _
        $region72: #{tpu_custom_call.1} parent=11 // pred_fallthru
          _
        // Predicated region
        $region73: #{tpu_custom_call.1} parent=11 // pred_check
          %p527 = pneg %p388
        $region74: #{tpu_custom_call.1} parent=11 // pred_check_branch
          %529 = sbr.rel (%p527) target = $region76
        $region75: #{tpu_custom_call.1} parent=11 // pred_region
          _
        $region76: #{tpu_custom_call.1} parent=11 // pred_fallthru
          _
        // Predicated region
        $region77: #{tpu_custom_call.1} parent=11 // pred_check
          %p530 = pneg %p409
        $region78: #{tpu_custom_call.1} parent=11 // pred_check_branch
          %532 = sbr.rel (%p530) target = $region80
        $region79: #{tpu_custom_call.1} parent=11 // pred_region
          _
        $region80: #{tpu_custom_call.1} parent=11 // pred_fallthru
          _
        // Predicated region
        $region81: #{tpu_custom_call.1} parent=11 // pred_check
          %p533 = pneg %p430
        $region82: #{tpu_custom_call.1} parent=11 // pred_check_branch
          %535 = sbr.rel (%p533) target = $region84
        $region83: #{tpu_custom_call.1} parent=11 // pred_region
          _
        $region84: #{tpu_custom_call.1} parent=11 // pred_fallthru
          _
      $region12: #{tpu_custom_call.1} parent=5 // pred_fallthru
        _
      %p536 = scmp.lt.s32.totalorder %s26, 2
      // Predicated region
      $region85: #{tpu_custom_call.1} parent=5 // pred_check
        %p537 = pneg %p536
      $region86: #{tpu_custom_call.1} parent=5 // pred_check_branch
        %539 = sbr.rel (%p537) target = $region88
      $region87: #{tpu_custom_call.1} parent=5 // pred_region
        // Predicated region
        $region89: #{tpu_custom_call.1} parent=87 // pred_check
          %p540 = pneg %p46
        $region90: #{tpu_custom_call.1} parent=87 // pred_check_branch
          %542 = sbr.rel (%p540) target = $region92
        $region91: #{tpu_custom_call.1} parent=87 // pred_region
          %p543 = scmp.lt.s32.totalorder %s26, 1
          %s544 = scalar_select %p543, %s26, 1
          %s545 = smul.addr %s544, 2
          %s546 = scalar_lea.vmem %s0, %s545
        $region92: #{tpu_custom_call.1} parent=87 // pred_fallthru
          _
      $region88: #{tpu_custom_call.1} parent=5 // pred_fallthru
        _
      %p547 = scmp.le.s32.totalorder 1, %s26
      %p548 = scmp.lt.s32.totalorder %s26, 3
      %p549 = pnand %p547, %p548
      %p550 = pneg %p549
      // Predicated region
      $region93: #{tpu_custom_call.1} parent=5 // pred_check
        _
      $region94: #{tpu_custom_call.1} parent=5 // pred_check_branch
        %552 = sbr.rel (%p549) target = $region96
      $region95: #{tpu_custom_call.1} parent=5 // pred_region
        %s553 = ssub.s32 %s26, 1
        // Predicated region
        $region97: #{tpu_custom_call.1} parent=95 // pred_check
          %p554 = pneg %p199
        $region98: #{tpu_custom_call.1} parent=95 // pred_check_branch
          %556 = sbr.rel (%p554) target = $region100
        $region99: #{tpu_custom_call.1} parent=95 // pred_region
          %558 = dma.done [#allocation3], 3072
        $region100: #{tpu_custom_call.1} parent=95 // pred_fallthru
          _
        %p559 = scmp.lt.s32.totalorder %s31, 1
        %s560 = scalar_select %p559, %s31, 1
        %s561 = smul.addr %s560, 2
        %s562 = scalar_lea.vmem %s0, %s561
        %p563 = pneg %p52
        %p564 = pneg %p49
        %p565 = pneg %p73
        %p566 = pneg %p70
        %p567 = pneg %p94
        %p568 = pneg %p91
        %p569 = pneg %p115
        %p570 = pneg %p112
        %p571 = pneg %p136
        %p572 = pneg %p133
        %p573 = pneg %p157
        %p574 = pneg %p154
        %p575 = pneg %p178
        %p576 = pneg %p175
        %p577 = pneg %p199
        %p578 = pneg %p196
        %p579 = pneg %p220
        %p580 = pneg %p217
        %p581 = pneg %p241
        %p582 = pneg %p238
        %p583 = pneg %p262
        %p584 = pneg %p259
        %p585 = pneg %p283
        %p586 = pneg %p280
        %p587 = pneg %p304
        %p588 = pneg %p301
        %p589 = pneg %p325
        %p590 = pneg %p322
        %p591 = pneg %p346
        %p592 = pneg %p343
        %p593 = pneg %p367
        %p594 = pneg %p364
        %p595 = pneg %p388
        %p596 = pneg %p385
        %p597 = pneg %p409
        %p598 = pneg %p406
        %p599 = pneg %p430
        %p600 = pneg %p427
        %p601 = pneg %p456
        %p602 = pneg %p453
        %p603 = scmp.lt.s32.totalorder %s31, 1
        %s604 = scalar_select %p603, %s31, 1
        %s605 = smul.addr %s604, 16
        %s606 = smul.addr %s605, 8
        %s607 = scalar_lea.vmem %s19, %s606
        %p608 = scmp.lt.s32.totalorder %s31, 1
        %s609 = scalar_select %p608, %s31, 1
        %s610 = smul.addr %s609, 2
        %s611 = scalar_lea.vmem %s0, %s610
        %p612 = scmp.lt.s32.totalorder %s31, 1
        %s613 = scalar_select %p612, %s31, 1
        %s614 = smul.addr %s613, 16
        %s615 = smul.addr %s614, 8
        %s616 = scalar_lea.vmem %s19, %s615
        %v617 = vld [vmem:[%s611] sm:$0x3]
        %v618 = vld [vmem:[%s1] sm:$0xff]
        %v619 = vld [vmem:[%s1 + $0x8] sm:$0xff]
        %v620 = vld [vmem:[%s1 + $0x10] sm:$0xff]
        %v621 = vld [vmem:[%s1 + $0x18] sm:$0xff]
        %623 = vset.pattern.permute.xlu0 0
        %624 = vperm.xlu0 %623, %v618
        %v625 = vpop.permute.xlu0 %624
        %628 = vset.pattern.permute.xlu0 0
        %629 = vperm.xlu0 %628, %v619
        %v630 = vpop.permute.xlu0 %629
        %633 = vset.pattern.permute.xlu0 0
        %634 = vperm.xlu0 %633, %v620
        %v635 = vpop.permute.xlu0 %634
        %638 = vset.pattern.permute.xlu0 0
        %639 = vperm.xlu0 %638, %v621
        %v640 = vpop.permute.xlu0 %639
        %v643 = vperm.slane %v617, 0
        %v644 = vperm.slane %v617, 1
        %v647 = vmul.f32 %v625, %v643
        %v648 = vmul.f32 %v625, %v644
        %v649 = vmul.f32 %v630, %v643
        %v650 = vmul.f32 %v630, %v644
        %v651 = vmul.f32 %v635, %v643
        %v652 = vmul.f32 %v635, %v644
        %v653 = vmul.f32 %v640, %v643
        %v654 = vmul.f32 %v640, %v644
        %v655 = vadd.f32 %v647, 0.0
        %v656 = vadd.f32 %v648, 0.0
        %v657 = vadd.f32 %v649, 0.0
        %v658 = vadd.f32 %v650, 0.0
        %v659 = vadd.f32 %v651, 0.0
        %v660 = vadd.f32 %v652, 0.0
        %v661 = vadd.f32 %v653, 0.0
        %v662 = vadd.f32 %v654, 0.0
        %663 = vset.pattern.permute.xlu0 1
        %664 = vperm.xlu0 %663, %v618
        %v665 = vpop.permute.xlu0 %664
        %667 = vset.pattern.permute.xlu0 1
        %668 = vperm.xlu0 %667, %v619
        %v669 = vpop.permute.xlu0 %668
        %671 = vset.pattern.permute.xlu0 1
        %672 = vperm.xlu0 %671, %v620
        %v673 = vpop.permute.xlu0 %672
        %675 = vset.pattern.permute.xlu0 1
        %676 = vperm.xlu0 %675, %v621
        %v677 = vpop.permute.xlu0 %676
        %v679 = vmul.f32 %v665, %v643
        %v680 = vmul.f32 %v665, %v644
        %v681 = vmul.f32 %v669, %v643
        %v682 = vmul.f32 %v669, %v644
        %v683 = vmul.f32 %v673, %v643
        %v684 = vmul.f32 %v673, %v644
        %v685 = vmul.f32 %v677, %v643
        %v686 = vmul.f32 %v677, %v644
        %695 = vrot.lane.b32.xlu0 %v679, 127
        %v696 = vpop.permute.xlu0 %695
        %697 = vrot.lane.b32.xlu0 %v680, 127
        %v698 = vpop.permute.xlu0 %697
        %699 = vrot.lane.b32.xlu0 %v681, 127
        %v700 = vpop.permute.xlu0 %699
        %701 = vrot.lane.b32.xlu0 %v682, 127
        %v702 = vpop.permute.xlu0 %701
        %703 = vrot.lane.b32.xlu0 %v683, 127
        %v704 = vpop.permute.xlu0 %703
        %705 = vrot.lane.b32.xlu0 %v684, 127
        %v706 = vpop.permute.xlu0 %705
        %707 = vrot.lane.b32.xlu0 %v685, 127
        %v708 = vpop.permute.xlu0 %707
        %709 = vrot.lane.b32.xlu0 %v686, 127
        %v710 = vpop.permute.xlu0 %709
        %vm711 = vcmask 1039360
        %v712 = vsel %vm711, %v696, %v698
        %v713 = vsel %vm711, %v700, %v702
        %v714 = vsel %vm711, %v704, %v706
        %v715 = vsel %vm711, %v708, %v710
        %v724 = vadd.f32 %v655, %v712
        %v725 = vadd.f32 %v656, %v698
        %v726 = vadd.f32 %v657, %v713
        %v727 = vadd.f32 %v658, %v702
        %v728 = vadd.f32 %v659, %v714
        %v729 = vadd.f32 %v660, %v706
        %v730 = vadd.f32 %v661, %v715
        %v731 = vadd.f32 %v662, %v710
        %732 = vset.pattern.permute.xlu0 2
        %733 = vperm.xlu0 %732, %v618
        %v734 = vpop.permute.xlu0 %733
        %736 = vset.pattern.permute.xlu0 2
        %737 = vperm.xlu0 %736, %v619
        %v738 = vpop.permute.xlu0 %737
        %740 = vset.pattern.permute.xlu0 2
        %741 = vperm.xlu0 %740, %v620
        %v742 = vpop.permute.xlu0 %741
        %744 = vset.pattern.permute.xlu0 2
        %745 = vperm.xlu0 %744, %v621
        %v746 = vpop.permute.xlu0 %745
        %v748 = vmul.f32 %v734, %v643
        %v749 = vmul.f32 %v734, %v644
        %v750 = vmul.f32 %v738, %v643
        %v751 = vmul.f32 %v738, %v644
        %v752 = vmul.f32 %v742, %v643
        %v753 = vmul.f32 %v742, %v644
        %v754 = vmul.f32 %v746, %v643
        %v755 = vmul.f32 %v746, %v644
        %764 = vrot.lane.b32.xlu0 %v748, 126
        %v765 = vpop.permute.xlu0 %764
        %766 = vrot.lane.b32.xlu0 %v749, 126
        %v767 = vpop.permute.xlu0 %766
        %768 = vrot.lane.b32.xlu0 %v750, 126
        %v769 = vpop.permute.xlu0 %768
        %770 = vrot.lane.b32.xlu0 %v751, 126
        %v771 = vpop.permute.xlu0 %770
        %772 = vrot.lane.b32.xlu0 %v752, 126
        %v773 = vpop.permute.xlu0 %772
        %774 = vrot.lane.b32.xlu0 %v753, 126
        %v775 = vpop.permute.xlu0 %774
        %776 = vrot.lane.b32.xlu0 %v754, 126
        %v777 = vpop.permute.xlu0 %776
        %778 = vrot.lane.b32.xlu0 %v755, 126
        %v779 = vpop.permute.xlu0 %778
        %vm780 = vcmask 1031168
        %v781 = vsel %vm780, %v765, %v767
        %v782 = vsel %vm780, %v769, %v771
        %v783 = vsel %vm780, %v773, %v775
        %v784 = vsel %vm780, %v777, %v779
        %v793 = vadd.f32 %v724, %v781
        %v794 = vadd.f32 %v725, %v767
        %v795 = vadd.f32 %v726, %v782
        %v796 = vadd.f32 %v727, %v771
        %v797 = vadd.f32 %v728, %v783
        %v798 = vadd.f32 %v729, %v775
        %v799 = vadd.f32 %v730, %v784
        %v800 = vadd.f32 %v731, %v779
        %801 = vset.pattern.permute.xlu0 3
        %802 = vperm.xlu0 %801, %v618
        %v803 = vpop.permute.xlu0 %802
        %805 = vset.pattern.permute.xlu0 3
        %806 = vperm.xlu0 %805, %v619
        %v807 = vpop.permute.xlu0 %806
        %809 = vset.pattern.permute.xlu0 3
        %810 = vperm.xlu0 %809, %v620
        %v811 = vpop.permute.xlu0 %810
        %813 = vset.pattern.permute.xlu0 3
        %814 = vperm.xlu0 %813, %v621
        %v815 = vpop.permute.xlu0 %814
        %v817 = vmul.f32 %v803, %v643
        %v818 = vmul.f32 %v803, %v644
        %v819 = vmul.f32 %v807, %v643
        %v820 = vmul.f32 %v807, %v644
        %v821 = vmul.f32 %v811, %v643
        %v822 = vmul.f32 %v811, %v644
        %v823 = vmul.f32 %v815, %v643
        %v824 = vmul.f32 %v815, %v644
        %833 = vrot.lane.b32.xlu0 %v817, 125
        %v834 = vpop.permute.xlu0 %833
        %835 = vrot.lane.b32.xlu0 %v818, 125
        %v836 = vpop.permute.xlu0 %835
        %837 = vrot.lane.b32.xlu0 %v819, 125
        %v838 = vpop.permute.xlu0 %837
        %839 = vrot.lane.b32.xlu0 %v820, 125
        %v840 = vpop.permute.xlu0 %839
        %841 = vrot.lane.b32.xlu0 %v821, 125
        %v842 = vpop.permute.xlu0 %841
        %843 = vrot.lane.b32.xlu0 %v822, 125
        %v844 = vpop.permute.xlu0 %843
        %845 = vrot.lane.b32.xlu0 %v823, 125
        %v846 = vpop.permute.xlu0 %845
        %847 = vrot.lane.b32.xlu0 %v824, 125
        %v848 = vpop.permute.xlu0 %847
        %vm849 = vcmask 1022976
        %v850 = vsel %vm849, %v834, %v836
        %v851 = vsel %vm849, %v838, %v840
        %v852 = vsel %vm849, %v842, %v844
        %v853 = vsel %vm849, %v846, %v848
        %v862 = vadd.f32 %v793, %v850
        %v863 = vadd.f32 %v794, %v836
        %v864 = vadd.f32 %v795, %v851
        %v865 = vadd.f32 %v796, %v840
        %v866 = vadd.f32 %v797, %v852
        %v867 = vadd.f32 %v798, %v844
        %v868 = vadd.f32 %v799, %v853
        %v869 = vadd.f32 %v800, %v848
        %870 = vset.pattern.permute.xlu0 4
        %871 = vperm.xlu0 %870, %v618
        %v872 = vpop.permute.xlu0 %871
        %874 = vset.pattern.permute.xlu0 4
        %875 = vperm.xlu0 %874, %v619
        %v876 = vpop.permute.xlu0 %875
        %878 = vset.pattern.permute.xlu0 4
        %879 = vperm.xlu0 %878, %v620
        %v880 = vpop.permute.xlu0 %879
        %882 = vset.pattern.permute.xlu0 4
        %883 = vperm.xlu0 %882, %v621
        %v884 = vpop.permute.xlu0 %883
        %v886 = vmul.f32 %v872, %v643
        %v887 = vmul.f32 %v872, %v644
        %v888 = vmul.f32 %v876, %v643
        %v889 = vmul.f32 %v876, %v644
        %v890 = vmul.f32 %v880, %v643
        %v891 = vmul.f32 %v880, %v644
        %v892 = vmul.f32 %v884, %v643
        %v893 = vmul.f32 %v884, %v644
        %902 = vrot.lane.b32.xlu0 %v886, 124
        %v903 = vpop.permute.xlu0 %902
        %904 = vrot.lane.b32.xlu0 %v887, 124
        %v905 = vpop.permute.xlu0 %904
        %906 = vrot.lane.b32.xlu0 %v888, 124
        %v907 = vpop.permute.xlu0 %906
        %908 = vrot.lane.b32.xlu0 %v889, 124
        %v909 = vpop.permute.xlu0 %908
        %910 = vrot.lane.b32.xlu0 %v890, 124
        %v911 = vpop.permute.xlu0 %910
        %912 = vrot.lane.b32.xlu0 %v891, 124
        %v913 = vpop.permute.xlu0 %912
        %914 = vrot.lane.b32.xlu0 %v892, 124
        %v915 = vpop.permute.xlu0 %914
        %916 = vrot.lane.b32.xlu0 %v893, 124
        %v917 = vpop.permute.xlu0 %916
        %vm918 = vcmask 1014784
        %v919 = vsel %vm918, %v903, %v905
        %v920 = vsel %vm918, %v907, %v909
        %v921 = vsel %vm918, %v911, %v913
        %v922 = vsel %vm918, %v915, %v917
        %v931 = vadd.f32 %v862, %v919
        %v932 = vadd.f32 %v863, %v905
        %v933 = vadd.f32 %v864, %v920
        %v934 = vadd.f32 %v865, %v909
        %v935 = vadd.f32 %v866, %v921
        %v936 = vadd.f32 %v867, %v913
        %v937 = vadd.f32 %v868, %v922
        %v938 = vadd.f32 %v869, %v917
        %939 = vset.pattern.permute.xlu0 5
        %940 = vperm.xlu0 %939, %v618
        %v941 = vpop.permute.xlu0 %940
        %943 = vset.pattern.permute.xlu0 5
        %944 = vperm.xlu0 %943, %v619
        %v945 = vpop.permute.xlu0 %944
        %947 = vset.pattern.permute.xlu0 5
        %948 = vperm.xlu0 %947, %v620
        %v949 = vpop.permute.xlu0 %948
        %951 = vset.pattern.permute.xlu0 5
        %952 = vperm.xlu0 %951, %v621
        %v953 = vpop.permute.xlu0 %952
        %v955 = vmul.f32 %v941, %v643
        %v956 = vmul.f32 %v941, %v644
        %v957 = vmul.f32 %v945, %v643
        %v958 = vmul.f32 %v945, %v644
        %v959 = vmul.f32 %v949, %v643
        %v960 = vmul.f32 %v949, %v644
        %v961 = vmul.f32 %v953, %v643
        %v962 = vmul.f32 %v953, %v644
        %971 = vrot.lane.b32.xlu0 %v955, 123
        %v972 = vpop.permute.xlu0 %971
        %973 = vrot.lane.b32.xlu0 %v956, 123
        %v974 = vpop.permute.xlu0 %973
        %975 = vrot.lane.b32.xlu0 %v957, 123
        %v976 = vpop.permute.xlu0 %975
        %977 = vrot.lane.b32.xlu0 %v958, 123
        %v978 = vpop.permute.xlu0 %977
        %979 = vrot.lane.b32.xlu0 %v959, 123
        %v980 = vpop.permute.xlu0 %979
        %981 = vrot.lane.b32.xlu0 %v960, 123
        %v982 = vpop.permute.xlu0 %981
        %983 = vrot.lane.b32.xlu0 %v961, 123
        %v984 = vpop.permute.xlu0 %983
        %985 = vrot.lane.b32.xlu0 %v962, 123
        %v986 = vpop.permute.xlu0 %985
        %vm987 = vcmask 1006592
        %v988 = vsel %vm987, %v972, %v974
        %v989 = vsel %vm987, %v976, %v978
        %v990 = vsel %vm987, %v980, %v982
        %v991 = vsel %vm987, %v984, %v986
        %v1000 = vadd.f32 %v931, %v988
        %v1001 = vadd.f32 %v932, %v974
        %v1002 = vadd.f32 %v933, %v989
        %v1003 = vadd.f32 %v934, %v978
        %v1004 = vadd.f32 %v935, %v990
        %v1005 = vadd.f32 %v936, %v982
        %v1006 = vadd.f32 %v937, %v991
        %v1007 = vadd.f32 %v938, %v986
        %1008 = vset.pattern.permute.xlu0 6
        %1009 = vperm.xlu0 %1008, %v618
        %v1010 = vpop.permute.xlu0 %1009
        %1012 = vset.pattern.permute.xlu0 6
        %1013 = vperm.xlu0 %1012, %v619
        %v1014 = vpop.permute.xlu0 %1013
        %1016 = vset.pattern.permute.xlu0 6
        %1017 = vperm.xlu0 %1016, %v620
        %v1018 = vpop.permute.xlu0 %1017
        %1020 = vset.pattern.permute.xlu0 6
        %1021 = vperm.xlu0 %1020, %v621
        %v1022 = vpop.permute.xlu0 %1021
        %v1024 = vmul.f32 %v1010, %v643
        %v1025 = vmul.f32 %v1010, %v644
        %v1026 = vmul.f32 %v1014, %v643
        %v1027 = vmul.f32 %v1014, %v644
        %v1028 = vmul.f32 %v1018, %v643
        %v1029 = vmul.f32 %v1018, %v644
        %v1030 = vmul.f32 %v1022, %v643
        %v1031 = vmul.f32 %v1022, %v644
        %1040 = vrot.lane.b32.xlu0 %v1024, 122
        %v1041 = vpop.permute.xlu0 %1040
        %1042 = vrot.lane.b32.xlu0 %v1025, 122
        %v1043 = vpop.permute.xlu0 %1042
        %1044 = vrot.lane.b32.xlu0 %v1026, 122
        %v1045 = vpop.permute.xlu0 %1044
        %1046 = vrot.lane.b32.xlu0 %v1027, 122
        %v1047 = vpop.permute.xlu0 %1046
        %1048 = vrot.lane.b32.xlu0 %v1028, 122
        %v1049 = vpop.permute.xlu0 %1048
        %1050 = vrot.lane.b32.xlu0 %v1029, 122
        %v1051 = vpop.permute.xlu0 %1050
        %1052 = vrot.lane.b32.xlu0 %v1030, 122
        %v1053 = vpop.permute.xlu0 %1052
        %1054 = vrot.lane.b32.xlu0 %v1031, 122
        %v1055 = vpop.permute.xlu0 %1054
        %vm1056 = vcmask 998400
        %v1057 = vsel %vm1056, %v1041, %v1043
        %v1058 = vsel %vm1056, %v1045, %v1047
        %v1059 = vsel %vm1056, %v1049, %v1051
        %v1060 = vsel %vm1056, %v1053, %v1055
        %v1069 = vadd.f32 %v1000, %v1057
        %v1070 = vadd.f32 %v1001, %v1043
        %v1071 = vadd.f32 %v1002, %v1058
        %v1072 = vadd.f32 %v1003, %v1047
        %v1073 = vadd.f32 %v1004, %v1059
        %v1074 = vadd.f32 %v1005, %v1051
        %v1075 = vadd.f32 %v1006, %v1060
        %v1076 = vadd.f32 %v1007, %v1055
        %1077 = vset.pattern.permute.xlu0 7
        %1078 = vperm.xlu0 %1077, %v618
        %v1079 = vpop.permute.xlu0 %1078
        %1081 = vset.pattern.permute.xlu0 7
        %1082 = vperm.xlu0 %1081, %v619
        %v1083 = vpop.permute.xlu0 %1082
        %1085 = vset.pattern.permute.xlu0 7
        %1086 = vperm.xlu0 %1085, %v620
        %v1087 = vpop.permute.xlu0 %1086
        %1089 = vset.pattern.permute.xlu0 7
        %1090 = vperm.xlu0 %1089, %v621
        %v1091 = vpop.permute.xlu0 %1090
        %v1093 = vmul.f32 %v1079, %v643
        %v1094 = vmul.f32 %v1079, %v644
        %v1095 = vmul.f32 %v1083, %v643
        %v1096 = vmul.f32 %v1083, %v644
        %v1097 = vmul.f32 %v1087, %v643
        %v1098 = vmul.f32 %v1087, %v644
        %v1099 = vmul.f32 %v1091, %v643
        %v1100 = vmul.f32 %v1091, %v644
        %1109 = vrot.lane.b32.xlu0 %v1093, 121
        %v1110 = vpop.permute.xlu0 %1109
        %1111 = vrot.lane.b32.xlu0 %v1094, 121
        %v1112 = vpop.permute.xlu0 %1111
        %1113 = vrot.lane.b32.xlu0 %v1095, 121
        %v1114 = vpop.permute.xlu0 %1113
        %1115 = vrot.lane.b32.xlu0 %v1096, 121
        %v1116 = vpop.permute.xlu0 %1115
        %1117 = vrot.lane.b32.xlu0 %v1097, 121
        %v1118 = vpop.permute.xlu0 %1117
        %1119 = vrot.lane.b32.xlu0 %v1098, 121
        %v1120 = vpop.permute.xlu0 %1119
        %1121 = vrot.lane.b32.xlu0 %v1099, 121
        %v1122 = vpop.permute.xlu0 %1121
        %1123 = vrot.lane.b32.xlu0 %v1100, 121
        %v1124 = vpop.permute.xlu0 %1123
        %vm1125 = vcmask 990208
        %v1126 = vsel %vm1125, %v1110, %v1112
        %v1127 = vsel %vm1125, %v1114, %v1116
        %v1128 = vsel %vm1125, %v1118, %v1120
        %v1129 = vsel %vm1125, %v1122, %v1124
        %v1138 = vadd.f32 %v1069, %v1126
        %v1139 = vadd.f32 %v1070, %v1112
        %v1140 = vadd.f32 %v1071, %v1127
        %v1141 = vadd.f32 %v1072, %v1116
        %v1142 = vadd.f32 %v1073, %v1128
        %v1143 = vadd.f32 %v1074, %v1120
        %v1144 = vadd.f32 %v1075, %v1129
        %v1145 = vadd.f32 %v1076, %v1124
        %1146 = vset.pattern.permute.xlu0 8
        %1147 = vperm.xlu0 %1146, %v618
        %v1148 = vpop.permute.xlu0 %1147
        %1150 = vset.pattern.permute.xlu0 8
        %1151 = vperm.xlu0 %1150, %v619
        %v1152 = vpop.permute.xlu0 %1151
        %1154 = vset.pattern.permute.xlu0 8
        %1155 = vperm.xlu0 %1154, %v620
        %v1156 = vpop.permute.xlu0 %1155
        %1158 = vset.pattern.permute.xlu0 8
        %1159 = vperm.xlu0 %1158, %v621
        %v1160 = vpop.permute.xlu0 %1159
        %v1162 = vmul.f32 %v1148, %v643
        %v1163 = vmul.f32 %v1148, %v644
        %v1164 = vmul.f32 %v1152, %v643
        %v1165 = vmul.f32 %v1152, %v644
        %v1166 = vmul.f32 %v1156, %v643
        %v1167 = vmul.f32 %v1156, %v644
        %v1168 = vmul.f32 %v1160, %v643
        %v1169 = vmul.f32 %v1160, %v644
        %1178 = vrot.lane.b32.xlu0 %v1162, 120
        %v1179 = vpop.permute.xlu0 %1178
        %1180 = vrot.lane.b32.xlu0 %v1163, 120
        %v1181 = vpop.permute.xlu0 %1180
        %1182 = vrot.lane.b32.xlu0 %v1164, 120
        %v1183 = vpop.permute.xlu0 %1182
        %1184 = vrot.lane.b32.xlu0 %v1165, 120
        %v1185 = vpop.permute.xlu0 %1184
        %1186 = vrot.lane.b32.xlu0 %v1166, 120
        %v1187 = vpop.permute.xlu0 %1186
        %1188 = vrot.lane.b32.xlu0 %v1167, 120
        %v1189 = vpop.permute.xlu0 %1188
        %1190 = vrot.lane.b32.xlu0 %v1168, 120
        %v1191 = vpop.permute.xlu0 %1190
        %1192 = vrot.lane.b32.xlu0 %v1169, 120
        %v1193 = vpop.permute.xlu0 %1192
        %vm1194 = vcmask 982016
        %v1195 = vsel %vm1194, %v1179, %v1181
        %v1196 = vsel %vm1194, %v1183, %v1185
        %v1197 = vsel %vm1194, %v1187, %v1189
        %v1198 = vsel %vm1194, %v1191, %v1193
        %v1207 = vadd.f32 %v1138, %v1195
        %v1208 = vadd.f32 %v1139, %v1181
        %v1209 = vadd.f32 %v1140, %v1196
        %v1210 = vadd.f32 %v1141, %v1185
        %v1211 = vadd.f32 %v1142, %v1197
        %v1212 = vadd.f32 %v1143, %v1189
        %v1213 = vadd.f32 %v1144, %v1198
        %v1214 = vadd.f32 %v1145, %v1193
        %v1215 = vld [vmem:[%s2] sm:$0xff]
        %v1216 = vld [vmem:[%s2 + $0x8] sm:$0xff]
        %v1217 = vld [vmem:[%s2 + $0x10] sm:$0xff]
        %v1218 = vld [vmem:[%s2 + $0x18] sm:$0xff]
        %1220 = vset.pattern.permute.xlu0 0
        %1221 = vperm.xlu0 %1220, %v1215
        %v1222 = vpop.permute.xlu0 %1221
        %1225 = vset.pattern.permute.xlu0 0
        %1226 = vperm.xlu0 %1225, %v1216
        %v1227 = vpop.permute.xlu0 %1226
        %1230 = vset.pattern.permute.xlu0 0
        %1231 = vperm.xlu0 %1230, %v1217
        %v1232 = vpop.permute.xlu0 %1231
        %1235 = vset.pattern.permute.xlu0 0
        %1236 = vperm.xlu0 %1235, %v1218
        %v1237 = vpop.permute.xlu0 %1236
        %v1239 = vmul.f32 %v1207, %v1222
        %v1240 = vmul.f32 %v1208, %v1222
        %v1241 = vmul.f32 %v1209, %v1227
        %v1242 = vmul.f32 %v1210, %v1227
        %v1243 = vmul.f32 %v1211, %v1232
        %v1244 = vmul.f32 %v1212, %v1232
        %v1245 = vmul.f32 %v1213, %v1237
        %v1246 = vmul.f32 %v1214, %v1237
        %v1247 = vld [vmem:[%s3] sm:$0xff]
        %v1248 = vld [vmem:[%s3 + $0x8] sm:$0xff]
        %v1249 = vld [vmem:[%s3 + $0x10] sm:$0xff]
        %v1250 = vld [vmem:[%s3 + $0x18] sm:$0xff]
        %1252 = vset.pattern.permute.xlu0 0
        %1253 = vperm.xlu0 %1252, %v1247
        %v1254 = vpop.permute.xlu0 %1253
        %1257 = vset.pattern.permute.xlu0 0
        %1258 = vperm.xlu0 %1257, %v1248
        %v1259 = vpop.permute.xlu0 %1258
        %1262 = vset.pattern.permute.xlu0 0
        %1263 = vperm.xlu0 %1262, %v1249
        %v1264 = vpop.permute.xlu0 %1263
        %1267 = vset.pattern.permute.xlu0 0
        %1268 = vperm.xlu0 %1267, %v1250
        %v1269 = vpop.permute.xlu0 %1268
        %v1271 = vadd.f32 %v1239, %v1254
        %v1272 = vadd.f32 %v1240, %v1254
        %v1273 = vadd.f32 %v1241, %v1259
        %v1274 = vadd.f32 %v1242, %v1259
        %v1275 = vadd.f32 %v1243, %v1264
        %v1276 = vadd.f32 %v1244, %v1264
        %v1277 = vadd.f32 %v1245, %v1269
        %v1278 = vadd.f32 %v1246, %v1269
        %v1279 = vmax.f32 %v1271, 0.0
        %v1280 = vmax.f32 %v1272, 0.0
        %v1281 = vmax.f32 %v1273, 0.0
        %v1282 = vmax.f32 %v1274, 0.0
        %v1283 = vmax.f32 %v1275, 0.0
        %v1284 = vmax.f32 %v1276, 0.0
        %v1285 = vmax.f32 %v1277, 0.0
        %v1286 = vmax.f32 %v1278, 0.0
        %1295 = vrot.lane.b32.xlu0 %v1279, 127
        %v1296 = vpop.permute.xlu0 %1295
        %1297 = vrot.lane.b32.xlu0 %v1280, 127
        %v1298 = vpop.permute.xlu0 %1297
        %1299 = vrot.lane.b32.xlu0 %v1281, 127
        %v1300 = vpop.permute.xlu0 %1299
        %1301 = vrot.lane.b32.xlu0 %v1282, 127
        %v1302 = vpop.permute.xlu0 %1301
        %1303 = vrot.lane.b32.xlu0 %v1283, 127
        %v1304 = vpop.permute.xlu0 %1303
        %1305 = vrot.lane.b32.xlu0 %v1284, 127
        %v1306 = vpop.permute.xlu0 %1305
        %1307 = vrot.lane.b32.xlu0 %v1285, 127
        %v1308 = vpop.permute.xlu0 %1307
        %1309 = vrot.lane.b32.xlu0 %v1286, 127
        %v1310 = vpop.permute.xlu0 %1309
        %v1311 = vsel %vm711, %v1296, %v1298
        %v1312 = vsel %vm711, %v1300, %v1302
        %v1313 = vsel %vm711, %v1304, %v1306
        %v1314 = vsel %vm711, %v1308, %v1310
        %1323 = vrot.lane.b32.xlu0 %v1279, 126
        %v1324 = vpop.permute.xlu0 %1323
        %1325 = vrot.lane.b32.xlu0 %v1280, 126
        %v1326 = vpop.permute.xlu0 %1325
        %1327 = vrot.lane.b32.xlu0 %v1281, 126
        %v1328 = vpop.permute.xlu0 %1327
        %1329 = vrot.lane.b32.xlu0 %v1282, 126
        %v1330 = vpop.permute.xlu0 %1329
        %1331 = vrot.lane.b32.xlu0 %v1283, 126
        %v1332 = vpop.permute.xlu0 %1331
        %1333 = vrot.lane.b32.xlu0 %v1284, 126
        %v1334 = vpop.permute.xlu0 %1333
        %1335 = vrot.lane.b32.xlu0 %v1285, 126
        %v1336 = vpop.permute.xlu0 %1335
        %1337 = vrot.lane.b32.xlu0 %v1286, 126
        %v1338 = vpop.permute.xlu0 %1337
        %v1339 = vsel %vm780, %v1324, %v1326
        %v1340 = vsel %vm780, %v1328, %v1330
        %v1341 = vsel %vm780, %v1332, %v1334
        %v1342 = vsel %vm780, %v1336, %v1338
        %1351 = vrot.lane.b32.xlu0 %v1279, 125
        %v1352 = vpop.permute.xlu0 %1351
        %1353 = vrot.lane.b32.xlu0 %v1280, 125
        %v1354 = vpop.permute.xlu0 %1353
        %1355 = vrot.lane.b32.xlu0 %v1281, 125
        %v1356 = vpop.permute.xlu0 %1355
        %1357 = vrot.lane.b32.xlu0 %v1282, 125
        %v1358 = vpop.permute.xlu0 %1357
        %1359 = vrot.lane.b32.xlu0 %v1283, 125
        %v1360 = vpop.permute.xlu0 %1359
        %1361 = vrot.lane.b32.xlu0 %v1284, 125
        %v1362 = vpop.permute.xlu0 %1361
        %1363 = vrot.lane.b32.xlu0 %v1285, 125
        %v1364 = vpop.permute.xlu0 %1363
        %1365 = vrot.lane.b32.xlu0 %v1286, 125
        %v1366 = vpop.permute.xlu0 %1365
        %v1367 = vsel %vm849, %v1352, %v1354
        %v1368 = vsel %vm849, %v1356, %v1358
        %v1369 = vsel %vm849, %v1360, %v1362
        %v1370 = vsel %vm849, %v1364, %v1366
        %1379 = vrot.lane.b32.xlu0 %v1279, 124
        %v1380 = vpop.permute.xlu0 %1379
        %1381 = vrot.lane.b32.xlu0 %v1280, 124
        %v1382 = vpop.permute.xlu0 %1381
        %1383 = vrot.lane.b32.xlu0 %v1281, 124
        %v1384 = vpop.permute.xlu0 %1383
        %1385 = vrot.lane.b32.xlu0 %v1282, 124
        %v1386 = vpop.permute.xlu0 %1385
        %1387 = vrot.lane.b32.xlu0 %v1283, 124
        %v1388 = vpop.permute.xlu0 %1387
        %1389 = vrot.lane.b32.xlu0 %v1284, 124
        %v1390 = vpop.permute.xlu0 %1389
        %1391 = vrot.lane.b32.xlu0 %v1285, 124
        %v1392 = vpop.permute.xlu0 %1391
        %1393 = vrot.lane.b32.xlu0 %v1286, 124
        %v1394 = vpop.permute.xlu0 %1393
        %v1395 = vsel %vm918, %v1380, %v1382
        %v1396 = vsel %vm918, %v1384, %v1386
        %v1397 = vsel %vm918, %v1388, %v1390
        %v1398 = vsel %vm918, %v1392, %v1394
        %1407 = vrot.lane.b32.xlu0 %v1279, 123
        %v1408 = vpop.permute.xlu0 %1407
        %1409 = vrot.lane.b32.xlu0 %v1280, 123
        %v1410 = vpop.permute.xlu0 %1409
        %1411 = vrot.lane.b32.xlu0 %v1281, 123
        %v1412 = vpop.permute.xlu0 %1411
        %1413 = vrot.lane.b32.xlu0 %v1282, 123
        %v1414 = vpop.permute.xlu0 %1413
        %1415 = vrot.lane.b32.xlu0 %v1283, 123
        %v1416 = vpop.permute.xlu0 %1415
        %1417 = vrot.lane.b32.xlu0 %v1284, 123
        %v1418 = vpop.permute.xlu0 %1417
        %1419 = vrot.lane.b32.xlu0 %v1285, 123
        %v1420 = vpop.permute.xlu0 %1419
        %1421 = vrot.lane.b32.xlu0 %v1286, 123
        %v1422 = vpop.permute.xlu0 %1421
        %v1423 = vsel %vm987, %v1408, %v1410
        %v1424 = vsel %vm987, %v1412, %v1414
        %v1425 = vsel %vm987, %v1416, %v1418
        %v1426 = vsel %vm987, %v1420, %v1422
        %1435 = vrot.lane.b32.xlu0 %v1279, 122
        %v1436 = vpop.permute.xlu0 %1435
        %1437 = vrot.lane.b32.xlu0 %v1280, 122
        %v1438 = vpop.permute.xlu0 %1437
        %1439 = vrot.lane.b32.xlu0 %v1281, 122
        %v1440 = vpop.permute.xlu0 %1439
        %1441 = vrot.lane.b32.xlu0 %v1282, 122
        %v1442 = vpop.permute.xlu0 %1441
        %1443 = vrot.lane.b32.xlu0 %v1283, 122
        %v1444 = vpop.permute.xlu0 %1443
        %1445 = vrot.lane.b32.xlu0 %v1284, 122
        %v1446 = vpop.permute.xlu0 %1445
        %1447 = vrot.lane.b32.xlu0 %v1285, 122
        %v1448 = vpop.permute.xlu0 %1447
        %1449 = vrot.lane.b32.xlu0 %v1286, 122
        %v1450 = vpop.permute.xlu0 %1449
        %v1451 = vsel %vm1056, %v1436, %v1438
        %v1452 = vsel %vm1056, %v1440, %v1442
        %v1453 = vsel %vm1056, %v1444, %v1446
        %v1454 = vsel %vm1056, %v1448, %v1450
        %1463 = vrot.lane.b32.xlu0 %v1279, 121
        %v1464 = vpop.permute.xlu0 %1463
        %1465 = vrot.lane.b32.xlu0 %v1280, 121
        %v1466 = vpop.permute.xlu0 %1465
        %1467 = vrot.lane.b32.xlu0 %v1281, 121
        %v1468 = vpop.permute.xlu0 %1467
        %1469 = vrot.lane.b32.xlu0 %v1282, 121
        %v1470 = vpop.permute.xlu0 %1469
        %1471 = vrot.lane.b32.xlu0 %v1283, 121
        %v1472 = vpop.permute.xlu0 %1471
        %1473 = vrot.lane.b32.xlu0 %v1284, 121
        %v1474 = vpop.permute.xlu0 %1473
        %1475 = vrot.lane.b32.xlu0 %v1285, 121
        %v1476 = vpop.permute.xlu0 %1475
        %1477 = vrot.lane.b32.xlu0 %v1286, 121
        %v1478 = vpop.permute.xlu0 %1477
        %v1479 = vsel %vm1125, %v1464, %v1466
        %v1480 = vsel %vm1125, %v1468, %v1470
        %v1481 = vsel %vm1125, %v1472, %v1474
        %v1482 = vsel %vm1125, %v1476, %v1478
        %1491 = vrot.lane.b32.xlu0 %v1279, 120
        %v1492 = vpop.permute.xlu0 %1491
        %1493 = vrot.lane.b32.xlu0 %v1280, 120
        %v1494 = vpop.permute.xlu0 %1493
        %1495 = vrot.lane.b32.xlu0 %v1281, 120
        %v1496 = vpop.permute.xlu0 %1495
        %1497 = vrot.lane.b32.xlu0 %v1282, 120
        %v1498 = vpop.permute.xlu0 %1497
        %1499 = vrot.lane.b32.xlu0 %v1283, 120
        %v1500 = vpop.permute.xlu0 %1499
        %1501 = vrot.lane.b32.xlu0 %v1284, 120
        %v1502 = vpop.permute.xlu0 %1501
        %1503 = vrot.lane.b32.xlu0 %v1285, 120
        %v1504 = vpop.permute.xlu0 %1503
        %1505 = vrot.lane.b32.xlu0 %v1286, 120
        %v1506 = vpop.permute.xlu0 %1505
        %v1507 = vsel %vm1194, %v1492, %v1494
        %v1508 = vsel %vm1194, %v1496, %v1498
        %v1509 = vsel %vm1194, %v1500, %v1502
        %v1510 = vsel %vm1194, %v1504, %v1506
        %v1519 = vld [vmem:[%s4] sm:$0xff]
        %v1520 = vld [vmem:[%s4 + $0x8] sm:$0xff]
        %v1521 = vld [vmem:[%s4 + $0x10] sm:$0xff]
        %v1522 = vld [vmem:[%s4 + $0x18] sm:$0xff]
        %v1523 = vld [vmem:[%s4 + $0x20] sm:$0xff]
        %v1524 = vld [vmem:[%s4 + $0x28] sm:$0xff]
        %v1525 = vld [vmem:[%s4 + $0x30] sm:$0xff]
        %v1526 = vld [vmem:[%s4 + $0x38] sm:$0xff]
        %v1527 = vld [vmem:[%s4 + $0x40] sm:$0xff]
        %v1528 = vld [vmem:[%s4 + $0x48] sm:$0xff]
        %v1529 = vld [vmem:[%s4 + $0x50] sm:$0xff]
        %v1530 = vld [vmem:[%s4 + $0x58] sm:$0xff]
        %vm1531 = vcmask 261120
        %v1533 = vsel %vm1531, %v1521, 0
        %v1536 = vsel %vm1531, %v1524, 0
        %v1539 = vsel %vm1531, %v1527, 0
        %v1542 = vsel %vm1531, %v1530, 0
        %1544 = vmatpush.msra.mxu0 %v1370
        %1545 = vmatpush.msra.mxu0 %v1369
        %1546 = vmatpush.msra.mxu0 %v1368
        %1547 = vmatpush.msra.mxu0 %v1367
        %1548 = vmatpush.msra.mxu0 %v1342
        %1549 = vmatpush.msra.mxu0 %v1341
        %1550 = vmatpush.msra.mxu0 %v1340
        %1551 = vmatpush.msra.mxu0 %v1339
        %1552 = vmatpush.msra.mxu0 %v1314
        %1553 = vmatpush.msra.mxu0 %v1313
        %1554 = vmatpush.msra.mxu0 %v1312
        %1555 = vmatpush.msra.mxu0 %v1311
        %1556 = vmatpush.msra.mxu0 %v1285
        %1557 = vmatpush.msra.mxu0 %v1283
        %1558 = vmatpush.msra.mxu0 %v1281
        %1559 = vmatpush.msra.mxu0 %v1279
        %1560 = vmatmul.f32.gmra.mxu0 %v1519
        %v1561 = vpop.f32.mrf.mxu0
        %v1562 = vadd.f32 0.0, %v1561
        %1563 = vmatmul.f32.gmra.mxu0 %v1522
        %v1564 = vpop.f32.mrf.mxu0
        %v1565 = vadd.f32 0.0, %v1564
        %1566 = vmatmul.f32.gmra.mxu0 %v1525
        %v1567 = vpop.f32.mrf.mxu0
        %v1568 = vadd.f32 0.0, %v1567
        %1569 = vmatmul.f32.gmra.mxu0 %v1528
        %v1570 = vpop.f32.mrf.mxu0
        %v1571 = vadd.f32 0.0, %v1570
        %1572 = vdwg.mxu0
        %1573 = vmatpush.msra.mxu0 %v1482
        %1574 = vmatpush.msra.mxu0 %v1481
        %1575 = vmatpush.msra.mxu0 %v1480
        %1576 = vmatpush.msra.mxu0 %v1479
        %1577 = vmatpush.msra.mxu0 %v1454
        %1578 = vmatpush.msra.mxu0 %v1453
        %1579 = vmatpush.msra.mxu0 %v1452
        %1580 = vmatpush.msra.mxu0 %v1451
        %1581 = vmatpush.msra.mxu0 %v1426
        %1582 = vmatpush.msra.mxu0 %v1425
        %1583 = vmatpush.msra.mxu0 %v1424
        %1584 = vmatpush.msra.mxu0 %v1423
        %1585 = vmatpush.msra.mxu0 %v1398
        %1586 = vmatpush.msra.mxu0 %v1397
        %1587 = vmatpush.msra.mxu0 %v1396
        %1588 = vmatpush.msra.mxu0 %v1395
        %1589 = vmatmul.f32.gmra.mxu0 %v1520
        %v1590 = vpop.f32.mrf.mxu0
        %v1591 = vadd.f32 %v1562, %v1590
        %1592 = vmatmul.f32.gmra.mxu0 %v1523
        %v1593 = vpop.f32.mrf.mxu0
        %v1594 = vadd.f32 %v1565, %v1593
        %1595 = vmatmul.f32.gmra.mxu0 %v1526
        %v1596 = vpop.f32.mrf.mxu0
        %v1597 = vadd.f32 %v1568, %v1596
        %1598 = vmatmul.f32.gmra.mxu0 %v1529
        %v1599 = vpop.f32.mrf.mxu0
        %v1600 = vadd.f32 %v1571, %v1599
        %1601 = vdwg.mxu0
        %1602 = vmatpush.msra.mxu0 0.0
        %1603 = vmatpush.msra.mxu0 0.0
        %1604 = vmatpush.msra.mxu0 0.0
        %1605 = vmatpush.msra.mxu0 0.0
        %1606 = vmatpush.msra.mxu0 0.0
        %1607 = vmatpush.msra.mxu0 0.0
        %1608 = vmatpush.msra.mxu0 0.0
        %1609 = vmatpush.msra.mxu0 0.0
        %1610 = vmatpush.msra.mxu0 0.0
        %1611 = vmatpush.msra.mxu0 0.0
        %1612 = vmatpush.msra.mxu0 0.0
        %1613 = vmatpush.msra.mxu0 0.0
        %1614 = vmatpush.msra.mxu0 %v1510
        %1615 = vmatpush.msra.mxu0 %v1509
        %1616 = vmatpush.msra.mxu0 %v1508
        %1617 = vmatpush.msra.mxu0 %v1507
        %1618 = vmatmul.f32.gmra.mxu0 %v1533
        %v1619 = vpop.f32.mrf.mxu0
        %v1620 = vadd.f32 %v1591, %v1619
        %1621 = vmatmul.f32.gmra.mxu0 %v1536
        %v1622 = vpop.f32.mrf.mxu0
        %v1623 = vadd.f32 %v1594, %v1622
        %1624 = vmatmul.f32.gmra.mxu0 %v1539
        %v1625 = vpop.f32.mrf.mxu0
        %v1626 = vadd.f32 %v1597, %v1625
        %1627 = vmatmul.f32.gmra.mxu0 %v1542
        %v1628 = vpop.f32.mrf.mxu0
        %v1629 = vadd.f32 %v1600, %v1628
        %1630 = vdwg.mxu0
        %1631 = vmatpush.msra.mxu0 %v1366
        %1632 = vmatpush.msra.mxu0 %v1362
        %1633 = vmatpush.msra.mxu0 %v1358
        %1634 = vmatpush.msra.mxu0 %v1354
        %1635 = vmatpush.msra.mxu0 %v1338
        %1636 = vmatpush.msra.mxu0 %v1334
        %1637 = vmatpush.msra.mxu0 %v1330
        %1638 = vmatpush.msra.mxu0 %v1326
        %1639 = vmatpush.msra.mxu0 %v1310
        %1640 = vmatpush.msra.mxu0 %v1306
        %1641 = vmatpush.msra.mxu0 %v1302
        %1642 = vmatpush.msra.mxu0 %v1298
        %1643 = vmatpush.msra.mxu0 %v1286
        %1644 = vmatpush.msra.mxu0 %v1284
        %1645 = vmatpush.msra.mxu0 %v1282
        %1646 = vmatpush.msra.mxu0 %v1280
        %1647 = vmatmul.f32.gmra.mxu0 %v1519
        %v1648 = vpop.f32.mrf.mxu0
        %v1649 = vadd.f32 0.0, %v1648
        %1650 = vmatmul.f32.gmra.mxu0 %v1522
        %v1651 = vpop.f32.mrf.mxu0
        %v1652 = vadd.f32 0.0, %v1651
        %1653 = vmatmul.f32.gmra.mxu0 %v1525
        %v1654 = vpop.f32.mrf.mxu0
        %v1655 = vadd.f32 0.0, %v1654
        %1656 = vmatmul.f32.gmra.mxu0 %v1528
        %v1657 = vpop.f32.mrf.mxu0
        %v1658 = vadd.f32 0.0, %v1657
        %1659 = vdwg.mxu0
        %1660 = vmatpush.msra.mxu0 %v1478
        %1661 = vmatpush.msra.mxu0 %v1474
        %1662 = vmatpush.msra.mxu0 %v1470
        %1663 = vmatpush.msra.mxu0 %v1466
        %1664 = vmatpush.msra.mxu0 %v1450
        %1665 = vmatpush.msra.mxu0 %v1446
        %1666 = vmatpush.msra.mxu0 %v1442
        %1667 = vmatpush.msra.mxu0 %v1438
        %1668 = vmatpush.msra.mxu0 %v1422
        %1669 = vmatpush.msra.mxu0 %v1418
        %1670 = vmatpush.msra.mxu0 %v1414
        %1671 = vmatpush.msra.mxu0 %v1410
        %1672 = vmatpush.msra.mxu0 %v1394
        %1673 = vmatpush.msra.mxu0 %v1390
        %1674 = vmatpush.msra.mxu0 %v1386
        %1675 = vmatpush.msra.mxu0 %v1382
        %1676 = vmatmul.f32.gmra.mxu0 %v1520
        %v1677 = vpop.f32.mrf.mxu0
        %v1678 = vadd.f32 %v1649, %v1677
        %1679 = vmatmul.f32.gmra.mxu0 %v1523
        %v1680 = vpop.f32.mrf.mxu0
        %v1681 = vadd.f32 %v1652, %v1680
        %1682 = vmatmul.f32.gmra.mxu0 %v1526
        %v1683 = vpop.f32.mrf.mxu0
        %v1684 = vadd.f32 %v1655, %v1683
        %1685 = vmatmul.f32.gmra.mxu0 %v1529
        %v1686 = vpop.f32.mrf.mxu0
        %v1687 = vadd.f32 %v1658, %v1686
        %1688 = vdwg.mxu0
        %1689 = vmatpush.msra.mxu0 0.0
        %1690 = vmatpush.msra.mxu0 0.0
        %1691 = vmatpush.msra.mxu0 0.0
        %1692 = vmatpush.msra.mxu0 0.0
        %1693 = vmatpush.msra.mxu0 0.0
        %1694 = vmatpush.msra.mxu0 0.0
        %1695 = vmatpush.msra.mxu0 0.0
        %1696 = vmatpush.msra.mxu0 0.0
        %1697 = vmatpush.msra.mxu0 0.0
        %1698 = vmatpush.msra.mxu0 0.0
        %1699 = vmatpush.msra.mxu0 0.0
        %1700 = vmatpush.msra.mxu0 0.0
        %1701 = vmatpush.msra.mxu0 %v1506
        %1702 = vmatpush.msra.mxu0 %v1502
        %1703 = vmatpush.msra.mxu0 %v1498
        %1704 = vmatpush.msra.mxu0 %v1494
        %1705 = vmatmul.f32.gmra.mxu0 %v1533
        %v1706 = vpop.f32.mrf.mxu0
        %v1707 = vadd.f32 %v1678, %v1706
        %1708 = vmatmul.f32.gmra.mxu0 %v1536
        %v1709 = vpop.f32.mrf.mxu0
        %v1710 = vadd.f32 %v1681, %v1709
        %1711 = vmatmul.f32.gmra.mxu0 %v1539
        %v1712 = vpop.f32.mrf.mxu0
        %v1713 = vadd.f32 %v1684, %v1712
        %1714 = vmatmul.f32.gmra.mxu0 %v1542
        %v1715 = vpop.f32.mrf.mxu0
        %v1716 = vadd.f32 %v1687, %v1715
        %1717 = vdwg.mxu0
        %v1718 = vld [vmem:[%s5] sm:$0xff]
        %v1719 = vld [vmem:[%s5 + $0x8] sm:$0xff]
        %v1720 = vld [vmem:[%s5 + $0x10] sm:$0xff]
        %v1721 = vld [vmem:[%s5 + $0x18] sm:$0xff]
        %1723 = vset.pattern.permute.xlu0 0
        %1724 = vperm.xlu0 %1723, %v1718
        %v1725 = vpop.permute.xlu0 %1724
        %1728 = vset.pattern.permute.xlu0 0
        %1729 = vperm.xlu0 %1728, %v1719
        %v1730 = vpop.permute.xlu0 %1729
        %1733 = vset.pattern.permute.xlu0 0
        %1734 = vperm.xlu0 %1733, %v1720
        %v1735 = vpop.permute.xlu0 %1734
        %1738 = vset.pattern.permute.xlu0 0
        %1739 = vperm.xlu0 %1738, %v1721
        %v1740 = vpop.permute.xlu0 %1739
        %v1742 = vmul.f32 %v1620, %v1725
        %v1743 = vmul.f32 %v1707, %v1725
        %v1744 = vmul.f32 %v1623, %v1730
        %v1745 = vmul.f32 %v1710, %v1730
        %v1746 = vmul.f32 %v1626, %v1735
        %v1747 = vmul.f32 %v1713, %v1735
        %v1748 = vmul.f32 %v1629, %v1740
        %v1749 = vmul.f32 %v1716, %v1740
        %v1750 = vld [vmem:[%s6] sm:$0xff]
        %v1751 = vld [vmem:[%s6 + $0x8] sm:$0xff]
        %v1752 = vld [vmem:[%s6 + $0x10] sm:$0xff]
        %v1753 = vld [vmem:[%s6 + $0x18] sm:$0xff]
        %1755 = vset.pattern.permute.xlu0 0
        %1756 = vperm.xlu0 %1755, %v1750
        %v1757 = vpop.permute.xlu0 %1756
        %1760 = vset.pattern.permute.xlu0 0
        %1761 = vperm.xlu0 %1760, %v1751
        %v1762 = vpop.permute.xlu0 %1761
        %1765 = vset.pattern.permute.xlu0 0
        %1766 = vperm.xlu0 %1765, %v1752
        %v1767 = vpop.permute.xlu0 %1766
        %1770 = vset.pattern.permute.xlu0 0
        %1771 = vperm.xlu0 %1770, %v1753
        %v1772 = vpop.permute.xlu0 %1771
        %v1774 = vadd.f32 %v1742, %v1757
        %v1775 = vadd.f32 %v1743, %v1757
        %v1776 = vadd.f32 %v1744, %v1762
        %v1777 = vadd.f32 %v1745, %v1762
        %v1778 = vadd.f32 %v1746, %v1767
        %v1779 = vadd.f32 %v1747, %v1767
        %v1780 = vadd.f32 %v1748, %v1772
        %v1781 = vadd.f32 %v1749, %v1772
        %v1782 = vmax.f32 %v1774, 0.0
        %v1783 = vmax.f32 %v1775, 0.0
        %v1784 = vmax.f32 %v1776, 0.0
        %v1785 = vmax.f32 %v1777, 0.0
        %v1786 = vmax.f32 %v1778, 0.0
        %v1787 = vmax.f32 %v1779, 0.0
        %v1788 = vmax.f32 %v1780, 0.0
        %v1789 = vmax.f32 %v1781, 0.0
        %v1790 = vlaneseq
        %v1791 = vshrl.u32 %v1790, 7
        %v1792 = vadd.s32 %v1791, 8
        %v1793 = vadd.s32 %v1791, 16
        %v1794 = vadd.s32 %v1791, 24
        %v1795 = vadd.s32 %v1791, 32
        %v1796 = vadd.s32 %v1791, 40
        %v1797 = vadd.s32 %v1791, 48
        %v1798 = vadd.s32 %v1791, 56
        %v1799 = vadd.s32 %v1791, 64
        %v1800 = vadd.s32 %v1791, 72
        %v1801 = vadd.s32 %v1791, 80
        %v1802 = vadd.s32 %v1791, 88
        %v1803 = vadd.s32 %v1791, 96
        %v1804 = vadd.s32 %v1791, 104
        %v1805 = vadd.s32 %v1791, 112
        %v1806 = vadd.s32 %v1791, 120
        %v1807 = vadd.s32 %v1791, 128
        %v1808 = vadd.s32 %v1791, 136
        %v1809 = vadd.s32 %v1791, 144
        %v1810 = vadd.s32 %v1791, 152
        %v1811 = vadd.s32 %v1791, 160
        %v1812 = vadd.s32 %v1791, 168
        %v1813 = vadd.s32 %v1791, 176
        %v1814 = vadd.s32 %v1791, 184
        %v1815 = vadd.s32 %v1791, 192
        %v1816 = vadd.s32 %v1791, 200
        %v1817 = vadd.s32 %v1791, 208
        %v1818 = vadd.s32 %v1791, 216
        %v1819 = vadd.s32 %v1791, 224
        %v1820 = vlaneseq
        %v1821 = vand.u32 %v1820, 127
        %v1822 = vmul.u32 %v1821, 2
        %vm1823 = vcmp.eq.s32.totalorder %v1791, %v1822
        %vm1824 = vcmp.eq.s32.totalorder %v1792, %v1822
        %vm1825 = vcmp.eq.s32.totalorder %v1793, %v1822
        %vm1826 = vcmp.eq.s32.totalorder %v1794, %v1822
        %vm1827 = vcmp.eq.s32.totalorder %v1795, %v1822
        %vm1828 = vcmp.eq.s32.totalorder %v1796, %v1822
        %vm1829 = vcmp.eq.s32.totalorder %v1797, %v1822
        %vm1830 = vcmp.eq.s32.totalorder %v1798, %v1822
        %vm1831 = vcmp.eq.s32.totalorder %v1799, %v1822
        %vm1832 = vcmp.eq.s32.totalorder %v1800, %v1822
        %vm1833 = vcmp.eq.s32.totalorder %v1801, %v1822
        %vm1834 = vcmp.eq.s32.totalorder %v1802, %v1822
        %vm1835 = vcmp.eq.s32.totalorder %v1803, %v1822
        %vm1836 = vcmp.eq.s32.totalorder %v1804, %v1822
        %vm1837 = vcmp.eq.s32.totalorder %v1805, %v1822
        %vm1838 = vcmp.eq.s32.totalorder %v1806, %v1822
        %vm1839 = vcmp.eq.s32.totalorder %v1807, %v1822
        %vm1840 = vcmp.eq.s32.totalorder %v1808, %v1822
        %vm1841 = vcmp.eq.s32.totalorder %v1809, %v1822
        %vm1842 = vcmp.eq.s32.totalorder %v1810, %v1822
        %vm1843 = vcmp.eq.s32.totalorder %v1811, %v1822
        %vm1844 = vcmp.eq.s32.totalorder %v1812, %v1822
        %vm1845 = vcmp.eq.s32.totalorder %v1813, %v1822
        %vm1846 = vcmp.eq.s32.totalorder %v1814, %v1822
        %vm1847 = vcmp.eq.s32.totalorder %v1815, %v1822
        %vm1848 = vcmp.eq.s32.totalorder %v1816, %v1822
        %vm1849 = vcmp.eq.s32.totalorder %v1817, %v1822
        %vm1850 = vcmp.eq.s32.totalorder %v1818, %v1822
        %vm1851 = vcmp.eq.s32.totalorder %v1819, %v1822
        %v1852 = vsel %vm1823, 1, 0
        %v1853 = vsel %vm1824, 1, 0
        %v1854 = vsel %vm1825, 1, 0
        %v1855 = vsel %vm1826, 1, 0
        %v1856 = vsel %vm1827, 1, 0
        %v1857 = vsel %vm1828, 1, 0
        %v1858 = vsel %vm1829, 1, 0
        %v1859 = vsel %vm1830, 1, 0
        %v1860 = vsel %vm1831, 1, 0
        %v1861 = vsel %vm1832, 1, 0
        %v1862 = vsel %vm1833, 1, 0
        %v1863 = vsel %vm1834, 1, 0
        %v1864 = vsel %vm1835, 1, 0
        %v1865 = vsel %vm1836, 1, 0
        %v1866 = vsel %vm1837, 1, 0
        %v1867 = vsel %vm1838, 1, 0
        %v1868 = vsel %vm1839, 1, 0
        %v1869 = vsel %vm1840, 1, 0
        %v1870 = vsel %vm1841, 1, 0
        %v1871 = vsel %vm1842, 1, 0
        %v1872 = vsel %vm1843, 1, 0
        %v1873 = vsel %vm1844, 1, 0
        %v1874 = vsel %vm1845, 1, 0
        %v1875 = vsel %vm1846, 1, 0
        %v1876 = vsel %vm1847, 1, 0
        %v1877 = vsel %vm1848, 1, 0
        %v1878 = vsel %vm1849, 1, 0
        %v1879 = vsel %vm1850, 1, 0
        %v1880 = vsel %vm1851, 1, 0
        %v1881 = vcvt.s32.f32 %v1852
        %v1882 = vcvt.s32.f32 %v1853
        %v1883 = vcvt.s32.f32 %v1854
        %v1884 = vcvt.s32.f32 %v1855
        %v1885 = vcvt.s32.f32 %v1856
        %v1886 = vcvt.s32.f32 %v1857
        %v1887 = vcvt.s32.f32 %v1858
        %v1888 = vcvt.s32.f32 %v1859
        %v1889 = vcvt.s32.f32 %v1860
        %v1890 = vcvt.s32.f32 %v1861
        %v1891 = vcvt.s32.f32 %v1862
        %v1892 = vcvt.s32.f32 %v1863
        %v1893 = vcvt.s32.f32 %v1864
        %v1894 = vcvt.s32.f32 %v1865
        %v1895 = vcvt.s32.f32 %v1866
        %v1896 = vcvt.s32.f32 %v1867
        %v1897 = vcvt.s32.f32 %v1868
        %v1898 = vcvt.s32.f32 %v1869
        %v1899 = vcvt.s32.f32 %v1870
        %v1900 = vcvt.s32.f32 %v1871
        %v1901 = vcvt.s32.f32 %v1872
        %v1902 = vcvt.s32.f32 %v1873
        %v1903 = vcvt.s32.f32 %v1874
        %v1904 = vcvt.s32.f32 %v1875
        %v1905 = vcvt.s32.f32 %v1876
        %v1906 = vcvt.s32.f32 %v1877
        %v1907 = vcvt.s32.f32 %v1878
        %v1908 = vcvt.s32.f32 %v1879
        %v1909 = vcvt.s32.f32 %v1880
        %v1910 = vadd.s32 %v1822, 1
        %vm1911 = vcmp.eq.s32.totalorder %v1791, %v1910
        %vm1912 = vcmp.eq.s32.totalorder %v1792, %v1910
        %vm1913 = vcmp.eq.s32.totalorder %v1793, %v1910
        %vm1914 = vcmp.eq.s32.totalorder %v1794, %v1910
        %vm1915 = vcmp.eq.s32.totalorder %v1795, %v1910
        %vm1916 = vcmp.eq.s32.totalorder %v1796, %v1910
        %vm1917 = vcmp.eq.s32.totalorder %v1797, %v1910
        %vm1918 = vcmp.eq.s32.totalorder %v1798, %v1910
        %vm1919 = vcmp.eq.s32.totalorder %v1799, %v1910
        %vm1920 = vcmp.eq.s32.totalorder %v1800, %v1910
        %vm1921 = vcmp.eq.s32.totalorder %v1801, %v1910
        %vm1922 = vcmp.eq.s32.totalorder %v1802, %v1910
        %vm1923 = vcmp.eq.s32.totalorder %v1803, %v1910
        %vm1924 = vcmp.eq.s32.totalorder %v1804, %v1910
        %vm1925 = vcmp.eq.s32.totalorder %v1805, %v1910
        %vm1926 = vcmp.eq.s32.totalorder %v1806, %v1910
        %vm1927 = vcmp.eq.s32.totalorder %v1807, %v1910
        %vm1928 = vcmp.eq.s32.totalorder %v1808, %v1910
        %vm1929 = vcmp.eq.s32.totalorder %v1809, %v1910
        %vm1930 = vcmp.eq.s32.totalorder %v1810, %v1910
        %vm1931 = vcmp.eq.s32.totalorder %v1811, %v1910
        %vm1932 = vcmp.eq.s32.totalorder %v1812, %v1910
        %vm1933 = vcmp.eq.s32.totalorder %v1813, %v1910
        %vm1934 = vcmp.eq.s32.totalorder %v1814, %v1910
        %vm1935 = vcmp.eq.s32.totalorder %v1815, %v1910
        %vm1936 = vcmp.eq.s32.totalorder %v1816, %v1910
        %vm1937 = vcmp.eq.s32.totalorder %v1817, %v1910
        %vm1938 = vcmp.eq.s32.totalorder %v1818, %v1910
        %vm1939 = vcmp.eq.s32.totalorder %v1819, %v1910
        %v1940 = vsel %vm1911, 1, 0
        %v1941 = vsel %vm1912, 1, 0
        %v1942 = vsel %vm1913, 1, 0
        %v1943 = vsel %vm1914, 1, 0
        %v1944 = vsel %vm1915, 1, 0
        %v1945 = vsel %vm1916, 1, 0
        %v1946 = vsel %vm1917, 1, 0
        %v1947 = vsel %vm1918, 1, 0
        %v1948 = vsel %vm1919, 1, 0
        %v1949 = vsel %vm1920, 1, 0
        %v1950 = vsel %vm1921, 1, 0
        %v1951 = vsel %vm1922, 1, 0
        %v1952 = vsel %vm1923, 1, 0
        %v1953 = vsel %vm1924, 1, 0
        %v1954 = vsel %vm1925, 1, 0
        %v1955 = vsel %vm1926, 1, 0
        %v1956 = vsel %vm1927, 1, 0
        %v1957 = vsel %vm1928, 1, 0
        %v1958 = vsel %vm1929, 1, 0
        %v1959 = vsel %vm1930, 1, 0
        %v1960 = vsel %vm1931, 1, 0
        %v1961 = vsel %vm1932, 1, 0
        %v1962 = vsel %vm1933, 1, 0
        %v1963 = vsel %vm1934, 1, 0
        %v1964 = vsel %vm1935, 1, 0
        %v1965 = vsel %vm1936, 1, 0
        %v1966 = vsel %vm1937, 1, 0
        %v1967 = vsel %vm1938, 1, 0
        %v1968 = vsel %vm1939, 1, 0
        %v1969 = vcvt.s32.f32 %v1940
        %v1970 = vcvt.s32.f32 %v1941
        %v1971 = vcvt.s32.f32 %v1942
        %v1972 = vcvt.s32.f32 %v1943
        %v1973 = vcvt.s32.f32 %v1944
        %v1974 = vcvt.s32.f32 %v1945
        %v1975 = vcvt.s32.f32 %v1946
        %v1976 = vcvt.s32.f32 %v1947
        %v1977 = vcvt.s32.f32 %v1948
        %v1978 = vcvt.s32.f32 %v1949
        %v1979 = vcvt.s32.f32 %v1950
        %v1980 = vcvt.s32.f32 %v1951
        %v1981 = vcvt.s32.f32 %v1952
        %v1982 = vcvt.s32.f32 %v1953
        %v1983 = vcvt.s32.f32 %v1954
        %v1984 = vcvt.s32.f32 %v1955
        %v1985 = vcvt.s32.f32 %v1956
        %v1986 = vcvt.s32.f32 %v1957
        %v1987 = vcvt.s32.f32 %v1958
        %v1988 = vcvt.s32.f32 %v1959
        %v1989 = vcvt.s32.f32 %v1960
        %v1990 = vcvt.s32.f32 %v1961
        %v1991 = vcvt.s32.f32 %v1962
        %v1992 = vcvt.s32.f32 %v1963
        %v1993 = vcvt.s32.f32 %v1964
        %v1994 = vcvt.s32.f32 %v1965
        %v1995 = vcvt.s32.f32 %v1966
        %v1996 = vcvt.s32.f32 %v1967
        %v1997 = vcvt.s32.f32 %v1968
        %vm1998 = vcmask 850944
        %v2000 = vsel %vm1998, %v1783, 0
        %v2003 = vsel %vm1998, %v1785, 0
        %v2006 = vsel %vm1998, %v1787, 0
        %v2009 = vsel %vm1998, %v1789, 0
        %2011 = vmatpush.msra.mxu0 %v1896
        %2012 = vmatpush.msra.mxu0 %v1895
        %2013 = vmatpush.msra.mxu0 %v1894
        %2014 = vmatpush.msra.mxu0 %v1893
        %2015 = vmatpush.msra.mxu0 %v1892
        %2016 = vmatpush.msra.mxu0 %v1891
        %2017 = vmatpush.msra.mxu0 %v1890
        %2018 = vmatpush.msra.mxu0 %v1889
        %2019 = vmatpush.msra.mxu0 %v1888
        %2020 = vmatpush.msra.mxu0 %v1887
        %2021 = vmatpush.msra.mxu0 %v1886
        %2022 = vmatpush.msra.mxu0 %v1885
        %2023 = vmatpush.msra.mxu0 %v1884
        %2024 = vmatpush.msra.mxu0 %v1883
        %2025 = vmatpush.msra.mxu0 %v1882
        %2026 = vmatpush.msra.mxu0 %v1881
        %2027 = vmatmul.f32.gmra.mxu0 %v1782
        %v2028 = vpop.f32.mrf.mxu0
        %v2029 = vadd.f32 0.0, %v2028
        %2030 = vmatmul.f32.gmra.mxu0 %v1784
        %v2031 = vpop.f32.mrf.mxu0
        %v2032 = vadd.f32 0.0, %v2031
        %2033 = vmatmul.f32.gmra.mxu0 %v1786
        %v2034 = vpop.f32.mrf.mxu0
        %v2035 = vadd.f32 0.0, %v2034
        %2036 = vmatmul.f32.gmra.mxu0 %v1788
        %v2037 = vpop.f32.mrf.mxu0
        %v2038 = vadd.f32 0.0, %v2037
        %2039 = vdwg.mxu0
        %2040 = vmatpush.msra.mxu0 0.0
        %2041 = vmatpush.msra.mxu0 0.0
        %2042 = vmatpush.msra.mxu0 0.0
        %2043 = vmatpush.msra.mxu0 %v1909
        %2044 = vmatpush.msra.mxu0 %v1908
        %2045 = vmatpush.msra.mxu0 %v1907
        %2046 = vmatpush.msra.mxu0 %v1906
        %2047 = vmatpush.msra.mxu0 %v1905
        %2048 = vmatpush.msra.mxu0 %v1904
        %2049 = vmatpush.msra.mxu0 %v1903
        %2050 = vmatpush.msra.mxu0 %v1902
        %2051 = vmatpush.msra.mxu0 %v1901
        %2052 = vmatpush.msra.mxu0 %v1900
        %2053 = vmatpush.msra.mxu0 %v1899
        %2054 = vmatpush.msra.mxu0 %v1898
        %2055 = vmatpush.msra.mxu0 %v1897
        %2056 = vmatmul.f32.gmra.mxu0 %v2000
        %v2057 = vpop.f32.mrf.mxu0
        %v2058 = vadd.f32 %v2029, %v2057
        %2059 = vmatmul.f32.gmra.mxu0 %v2003
        %v2060 = vpop.f32.mrf.mxu0
        %v2061 = vadd.f32 %v2032, %v2060
        %2062 = vmatmul.f32.gmra.mxu0 %v2006
        %v2063 = vpop.f32.mrf.mxu0
        %v2064 = vadd.f32 %v2035, %v2063
        %2065 = vmatmul.f32.gmra.mxu0 %v2009
        %v2066 = vpop.f32.mrf.mxu0
        %v2067 = vadd.f32 %v2038, %v2066
        %2068 = vdwg.mxu0
        %2069 = vmatpush.msra.mxu0 %v1984
        %2070 = vmatpush.msra.mxu0 %v1983
        %2071 = vmatpush.msra.mxu0 %v1982
        %2072 = vmatpush.msra.mxu0 %v1981
        %2073 = vmatpush.msra.mxu0 %v1980
        %2074 = vmatpush.msra.mxu0 %v1979
        %2075 = vmatpush.msra.mxu0 %v1978
        %2076 = vmatpush.msra.mxu0 %v1977
        %2077 = vmatpush.msra.mxu0 %v1976
        %2078 = vmatpush.msra.mxu0 %v1975
        %2079 = vmatpush.msra.mxu0 %v1974
        %2080 = vmatpush.msra.mxu0 %v1973
        %2081 = vmatpush.msra.mxu0 %v1972
        %2082 = vmatpush.msra.mxu0 %v1971
        %2083 = vmatpush.msra.mxu0 %v1970
        %2084 = vmatpush.msra.mxu0 %v1969
        %2085 = vmatmul.f32.gmra.mxu0 %v1782
        %v2086 = vpop.f32.mrf.mxu0
        %v2087 = vadd.f32 0.0, %v2086
        %2088 = vmatmul.f32.gmra.mxu0 %v1784
        %v2089 = vpop.f32.mrf.mxu0
        %v2090 = vadd.f32 0.0, %v2089
        %2091 = vmatmul.f32.gmra.mxu0 %v1786
        %v2092 = vpop.f32.mrf.mxu0
        %v2093 = vadd.f32 0.0, %v2092
        %2094 = vmatmul.f32.gmra.mxu0 %v1788
        %v2095 = vpop.f32.mrf.mxu0
        %v2096 = vadd.f32 0.0, %v2095
        %2097 = vdwg.mxu0
        %2098 = vmatpush.msra.mxu0 0.0
        %2099 = vmatpush.msra.mxu0 0.0
        %2100 = vmatpush.msra.mxu0 0.0
        %2101 = vmatpush.msra.mxu0 %v1997
        %2102 = vmatpush.msra.mxu0 %v1996
        %2103 = vmatpush.msra.mxu0 %v1995
        %2104 = vmatpush.msra.mxu0 %v1994
        %2105 = vmatpush.msra.mxu0 %v1993
        %2106 = vmatpush.msra.mxu0 %v1992
        %2107 = vmatpush.msra.mxu0 %v1991
        %2108 = vmatpush.msra.mxu0 %v1990
        %2109 = vmatpush.msra.mxu0 %v1989
        %2110 = vmatpush.msra.mxu0 %v1988
        %2111 = vmatpush.msra.mxu0 %v1987
        %2112 = vmatpush.msra.mxu0 %v1986
        %2113 = vmatpush.msra.mxu0 %v1985
        %2114 = vmatmul.f32.gmra.mxu0 %v2000
        %v2115 = vpop.f32.mrf.mxu0
        %v2116 = vadd.f32 %v2087, %v2115
        %2117 = vmatmul.f32.gmra.mxu0 %v2003
        %v2118 = vpop.f32.mrf.mxu0
        %v2119 = vadd.f32 %v2090, %v2118
        %2120 = vmatmul.f32.gmra.mxu0 %v2006
        %v2121 = vpop.f32.mrf.mxu0
        %v2122 = vadd.f32 %v2093, %v2121
        %2123 = vmatmul.f32.gmra.mxu0 %v2009
        %v2124 = vpop.f32.mrf.mxu0
        %v2125 = vadd.f32 %v2096, %v2124
        %2126 = vdwg.mxu0
        %v2127 = vmax.f32 %v2058, %v2116
        %v2128 = vmax.f32 %v2061, %v2119
        %v2129 = vmax.f32 %v2064, %v2122
        %v2130 = vmax.f32 %v2067, %v2125
        %2135 = vrot.lane.b32.xlu0 %v2127, 127
        %v2136 = vpop.permute.xlu0 %2135
        %2137 = vrot.lane.b32.xlu0 %v2128, 127
        %v2138 = vpop.permute.xlu0 %2137
        %2139 = vrot.lane.b32.xlu0 %v2129, 127
        %v2140 = vpop.permute.xlu0 %2139
        %2141 = vrot.lane.b32.xlu0 %v2130, 127
        %v2142 = vpop.permute.xlu0 %2141
        %2147 = vrot.lane.b32.xlu0 %v2127, 126
        %v2148 = vpop.permute.xlu0 %2147
        %2149 = vrot.lane.b32.xlu0 %v2128, 126
        %v2150 = vpop.permute.xlu0 %2149
        %2151 = vrot.lane.b32.xlu0 %v2129, 126
        %v2152 = vpop.permute.xlu0 %2151
        %2153 = vrot.lane.b32.xlu0 %v2130, 126
        %v2154 = vpop.permute.xlu0 %2153
        %2159 = vrot.lane.b32.xlu0 %v2127, 125
        %v2160 = vpop.permute.xlu0 %2159
        %2161 = vrot.lane.b32.xlu0 %v2128, 125
        %v2162 = vpop.permute.xlu0 %2161
        %2163 = vrot.lane.b32.xlu0 %v2129, 125
        %v2164 = vpop.permute.xlu0 %2163
        %2165 = vrot.lane.b32.xlu0 %v2130, 125
        %v2166 = vpop.permute.xlu0 %2165
        %2171 = vrot.lane.b32.xlu0 %v2127, 124
        %v2172 = vpop.permute.xlu0 %2171
        %2173 = vrot.lane.b32.xlu0 %v2128, 124
        %v2174 = vpop.permute.xlu0 %2173
        %2175 = vrot.lane.b32.xlu0 %v2129, 124
        %v2176 = vpop.permute.xlu0 %2175
        %2177 = vrot.lane.b32.xlu0 %v2130, 124
        %v2178 = vpop.permute.xlu0 %2177
        %2183 = vrot.lane.b32.xlu0 %v2127, 123
        %v2184 = vpop.permute.xlu0 %2183
        %2185 = vrot.lane.b32.xlu0 %v2128, 123
        %v2186 = vpop.permute.xlu0 %2185
        %2187 = vrot.lane.b32.xlu0 %v2129, 123
        %v2188 = vpop.permute.xlu0 %2187
        %2189 = vrot.lane.b32.xlu0 %v2130, 123
        %v2190 = vpop.permute.xlu0 %2189
        %2195 = vrot.lane.b32.xlu0 %v2127, 122
        %v2196 = vpop.permute.xlu0 %2195
        %2197 = vrot.lane.b32.xlu0 %v2128, 122
        %v2198 = vpop.permute.xlu0 %2197
        %2199 = vrot.lane.b32.xlu0 %v2129, 122
        %v2200 = vpop.permute.xlu0 %2199
        %2201 = vrot.lane.b32.xlu0 %v2130, 122
        %v2202 = vpop.permute.xlu0 %2201
        %2207 = vrot.lane.b32.xlu0 %v2127, 121
        %v2208 = vpop.permute.xlu0 %2207
        %2209 = vrot.lane.b32.xlu0 %v2128, 121
        %v2210 = vpop.permute.xlu0 %2209
        %2211 = vrot.lane.b32.xlu0 %v2129, 121
        %v2212 = vpop.permute.xlu0 %2211
        %2213 = vrot.lane.b32.xlu0 %v2130, 121
        %v2214 = vpop.permute.xlu0 %2213
        %2219 = vrot.lane.b32.xlu0 %v2127, 120
        %v2220 = vpop.permute.xlu0 %2219
        %2221 = vrot.lane.b32.xlu0 %v2128, 120
        %v2222 = vpop.permute.xlu0 %2221
        %2223 = vrot.lane.b32.xlu0 %v2129, 120
        %v2224 = vpop.permute.xlu0 %2223
        %2225 = vrot.lane.b32.xlu0 %v2130, 120
        %v2226 = vpop.permute.xlu0 %2225
        %v2231 = vld [vmem:[#allocation2] sm:$0xff]
        %v2232 = vld [vmem:[#allocation2 + $0x8] sm:$0xff]
        %v2233 = vld [vmem:[#allocation2 + $0x10] sm:$0xff]
        %v2234 = vld [vmem:[#allocation2 + $0x18] sm:$0xff]
        %v2235 = vld [vmem:[#allocation2 + $0x20] sm:$0xff]
        %v2236 = vld [vmem:[#allocation2 + $0x28] sm:$0xff]
        %v2237 = vld [vmem:[#allocation2 + $0x30] sm:$0xff]
        %v2238 = vld [vmem:[#allocation2 + $0x38] sm:$0xff]
        %v2239 = vld [vmem:[#allocation2 + $0x40] sm:$0xff]
        %v2240 = vld [vmem:[#allocation2 + $0x48] sm:$0xff]
        %v2241 = vld [vmem:[#allocation2 + $0x50] sm:$0xff]
        %v2242 = vld [vmem:[#allocation2 + $0x58] sm:$0xff]
        %v2243 = vld [vmem:[#allocation2 + $0x60] sm:$0xff]
        %v2244 = vld [vmem:[#allocation2 + $0x68] sm:$0xff]
        %v2245 = vld [vmem:[#allocation2 + $0x70] sm:$0xff]
        %v2246 = vld [vmem:[#allocation2 + $0x78] sm:$0xff]
        %v2247 = vld [vmem:[#allocation2 + $0x80] sm:$0xff]
        %v2248 = vld [vmem:[#allocation2 + $0x88] sm:$0xff]
        %v2249 = vld [vmem:[#allocation2 + $0x90] sm:$0xff]
        %v2250 = vld [vmem:[#allocation2 + $0x98] sm:$0xff]
        %v2251 = vld [vmem:[#allocation2 + $0xa0] sm:$0xff]
        %v2252 = vld [vmem:[#allocation2 + $0xa8] sm:$0xff]
        %v2253 = vld [vmem:[#allocation2 + $0xb0] sm:$0xff]
        %v2254 = vld [vmem:[#allocation2 + $0xb8] sm:$0xff]
        %v2256 = vsel %vm1531, %v2233, 0
        %v2259 = vsel %vm1531, %v2236, 0
        %v2262 = vsel %vm1531, %v2239, 0
        %v2265 = vsel %vm1531, %v2242, 0
        %v2268 = vsel %vm1531, %v2245, 0
        %v2271 = vsel %vm1531, %v2248, 0
        %v2274 = vsel %vm1531, %v2251, 0
        %v2277 = vsel %vm1531, %v2254, 0
        %2279 = vmatpush.msra.mxu0 %v2166
        %2280 = vmatpush.msra.mxu0 %v2164
        %2281 = vmatpush.msra.mxu0 %v2162
        %2282 = vmatpush.msra.mxu0 %v2160
        %2283 = vmatpush.msra.mxu0 %v2154
        %2284 = vmatpush.msra.mxu0 %v2152
        %2285 = vmatpush.msra.mxu0 %v2150
        %2286 = vmatpush.msra.mxu0 %v2148
        %2287 = vmatpush.msra.mxu0 %v2142
        %2288 = vmatpush.msra.mxu0 %v2140
        %2289 = vmatpush.msra.mxu0 %v2138
        %2290 = vmatpush.msra.mxu0 %v2136
        %2291 = vmatpush.msra.mxu0 %v2130
        %2292 = vmatpush.msra.mxu0 %v2129
        %2293 = vmatpush.msra.mxu0 %v2128
        %2294 = vmatpush.msra.mxu0 %v2127
        %2295 = vmatmul.f32.gmra.mxu0 %v2231
        %v2296 = vpop.f32.mrf.mxu0
        %v2297 = vadd.f32 0.0, %v2296
        %2298 = vmatmul.f32.gmra.mxu0 %v2234
        %v2299 = vpop.f32.mrf.mxu0
        %v2300 = vadd.f32 0.0, %v2299
        %2301 = vmatmul.f32.gmra.mxu0 %v2237
        %v2302 = vpop.f32.mrf.mxu0
        %v2303 = vadd.f32 0.0, %v2302
        %2304 = vmatmul.f32.gmra.mxu0 %v2240
        %v2305 = vpop.f32.mrf.mxu0
        %v2306 = vadd.f32 0.0, %v2305
        %2307 = vmatmul.f32.gmra.mxu0 %v2243
        %v2308 = vpop.f32.mrf.mxu0
        %v2309 = vadd.f32 0.0, %v2308
        %2310 = vmatmul.f32.gmra.mxu0 %v2246
        %v2311 = vpop.f32.mrf.mxu0
        %v2312 = vadd.f32 0.0, %v2311
        %2313 = vmatmul.f32.gmra.mxu0 %v2249
        %v2314 = vpop.f32.mrf.mxu0
        %v2315 = vadd.f32 0.0, %v2314
        %2316 = vmatmul.f32.gmra.mxu0 %v2252
        %v2317 = vpop.f32.mrf.mxu0
        %v2318 = vadd.f32 0.0, %v2317
        %2319 = vdwg.mxu0
        %2320 = vmatpush.msra.mxu0 %v2214
        %2321 = vmatpush.msra.mxu0 %v2212
        %2322 = vmatpush.msra.mxu0 %v2210
        %2323 = vmatpush.msra.mxu0 %v2208
        %2324 = vmatpush.msra.mxu0 %v2202
        %2325 = vmatpush.msra.mxu0 %v2200
        %2326 = vmatpush.msra.mxu0 %v2198
        %2327 = vmatpush.msra.mxu0 %v2196
        %2328 = vmatpush.msra.mxu0 %v2190
        %2329 = vmatpush.msra.mxu0 %v2188
        %2330 = vmatpush.msra.mxu0 %v2186
        %2331 = vmatpush.msra.mxu0 %v2184
        %2332 = vmatpush.msra.mxu0 %v2178
        %2333 = vmatpush.msra.mxu0 %v2176
        %2334 = vmatpush.msra.mxu0 %v2174
        %2335 = vmatpush.msra.mxu0 %v2172
        %2336 = vmatmul.f32.gmra.mxu0 %v2232
        %v2337 = vpop.f32.mrf.mxu0
        %v2338 = vadd.f32 %v2297, %v2337
        %2339 = vmatmul.f32.gmra.mxu0 %v2235
        %v2340 = vpop.f32.mrf.mxu0
        %v2341 = vadd.f32 %v2300, %v2340
        %2342 = vmatmul.f32.gmra.mxu0 %v2238
        %v2343 = vpop.f32.mrf.mxu0
        %v2344 = vadd.f32 %v2303, %v2343
        %2345 = vmatmul.f32.gmra.mxu0 %v2241
        %v2346 = vpop.f32.mrf.mxu0
        %v2347 = vadd.f32 %v2306, %v2346
        %2348 = vmatmul.f32.gmra.mxu0 %v2244
        %v2349 = vpop.f32.mrf.mxu0
        %v2350 = vadd.f32 %v2309, %v2349
        %2351 = vmatmul.f32.gmra.mxu0 %v2247
        %v2352 = vpop.f32.mrf.mxu0
        %v2353 = vadd.f32 %v2312, %v2352
        %2354 = vmatmul.f32.gmra.mxu0 %v2250
        %v2355 = vpop.f32.mrf.mxu0
        %v2356 = vadd.f32 %v2315, %v2355
        %2357 = vmatmul.f32.gmra.mxu0 %v2253
        %v2358 = vpop.f32.mrf.mxu0
        %v2359 = vadd.f32 %v2318, %v2358
        %2360 = vdwg.mxu0
        %2361 = vmatpush.msra.mxu0 0.0
        %2362 = vmatpush.msra.mxu0 0.0
        %2363 = vmatpush.msra.mxu0 0.0
        %2364 = vmatpush.msra.mxu0 0.0
        %2365 = vmatpush.msra.mxu0 0.0
        %2366 = vmatpush.msra.mxu0 0.0
        %2367 = vmatpush.msra.mxu0 0.0
        %2368 = vmatpush.msra.mxu0 0.0
        %2369 = vmatpush.msra.mxu0 0.0
        %2370 = vmatpush.msra.mxu0 0.0
        %2371 = vmatpush.msra.mxu0 0.0
        %2372 = vmatpush.msra.mxu0 0.0
        %2373 = vmatpush.msra.mxu0 %v2226
        %2374 = vmatpush.msra.mxu0 %v2224
        %2375 = vmatpush.msra.mxu0 %v2222
        %2376 = vmatpush.msra.mxu0 %v2220
        %2377 = vmatmul.f32.gmra.mxu0 %v2256
        %v2378 = vpop.f32.mrf.mxu0
        %v2379 = vadd.f32 %v2338, %v2378
        %2380 = vmatmul.f32.gmra.mxu0 %v2259
        %v2381 = vpop.f32.mrf.mxu0
        %v2382 = vadd.f32 %v2341, %v2381
        %2383 = vmatmul.f32.gmra.mxu0 %v2262
        %v2384 = vpop.f32.mrf.mxu0
        %v2385 = vadd.f32 %v2344, %v2384
        %2386 = vmatmul.f32.gmra.mxu0 %v2265
        %v2387 = vpop.f32.mrf.mxu0
        %v2388 = vadd.f32 %v2347, %v2387
        %2389 = vmatmul.f32.gmra.mxu0 %v2268
        %v2390 = vpop.f32.mrf.mxu0
        %v2391 = vadd.f32 %v2350, %v2390
        %2392 = vmatmul.f32.gmra.mxu0 %v2271
        %v2393 = vpop.f32.mrf.mxu0
        %v2394 = vadd.f32 %v2353, %v2393
        %2395 = vmatmul.f32.gmra.mxu0 %v2274
        %v2396 = vpop.f32.mrf.mxu0
        %v2397 = vadd.f32 %v2356, %v2396
        %2398 = vmatmul.f32.gmra.mxu0 %v2277
        %v2399 = vpop.f32.mrf.mxu0
        %v2400 = vadd.f32 %v2359, %v2399
        %2401 = vdwg.mxu0
        %v2402 = vld [vmem:[%s8] sm:$0xff]
        %v2403 = vld [vmem:[%s8 + $0x8] sm:$0xff]
        %v2404 = vld [vmem:[%s8 + $0x10] sm:$0xff]
        %v2405 = vld [vmem:[%s8 + $0x18] sm:$0xff]
        %v2406 = vld [vmem:[%s8 + $0x20] sm:$0xff]
        %v2407 = vld [vmem:[%s8 + $0x28] sm:$0xff]
        %v2408 = vld [vmem:[%s8 + $0x30] sm:$0xff]
        %v2409 = vld [vmem:[%s8 + $0x38] sm:$0xff]
        %2411 = vset.pattern.permute.xlu0 0
        %2412 = vperm.xlu0 %2411, %v2402
        %v2413 = vpop.permute.xlu0 %2412
        %2416 = vset.pattern.permute.xlu0 0
        %2417 = vperm.xlu0 %2416, %v2403
        %v2418 = vpop.permute.xlu0 %2417
        %2421 = vset.pattern.permute.xlu0 0
        %2422 = vperm.xlu0 %2421, %v2404
        %v2423 = vpop.permute.xlu0 %2422
        %2426 = vset.pattern.permute.xlu0 0
        %2427 = vperm.xlu0 %2426, %v2405
        %v2428 = vpop.permute.xlu0 %2427
        %2431 = vset.pattern.permute.xlu0 0
        %2432 = vperm.xlu0 %2431, %v2406
        %v2433 = vpop.permute.xlu0 %2432
        %2436 = vset.pattern.permute.xlu0 0
        %2437 = vperm.xlu0 %2436, %v2407
        %v2438 = vpop.permute.xlu0 %2437
        %2441 = vset.pattern.permute.xlu0 0
        %2442 = vperm.xlu0 %2441, %v2408
        %v2443 = vpop.permute.xlu0 %2442
        %2446 = vset.pattern.permute.xlu0 0
        %2447 = vperm.xlu0 %2446, %v2409
        %v2448 = vpop.permute.xlu0 %2447
        %v2450 = vmul.f32 %v2379, %v2413
        %v2451 = vmul.f32 %v2382, %v2418
        %v2452 = vmul.f32 %v2385, %v2423
        %v2453 = vmul.f32 %v2388, %v2428
        %v2454 = vmul.f32 %v2391, %v2433
        %v2455 = vmul.f32 %v2394, %v2438
        %v2456 = vmul.f32 %v2397, %v2443
        %v2457 = vmul.f32 %v2400, %v2448
        %v2458 = vld [vmem:[%s9] sm:$0xff]
        %v2459 = vld [vmem:[%s9 + $0x8] sm:$0xff]
        %v2460 = vld [vmem:[%s9 + $0x10] sm:$0xff]
        %v2461 = vld [vmem:[%s9 + $0x18] sm:$0xff]
        %v2462 = vld [vmem:[%s9 + $0x20] sm:$0xff]
        %v2463 = vld [vmem:[%s9 + $0x28] sm:$0xff]
        %v2464 = vld [vmem:[%s9 + $0x30] sm:$0xff]
        %v2465 = vld [vmem:[%s9 + $0x38] sm:$0xff]
        %2467 = vset.pattern.permute.xlu0 0
        %2468 = vperm.xlu0 %2467, %v2458
        %v2469 = vpop.permute.xlu0 %2468
        %2472 = vset.pattern.permute.xlu0 0
        %2473 = vperm.xlu0 %2472, %v2459
        %v2474 = vpop.permute.xlu0 %2473
        %2477 = vset.pattern.permute.xlu0 0
        %2478 = vperm.xlu0 %2477, %v2460
        %v2479 = vpop.permute.xlu0 %2478
        %2482 = vset.pattern.permute.xlu0 0
        %2483 = vperm.xlu0 %2482, %v2461
        %v2484 = vpop.permute.xlu0 %2483
        %2487 = vset.pattern.permute.xlu0 0
        %2488 = vperm.xlu0 %2487, %v2462
        %v2489 = vpop.permute.xlu0 %2488
        %2492 = vset.pattern.permute.xlu0 0
        %2493 = vperm.xlu0 %2492, %v2463
        %v2494 = vpop.permute.xlu0 %2493
        %2497 = vset.pattern.permute.xlu0 0
        %2498 = vperm.xlu0 %2497, %v2464
        %v2499 = vpop.permute.xlu0 %2498
        %2502 = vset.pattern.permute.xlu0 0
        %2503 = vperm.xlu0 %2502, %v2465
        %v2504 = vpop.permute.xlu0 %2503
        %v2506 = vadd.f32 %v2450, %v2469
        %v2507 = vadd.f32 %v2451, %v2474
        %v2508 = vadd.f32 %v2452, %v2479
        %v2509 = vadd.f32 %v2453, %v2484
        %v2510 = vadd.f32 %v2454, %v2489
        %v2511 = vadd.f32 %v2455, %v2494
        %v2512 = vadd.f32 %v2456, %v2499
        %v2513 = vadd.f32 %v2457, %v2504
        %v2514 = vmax.f32 %v2506, 0.0
        %v2515 = vmax.f32 %v2507, 0.0
        %v2516 = vmax.f32 %v2508, 0.0
        %v2517 = vmax.f32 %v2509, 0.0
        %v2518 = vmax.f32 %v2510, 0.0
        %v2519 = vmax.f32 %v2511, 0.0
        %v2520 = vmax.f32 %v2512, 0.0
        %v2521 = vmax.f32 %v2513, 0.0
        %2530 = vrot.lane.b32.xlu0 %v2514, 127
        %v2531 = vpop.permute.xlu0 %2530
        %2532 = vrot.lane.b32.xlu0 %v2515, 127
        %v2533 = vpop.permute.xlu0 %2532
        %2534 = vrot.lane.b32.xlu0 %v2516, 127
        %v2535 = vpop.permute.xlu0 %2534
        %2536 = vrot.lane.b32.xlu0 %v2517, 127
        %v2537 = vpop.permute.xlu0 %2536
        %2538 = vrot.lane.b32.xlu0 %v2518, 127
        %v2539 = vpop.permute.xlu0 %2538
        %2540 = vrot.lane.b32.xlu0 %v2519, 127
        %v2541 = vpop.permute.xlu0 %2540
        %2542 = vrot.lane.b32.xlu0 %v2520, 127
        %v2543 = vpop.permute.xlu0 %2542
        %2544 = vrot.lane.b32.xlu0 %v2521, 127
        %v2545 = vpop.permute.xlu0 %2544
        %2554 = vrot.lane.b32.xlu0 %v2514, 126
        %v2555 = vpop.permute.xlu0 %2554
        %2556 = vrot.lane.b32.xlu0 %v2515, 126
        %v2557 = vpop.permute.xlu0 %2556
        %2558 = vrot.lane.b32.xlu0 %v2516, 126
        %v2559 = vpop.permute.xlu0 %2558
        %2560 = vrot.lane.b32.xlu0 %v2517, 126
        %v2561 = vpop.permute.xlu0 %2560
        %2562 = vrot.lane.b32.xlu0 %v2518, 126
        %v2563 = vpop.permute.xlu0 %2562
        %2564 = vrot.lane.b32.xlu0 %v2519, 126
        %v2565 = vpop.permute.xlu0 %2564
        %2566 = vrot.lane.b32.xlu0 %v2520, 126
        %v2567 = vpop.permute.xlu0 %2566
        %2568 = vrot.lane.b32.xlu0 %v2521, 126
        %v2569 = vpop.permute.xlu0 %2568
        %2578 = vrot.lane.b32.xlu0 %v2514, 125
        %v2579 = vpop.permute.xlu0 %2578
        %2580 = vrot.lane.b32.xlu0 %v2515, 125
        %v2581 = vpop.permute.xlu0 %2580
        %2582 = vrot.lane.b32.xlu0 %v2516, 125
        %v2583 = vpop.permute.xlu0 %2582
        %2584 = vrot.lane.b32.xlu0 %v2517, 125
        %v2585 = vpop.permute.xlu0 %2584
        %2586 = vrot.lane.b32.xlu0 %v2518, 125
        %v2587 = vpop.permute.xlu0 %2586
        %2588 = vrot.lane.b32.xlu0 %v2519, 125
        %v2589 = vpop.permute.xlu0 %2588
        %2590 = vrot.lane.b32.xlu0 %v2520, 125
        %v2591 = vpop.permute.xlu0 %2590
        %2592 = vrot.lane.b32.xlu0 %v2521, 125
        %v2593 = vpop.permute.xlu0 %2592
        %2602 = vrot.lane.b32.xlu0 %v2514, 124
        %v2603 = vpop.permute.xlu0 %2602
        %2604 = vrot.lane.b32.xlu0 %v2515, 124
        %v2605 = vpop.permute.xlu0 %2604
        %2606 = vrot.lane.b32.xlu0 %v2516, 124
        %v2607 = vpop.permute.xlu0 %2606
        %2608 = vrot.lane.b32.xlu0 %v2517, 124
        %v2609 = vpop.permute.xlu0 %2608
        %2610 = vrot.lane.b32.xlu0 %v2518, 124
        %v2611 = vpop.permute.xlu0 %2610
        %2612 = vrot.lane.b32.xlu0 %v2519, 124
        %v2613 = vpop.permute.xlu0 %2612
        %2614 = vrot.lane.b32.xlu0 %v2520, 124
        %v2615 = vpop.permute.xlu0 %2614
        %2616 = vrot.lane.b32.xlu0 %v2521, 124
        %v2617 = vpop.permute.xlu0 %2616
        %2626 = vrot.lane.b32.xlu0 %v2514, 123
        %v2627 = vpop.permute.xlu0 %2626
        %2628 = vrot.lane.b32.xlu0 %v2515, 123
        %v2629 = vpop.permute.xlu0 %2628
        %2630 = vrot.lane.b32.xlu0 %v2516, 123
        %v2631 = vpop.permute.xlu0 %2630
        %2632 = vrot.lane.b32.xlu0 %v2517, 123
        %v2633 = vpop.permute.xlu0 %2632
        %2634 = vrot.lane.b32.xlu0 %v2518, 123
        %v2635 = vpop.permute.xlu0 %2634
        %2636 = vrot.lane.b32.xlu0 %v2519, 123
        %v2637 = vpop.permute.xlu0 %2636
        %2638 = vrot.lane.b32.xlu0 %v2520, 123
        %v2639 = vpop.permute.xlu0 %2638
        %2640 = vrot.lane.b32.xlu0 %v2521, 123
        %v2641 = vpop.permute.xlu0 %2640
        %2650 = vrot.lane.b32.xlu0 %v2514, 122
        %v2651 = vpop.permute.xlu0 %2650
        %2652 = vrot.lane.b32.xlu0 %v2515, 122
        %v2653 = vpop.permute.xlu0 %2652
        %2654 = vrot.lane.b32.xlu0 %v2516, 122
        %v2655 = vpop.permute.xlu0 %2654
        %2656 = vrot.lane.b32.xlu0 %v2517, 122
        %v2657 = vpop.permute.xlu0 %2656
        %2658 = vrot.lane.b32.xlu0 %v2518, 122
        %v2659 = vpop.permute.xlu0 %2658
        %2660 = vrot.lane.b32.xlu0 %v2519, 122
        %v2661 = vpop.permute.xlu0 %2660
        %2662 = vrot.lane.b32.xlu0 %v2520, 122
        %v2663 = vpop.permute.xlu0 %2662
        %2664 = vrot.lane.b32.xlu0 %v2521, 122
        %v2665 = vpop.permute.xlu0 %2664
        %2674 = vrot.lane.b32.xlu0 %v2514, 121
        %v2675 = vpop.permute.xlu0 %2674
        %2676 = vrot.lane.b32.xlu0 %v2515, 121
        %v2677 = vpop.permute.xlu0 %2676
        %2678 = vrot.lane.b32.xlu0 %v2516, 121
        %v2679 = vpop.permute.xlu0 %2678
        %2680 = vrot.lane.b32.xlu0 %v2517, 121
        %v2681 = vpop.permute.xlu0 %2680
        %2682 = vrot.lane.b32.xlu0 %v2518, 121
        %v2683 = vpop.permute.xlu0 %2682
        %2684 = vrot.lane.b32.xlu0 %v2519, 121
        %v2685 = vpop.permute.xlu0 %2684
        %2686 = vrot.lane.b32.xlu0 %v2520, 121
        %v2687 = vpop.permute.xlu0 %2686
        %2688 = vrot.lane.b32.xlu0 %v2521, 121
        %v2689 = vpop.permute.xlu0 %2688
        %2698 = vrot.lane.b32.xlu0 %v2514, 120
        %v2699 = vpop.permute.xlu0 %2698
        %2700 = vrot.lane.b32.xlu0 %v2515, 120
        %v2701 = vpop.permute.xlu0 %2700
        %2702 = vrot.lane.b32.xlu0 %v2516, 120
        %v2703 = vpop.permute.xlu0 %2702
        %2704 = vrot.lane.b32.xlu0 %v2517, 120
        %v2705 = vpop.permute.xlu0 %2704
        %2706 = vrot.lane.b32.xlu0 %v2518, 120
        %v2707 = vpop.permute.xlu0 %2706
        %2708 = vrot.lane.b32.xlu0 %v2519, 120
        %v2709 = vpop.permute.xlu0 %2708
        %2710 = vrot.lane.b32.xlu0 %v2520, 120
        %v2711 = vpop.permute.xlu0 %2710
        %2712 = vrot.lane.b32.xlu0 %v2521, 120
        %v2713 = vpop.permute.xlu0 %2712
        %v2722 = vld [vmem:[%s10] sm:$0xff]
        %v2723 = vld [vmem:[%s10 + $0x8] sm:$0xff]
        %v2724 = vld [vmem:[%s10 + $0x10] sm:$0xff]
        %v2725 = vld [vmem:[%s10 + $0x18] sm:$0xff]
        %v2726 = vld [vmem:[%s10 + $0x20] sm:$0xff]
        %v2727 = vld [vmem:[%s10 + $0x28] sm:$0xff]
        %v2728 = vld [vmem:[%s10 + $0x30] sm:$0xff]
        %v2729 = vld [vmem:[%s10 + $0x38] sm:$0xff]
        %v2730 = vld [vmem:[%s10 + $0x40] sm:$0xff]
        %v2731 = vld [vmem:[%s10 + $0x48] sm:$0xff]
        %v2732 = vld [vmem:[%s10 + $0x50] sm:$0xff]
        %v2733 = vld [vmem:[%s10 + $0x58] sm:$0xff]
        %v2734 = vld [vmem:[%s10 + $0x60] sm:$0xff]
        %v2735 = vld [vmem:[%s10 + $0x68] sm:$0xff]
        %v2736 = vld [vmem:[%s10 + $0x70] sm:$0xff]
        %v2737 = vld [vmem:[%s10 + $0x78] sm:$0xff]
        %v2738 = vld [vmem:[%s10 + $0x80] sm:$0xff]
        %v2739 = vld [vmem:[%s10 + $0x88] sm:$0xff]
        %v2740 = vld [vmem:[%s10 + $0x90] sm:$0xff]
        %v2741 = vld [vmem:[%s10 + $0x98] sm:$0xff]
        %v2742 = vld [vmem:[%s10 + $0xa0] sm:$0xff]
        %v2743 = vld [vmem:[%s10 + $0xa8] sm:$0xff]
        %v2744 = vld [vmem:[%s10 + $0xb0] sm:$0xff]
        %v2745 = vld [vmem:[%s10 + $0xb8] sm:$0xff]
        %v2746 = vld [vmem:[%s10 + $0xc0] sm:$0xff]
        %v2747 = vld [vmem:[%s10 + $0xc8] sm:$0xff]
        %v2748 = vld [vmem:[%s10 + $0xd0] sm:$0xff]
        %v2749 = vld [vmem:[%s10 + $0xd8] sm:$0xff]
        %v2750 = vld [vmem:[%s10 + $0xe0] sm:$0xff]
        %v2751 = vld [vmem:[%s10 + $0xe8] sm:$0xff]
        %v2752 = vld [vmem:[%s10 + $0xf0] sm:$0xff]
        %v2753 = vld [vmem:[%s10 + $0xf8] sm:$0xff]
        %v2754 = vld [vmem:[%s10 + $0x100] sm:$0xff]
        %v2755 = vld [vmem:[%s10 + $0x108] sm:$0xff]
        %v2756 = vld [vmem:[%s10 + $0x110] sm:$0xff]
        %v2757 = vld [vmem:[%s10 + $0x118] sm:$0xff]
        %v2758 = vld [vmem:[%s10 + $0x120] sm:$0xff]
        %v2759 = vld [vmem:[%s10 + $0x128] sm:$0xff]
        %v2760 = vld [vmem:[%s10 + $0x130] sm:$0xff]
        %v2761 = vld [vmem:[%s10 + $0x138] sm:$0xff]
        %vm2762 = vcmask 523264
        %v2764 = vsel %vm2762, %v2726, 0
        %v2767 = vsel %vm2762, %v2731, 0
        %v2770 = vsel %vm2762, %v2736, 0
        %v2773 = vsel %vm2762, %v2741, 0
        %v2776 = vsel %vm2762, %v2746, 0
        %v2779 = vsel %vm2762, %v2751, 0
        %v2782 = vsel %vm2762, %v2756, 0
        %v2785 = vsel %vm2762, %v2761, 0
        %2787 = vmatpush.msra.mxu0 %v2545
        %2788 = vmatpush.msra.mxu0 %v2543
        %2789 = vmatpush.msra.mxu0 %v2541
        %2790 = vmatpush.msra.mxu0 %v2539
        %2791 = vmatpush.msra.mxu0 %v2537
        %2792 = vmatpush.msra.mxu0 %v2535
        %2793 = vmatpush.msra.mxu0 %v2533
        %2794 = vmatpush.msra.mxu0 %v2531
        %2795 = vmatpush.msra.mxu0 %v2521
        %2796 = vmatpush.msra.mxu0 %v2520
        %2797 = vmatpush.msra.mxu0 %v2519
        %2798 = vmatpush.msra.mxu0 %v2518
        %2799 = vmatpush.msra.mxu0 %v2517
        %2800 = vmatpush.msra.mxu0 %v2516
        %2801 = vmatpush.msra.mxu0 %v2515
        %2802 = vmatpush.msra.mxu0 %v2514
        %2803 = vmatmul.f32.gmra.mxu0 %v2722
        %v2804 = vpop.f32.mrf.mxu0
        %v2805 = vadd.f32 0.0, %v2804
        %2806 = vmatmul.f32.gmra.mxu0 %v2727
        %v2807 = vpop.f32.mrf.mxu0
        %v2808 = vadd.f32 0.0, %v2807
        %2809 = vmatmul.f32.gmra.mxu0 %v2732
        %v2810 = vpop.f32.mrf.mxu0
        %v2811 = vadd.f32 0.0, %v2810
        %2812 = vmatmul.f32.gmra.mxu0 %v2737
        %v2813 = vpop.f32.mrf.mxu0
        %v2814 = vadd.f32 0.0, %v2813
        %2815 = vmatmul.f32.gmra.mxu0 %v2742
        %v2816 = vpop.f32.mrf.mxu0
        %v2817 = vadd.f32 0.0, %v2816
        %2818 = vmatmul.f32.gmra.mxu0 %v2747
        %v2819 = vpop.f32.mrf.mxu0
        %v2820 = vadd.f32 0.0, %v2819
        %2821 = vmatmul.f32.gmra.mxu0 %v2752
        %v2822 = vpop.f32.mrf.mxu0
        %v2823 = vadd.f32 0.0, %v2822
        %2824 = vmatmul.f32.gmra.mxu0 %v2757
        %v2825 = vpop.f32.mrf.mxu0
        %v2826 = vadd.f32 0.0, %v2825
        %2827 = vdwg.mxu0
        %2828 = vmatpush.msra.mxu0 %v2593
        %2829 = vmatpush.msra.mxu0 %v2591
        %2830 = vmatpush.msra.mxu0 %v2589
        %2831 = vmatpush.msra.mxu0 %v2587
        %2832 = vmatpush.msra.mxu0 %v2585
        %2833 = vmatpush.msra.mxu0 %v2583
        %2834 = vmatpush.msra.mxu0 %v2581
        %2835 = vmatpush.msra.mxu0 %v2579
        %2836 = vmatpush.msra.mxu0 %v2569
        %2837 = vmatpush.msra.mxu0 %v2567
        %2838 = vmatpush.msra.mxu0 %v2565
        %2839 = vmatpush.msra.mxu0 %v2563
        %2840 = vmatpush.msra.mxu0 %v2561
        %2841 = vmatpush.msra.mxu0 %v2559
        %2842 = vmatpush.msra.mxu0 %v2557
        %2843 = vmatpush.msra.mxu0 %v2555
        %2844 = vmatmul.f32.gmra.mxu0 %v2723
        %v2845 = vpop.f32.mrf.mxu0
        %v2846 = vadd.f32 %v2805, %v2845
        %2847 = vmatmul.f32.gmra.mxu0 %v2728
        %v2848 = vpop.f32.mrf.mxu0
        %v2849 = vadd.f32 %v2808, %v2848
        %2850 = vmatmul.f32.gmra.mxu0 %v2733
        %v2851 = vpop.f32.mrf.mxu0
        %v2852 = vadd.f32 %v2811, %v2851
        %2853 = vmatmul.f32.gmra.mxu0 %v2738
        %v2854 = vpop.f32.mrf.mxu0
        %v2855 = vadd.f32 %v2814, %v2854
        %2856 = vmatmul.f32.gmra.mxu0 %v2743
        %v2857 = vpop.f32.mrf.mxu0
        %v2858 = vadd.f32 %v2817, %v2857
        %2859 = vmatmul.f32.gmra.mxu0 %v2748
        %v2860 = vpop.f32.mrf.mxu0
        %v2861 = vadd.f32 %v2820, %v2860
        %2862 = vmatmul.f32.gmra.mxu0 %v2753
        %v2863 = vpop.f32.mrf.mxu0
        %v2864 = vadd.f32 %v2823, %v2863
        %2865 = vmatmul.f32.gmra.mxu0 %v2758
        %v2866 = vpop.f32.mrf.mxu0
        %v2867 = vadd.f32 %v2826, %v2866
        %2868 = vdwg.mxu0
        %2869 = vmatpush.msra.mxu0 %v2641
        %2870 = vmatpush.msra.mxu0 %v2639
        %2871 = vmatpush.msra.mxu0 %v2637
        %2872 = vmatpush.msra.mxu0 %v2635
        %2873 = vmatpush.msra.mxu0 %v2633
        %2874 = vmatpush.msra.mxu0 %v2631
        %2875 = vmatpush.msra.mxu0 %v2629
        %2876 = vmatpush.msra.mxu0 %v2627
        %2877 = vmatpush.msra.mxu0 %v2617
        %2878 = vmatpush.msra.mxu0 %v2615
        %2879 = vmatpush.msra.mxu0 %v2613
        %2880 = vmatpush.msra.mxu0 %v2611
        %2881 = vmatpush.msra.mxu0 %v2609
        %2882 = vmatpush.msra.mxu0 %v2607
        %2883 = vmatpush.msra.mxu0 %v2605
        %2884 = vmatpush.msra.mxu0 %v2603
        %2885 = vmatmul.f32.gmra.mxu0 %v2724
        %v2886 = vpop.f32.mrf.mxu0
        %v2887 = vadd.f32 %v2846, %v2886
        %2888 = vmatmul.f32.gmra.mxu0 %v2729
        %v2889 = vpop.f32.mrf.mxu0
        %v2890 = vadd.f32 %v2849, %v2889
        %2891 = vmatmul.f32.gmra.mxu0 %v2734
        %v2892 = vpop.f32.mrf.mxu0
        %v2893 = vadd.f32 %v2852, %v2892
        %2894 = vmatmul.f32.gmra.mxu0 %v2739
        %v2895 = vpop.f32.mrf.mxu0
        %v2896 = vadd.f32 %v2855, %v2895
        %2897 = vmatmul.f32.gmra.mxu0 %v2744
        %v2898 = vpop.f32.mrf.mxu0
        %v2899 = vadd.f32 %v2858, %v2898
        %2900 = vmatmul.f32.gmra.mxu0 %v2749
        %v2901 = vpop.f32.mrf.mxu0
        %v2902 = vadd.f32 %v2861, %v2901
        %2903 = vmatmul.f32.gmra.mxu0 %v2754
        %v2904 = vpop.f32.mrf.mxu0
        %v2905 = vadd.f32 %v2864, %v2904
        %2906 = vmatmul.f32.gmra.mxu0 %v2759
        %v2907 = vpop.f32.mrf.mxu0
        %v2908 = vadd.f32 %v2867, %v2907
        %2909 = vdwg.mxu0
        %2910 = vmatpush.msra.mxu0 %v2689
        %2911 = vmatpush.msra.mxu0 %v2687
        %2912 = vmatpush.msra.mxu0 %v2685
        %2913 = vmatpush.msra.mxu0 %v2683
        %2914 = vmatpush.msra.mxu0 %v2681
        %2915 = vmatpush.msra.mxu0 %v2679
        %2916 = vmatpush.msra.mxu0 %v2677
        %2917 = vmatpush.msra.mxu0 %v2675
        %2918 = vmatpush.msra.mxu0 %v2665
        %2919 = vmatpush.msra.mxu0 %v2663
        %2920 = vmatpush.msra.mxu0 %v2661
        %2921 = vmatpush.msra.mxu0 %v2659
        %2922 = vmatpush.msra.mxu0 %v2657
        %2923 = vmatpush.msra.mxu0 %v2655
        %2924 = vmatpush.msra.mxu0 %v2653
        %2925 = vmatpush.msra.mxu0 %v2651
        %2926 = vmatmul.f32.gmra.mxu0 %v2725
        %v2927 = vpop.f32.mrf.mxu0
        %v2928 = vadd.f32 %v2887, %v2927
        %2929 = vmatmul.f32.gmra.mxu0 %v2730
        %v2930 = vpop.f32.mrf.mxu0
        %v2931 = vadd.f32 %v2890, %v2930
        %2932 = vmatmul.f32.gmra.mxu0 %v2735
        %v2933 = vpop.f32.mrf.mxu0
        %v2934 = vadd.f32 %v2893, %v2933
        %2935 = vmatmul.f32.gmra.mxu0 %v2740
        %v2936 = vpop.f32.mrf.mxu0
        %v2937 = vadd.f32 %v2896, %v2936
        %2938 = vmatmul.f32.gmra.mxu0 %v2745
        %v2939 = vpop.f32.mrf.mxu0
        %v2940 = vadd.f32 %v2899, %v2939
        %2941 = vmatmul.f32.gmra.mxu0 %v2750
        %v2942 = vpop.f32.mrf.mxu0
        %v2943 = vadd.f32 %v2902, %v2942
        %2944 = vmatmul.f32.gmra.mxu0 %v2755
        %v2945 = vpop.f32.mrf.mxu0
        %v2946 = vadd.f32 %v2905, %v2945
        %2947 = vmatmul.f32.gmra.mxu0 %v2760
        %v2948 = vpop.f32.mrf.mxu0
        %v2949 = vadd.f32 %v2908, %v2948
        %2950 = vdwg.mxu0
        %2951 = vmatpush.msra.mxu0 0.0
        %2952 = vmatpush.msra.mxu0 0.0
        %2953 = vmatpush.msra.mxu0 0.0
        %2954 = vmatpush.msra.mxu0 0.0
        %2955 = vmatpush.msra.mxu0 0.0
        %2956 = vmatpush.msra.mxu0 0.0
        %2957 = vmatpush.msra.mxu0 0.0
        %2958 = vmatpush.msra.mxu0 0.0
        %2959 = vmatpush.msra.mxu0 %v2713
        %2960 = vmatpush.msra.mxu0 %v2711
        %2961 = vmatpush.msra.mxu0 %v2709
        %2962 = vmatpush.msra.mxu0 %v2707
        %2963 = vmatpush.msra.mxu0 %v2705
        %2964 = vmatpush.msra.mxu0 %v2703
        %2965 = vmatpush.msra.mxu0 %v2701
        %2966 = vmatpush.msra.mxu0 %v2699
        %2967 = vmatmul.f32.gmra.mxu0 %v2764
        %v2968 = vpop.f32.mrf.mxu0
        %v2969 = vadd.f32 %v2928, %v2968
        %2970 = vmatmul.f32.gmra.mxu0 %v2767
        %v2971 = vpop.f32.mrf.mxu0
        %v2972 = vadd.f32 %v2931, %v2971
        %2973 = vmatmul.f32.gmra.mxu0 %v2770
        %v2974 = vpop.f32.mrf.mxu0
        %v2975 = vadd.f32 %v2934, %v2974
        %2976 = vmatmul.f32.gmra.mxu0 %v2773
        %v2977 = vpop.f32.mrf.mxu0
        %v2978 = vadd.f32 %v2937, %v2977
        %2979 = vmatmul.f32.gmra.mxu0 %v2776
        %v2980 = vpop.f32.mrf.mxu0
        %v2981 = vadd.f32 %v2940, %v2980
        %2982 = vmatmul.f32.gmra.mxu0 %v2779
        %v2983 = vpop.f32.mrf.mxu0
        %v2984 = vadd.f32 %v2943, %v2983
        %2985 = vmatmul.f32.gmra.mxu0 %v2782
        %v2986 = vpop.f32.mrf.mxu0
        %v2987 = vadd.f32 %v2946, %v2986
        %2988 = vmatmul.f32.gmra.mxu0 %v2785
        %v2989 = vpop.f32.mrf.mxu0
        %v2990 = vadd.f32 %v2949, %v2989
        %2991 = vdwg.mxu0
        %v2992 = vld [vmem:[%s11] sm:$0xff]
        %v2993 = vld [vmem:[%s11 + $0x8] sm:$0xff]
        %v2994 = vld [vmem:[%s11 + $0x10] sm:$0xff]
        %v2995 = vld [vmem:[%s11 + $0x18] sm:$0xff]
        %v2996 = vld [vmem:[%s11 + $0x20] sm:$0xff]
        %v2997 = vld [vmem:[%s11 + $0x28] sm:$0xff]
        %v2998 = vld [vmem:[%s11 + $0x30] sm:$0xff]
        %v2999 = vld [vmem:[%s11 + $0x38] sm:$0xff]
        %3001 = vset.pattern.permute.xlu0 0
        %3002 = vperm.xlu0 %3001, %v2992
        %v3003 = vpop.permute.xlu0 %3002
        %3006 = vset.pattern.permute.xlu0 0
        %3007 = vperm.xlu0 %3006, %v2993
        %v3008 = vpop.permute.xlu0 %3007
        %3011 = vset.pattern.permute.xlu0 0
        %3012 = vperm.xlu0 %3011, %v2994
        %v3013 = vpop.permute.xlu0 %3012
        %3016 = vset.pattern.permute.xlu0 0
        %3017 = vperm.xlu0 %3016, %v2995
        %v3018 = vpop.permute.xlu0 %3017
        %3021 = vset.pattern.permute.xlu0 0
        %3022 = vperm.xlu0 %3021, %v2996
        %v3023 = vpop.permute.xlu0 %3022
        %3026 = vset.pattern.permute.xlu0 0
        %3027 = vperm.xlu0 %3026, %v2997
        %v3028 = vpop.permute.xlu0 %3027
        %3031 = vset.pattern.permute.xlu0 0
        %3032 = vperm.xlu0 %3031, %v2998
        %v3033 = vpop.permute.xlu0 %3032
        %3036 = vset.pattern.permute.xlu0 0
        %3037 = vperm.xlu0 %3036, %v2999
        %v3038 = vpop.permute.xlu0 %3037
        %v3040 = vmul.f32 %v2969, %v3003
        %v3041 = vmul.f32 %v2972, %v3008
        %v3042 = vmul.f32 %v2975, %v3013
        %v3043 = vmul.f32 %v2978, %v3018
        %v3044 = vmul.f32 %v2981, %v3023
        %v3045 = vmul.f32 %v2984, %v3028
        %v3046 = vmul.f32 %v2987, %v3033
        %v3047 = vmul.f32 %v2990, %v3038
        %v3048 = vld [vmem:[%s12] sm:$0xff]
        %v3049 = vld [vmem:[%s12 + $0x8] sm:$0xff]
        %v3050 = vld [vmem:[%s12 + $0x10] sm:$0xff]
        %v3051 = vld [vmem:[%s12 + $0x18] sm:$0xff]
        %v3052 = vld [vmem:[%s12 + $0x20] sm:$0xff]
        %v3053 = vld [vmem:[%s12 + $0x28] sm:$0xff]
        %v3054 = vld [vmem:[%s12 + $0x30] sm:$0xff]
        %v3055 = vld [vmem:[%s12 + $0x38] sm:$0xff]
        %3057 = vset.pattern.permute.xlu0 0
        %3058 = vperm.xlu0 %3057, %v3048
        %v3059 = vpop.permute.xlu0 %3058
        %3062 = vset.pattern.permute.xlu0 0
        %3063 = vperm.xlu0 %3062, %v3049
        %v3064 = vpop.permute.xlu0 %3063
        %3067 = vset.pattern.permute.xlu0 0
        %3068 = vperm.xlu0 %3067, %v3050
        %v3069 = vpop.permute.xlu0 %3068
        %3072 = vset.pattern.permute.xlu0 0
        %3073 = vperm.xlu0 %3072, %v3051
        %v3074 = vpop.permute.xlu0 %3073
        %3077 = vset.pattern.permute.xlu0 0
        %3078 = vperm.xlu0 %3077, %v3052
        %v3079 = vpop.permute.xlu0 %3078
        %3082 = vset.pattern.permute.xlu0 0
        %3083 = vperm.xlu0 %3082, %v3053
        %v3084 = vpop.permute.xlu0 %3083
        %3087 = vset.pattern.permute.xlu0 0
        %3088 = vperm.xlu0 %3087, %v3054
        %v3089 = vpop.permute.xlu0 %3088
        %3092 = vset.pattern.permute.xlu0 0
        %3093 = vperm.xlu0 %3092, %v3055
        %v3094 = vpop.permute.xlu0 %3093
        %v3096 = vadd.f32 %v3040, %v3059
        %v3097 = vadd.f32 %v3041, %v3064
        %v3098 = vadd.f32 %v3042, %v3069
        %v3099 = vadd.f32 %v3043, %v3074
        %v3100 = vadd.f32 %v3044, %v3079
        %v3101 = vadd.f32 %v3045, %v3084
        %v3102 = vadd.f32 %v3046, %v3089
        %v3103 = vadd.f32 %v3047, %v3094
        %v3104 = vmax.f32 %v3096, 0.0
        %v3105 = vmax.f32 %v3097, 0.0
        %v3106 = vmax.f32 %v3098, 0.0
        %v3107 = vmax.f32 %v3099, 0.0
        %v3108 = vmax.f32 %v3100, 0.0
        %v3109 = vmax.f32 %v3101, 0.0
        %v3110 = vmax.f32 %v3102, 0.0
        %v3111 = vmax.f32 %v3103, 0.0
        %vm3112 = vcmask 818176
        %v3114 = vsel %vm3112, %v3104, 0
        %v3117 = vsel %vm3112, %v3105, 0
        %v3120 = vsel %vm3112, %v3106, 0
        %v3123 = vsel %vm3112, %v3107, 0
        %v3126 = vsel %vm3112, %v3108, 0
        %v3129 = vsel %vm3112, %v3109, 0
        %v3132 = vsel %vm3112, %v3110, 0
        %v3135 = vsel %vm3112, %v3111, 0
        %vm3137 = vcmask 1043456
        %v3139 = vsel %vm3137, %v1893, 0
        %3141 = vmatpush.msra.mxu0 0.0
        %3142 = vmatpush.msra.mxu0 0.0
        %3143 = vmatpush.msra.mxu0 0.0
        %3144 = vmatpush.msra.mxu0 %v3139
        %3145 = vmatpush.msra.mxu0 %v1892
        %3146 = vmatpush.msra.mxu0 %v1891
        %3147 = vmatpush.msra.mxu0 %v1890
        %3148 = vmatpush.msra.mxu0 %v1889
        %3149 = vmatpush.msra.mxu0 %v1888
        %3150 = vmatpush.msra.mxu0 %v1887
        %3151 = vmatpush.msra.mxu0 %v1886
        %3152 = vmatpush.msra.mxu0 %v1885
        %3153 = vmatpush.msra.mxu0 %v1884
        %3154 = vmatpush.msra.mxu0 %v1883
        %3155 = vmatpush.msra.mxu0 %v1882
        %3156 = vmatpush.msra.mxu0 %v1881
        %3157 = vmatmul.f32.gmra.mxu0 %v3114
        %v3158 = vpop.f32.mrf.mxu0
        %v3159 = vadd.f32 0.0, %v3158
        %3160 = vmatmul.f32.gmra.mxu0 %v3117
        %v3161 = vpop.f32.mrf.mxu0
        %v3162 = vadd.f32 0.0, %v3161
        %3163 = vmatmul.f32.gmra.mxu0 %v3120
        %v3164 = vpop.f32.mrf.mxu0
        %v3165 = vadd.f32 0.0, %v3164
        %3166 = vmatmul.f32.gmra.mxu0 %v3123
        %v3167 = vpop.f32.mrf.mxu0
        %v3168 = vadd.f32 0.0, %v3167
        %3169 = vmatmul.f32.gmra.mxu0 %v3126
        %v3170 = vpop.f32.mrf.mxu0
        %v3171 = vadd.f32 0.0, %v3170
        %3172 = vmatmul.f32.gmra.mxu0 %v3129
        %v3173 = vpop.f32.mrf.mxu0
        %v3174 = vadd.f32 0.0, %v3173
        %3175 = vmatmul.f32.gmra.mxu0 %v3132
        %v3176 = vpop.f32.mrf.mxu0
        %v3177 = vadd.f32 0.0, %v3176
        %3178 = vmatmul.f32.gmra.mxu0 %v3135
        %v3179 = vpop.f32.mrf.mxu0
        %v3180 = vadd.f32 0.0, %v3179
        %3181 = vdwg.mxu0
        %v3183 = vsel %vm3137, %v1981, 0
        %3185 = vmatpush.msra.mxu0 0.0
        %3186 = vmatpush.msra.mxu0 0.0
        %3187 = vmatpush.msra.mxu0 0.0
        %3188 = vmatpush.msra.mxu0 %v3183
        %3189 = vmatpush.msra.mxu0 %v1980
        %3190 = vmatpush.msra.mxu0 %v1979
        %3191 = vmatpush.msra.mxu0 %v1978
        %3192 = vmatpush.msra.mxu0 %v1977
        %3193 = vmatpush.msra.mxu0 %v1976
        %3194 = vmatpush.msra.mxu0 %v1975
        %3195 = vmatpush.msra.mxu0 %v1974
        %3196 = vmatpush.msra.mxu0 %v1973
        %3197 = vmatpush.msra.mxu0 %v1972
        %3198 = vmatpush.msra.mxu0 %v1971
        %3199 = vmatpush.msra.mxu0 %v1970
        %3200 = vmatpush.msra.mxu0 %v1969
        %3201 = vmatmul.f32.gmra.mxu0 %v3114
        %v3202 = vpop.f32.mrf.mxu0
        %v3203 = vadd.f32 0.0, %v3202
        %3204 = vmatmul.f32.gmra.mxu0 %v3117
        %v3205 = vpop.f32.mrf.mxu0
        %v3206 = vadd.f32 0.0, %v3205
        %3207 = vmatmul.f32.gmra.mxu0 %v3120
        %v3208 = vpop.f32.mrf.mxu0
        %v3209 = vadd.f32 0.0, %v3208
        %3210 = vmatmul.f32.gmra.mxu0 %v3123
        %v3211 = vpop.f32.mrf.mxu0
        %v3212 = vadd.f32 0.0, %v3211
        %3213 = vmatmul.f32.gmra.mxu0 %v3126
        %v3214 = vpop.f32.mrf.mxu0
        %v3215 = vadd.f32 0.0, %v3214
        %3216 = vmatmul.f32.gmra.mxu0 %v3129
        %v3217 = vpop.f32.mrf.mxu0
        %v3218 = vadd.f32 0.0, %v3217
        %3219 = vmatmul.f32.gmra.mxu0 %v3132
        %v3220 = vpop.f32.mrf.mxu0
        %v3221 = vadd.f32 0.0, %v3220
        %3222 = vmatmul.f32.gmra.mxu0 %v3135
        %v3223 = vpop.f32.mrf.mxu0
        %v3224 = vadd.f32 0.0, %v3223
        %3225 = vdwg.mxu0
        %v3226 = vmax.f32 %v3159, %v3203
        %v3227 = vmax.f32 %v3162, %v3206
        %v3228 = vmax.f32 %v3165, %v3209
        %v3229 = vmax.f32 %v3168, %v3212
        %v3230 = vmax.f32 %v3171, %v3215
        %v3231 = vmax.f32 %v3174, %v3218
        %v3232 = vmax.f32 %v3177, %v3221
        %v3233 = vmax.f32 %v3180, %v3224
        %3242 = vrot.lane.b32.xlu0 %v3226, 127
        %v3243 = vpop.permute.xlu0 %3242
        %3244 = vrot.lane.b32.xlu0 %v3227, 127
        %v3245 = vpop.permute.xlu0 %3244
        %3246 = vrot.lane.b32.xlu0 %v3228, 127
        %v3247 = vpop.permute.xlu0 %3246
        %3248 = vrot.lane.b32.xlu0 %v3229, 127
        %v3249 = vpop.permute.xlu0 %3248
        %3250 = vrot.lane.b32.xlu0 %v3230, 127
        %v3251 = vpop.permute.xlu0 %3250
        %3252 = vrot.lane.b32.xlu0 %v3231, 127
        %v3253 = vpop.permute.xlu0 %3252
        %3254 = vrot.lane.b32.xlu0 %v3232, 127
        %v3255 = vpop.permute.xlu0 %3254
        %3256 = vrot.lane.b32.xlu0 %v3233, 127
        %v3257 = vpop.permute.xlu0 %3256
        %3266 = vrot.lane.b32.xlu0 %v3226, 126
        %v3267 = vpop.permute.xlu0 %3266
        %3268 = vrot.lane.b32.xlu0 %v3227, 126
        %v3269 = vpop.permute.xlu0 %3268
        %3270 = vrot.lane.b32.xlu0 %v3228, 126
        %v3271 = vpop.permute.xlu0 %3270
        %3272 = vrot.lane.b32.xlu0 %v3229, 126
        %v3273 = vpop.permute.xlu0 %3272
        %3274 = vrot.lane.b32.xlu0 %v3230, 126
        %v3275 = vpop.permute.xlu0 %3274
        %3276 = vrot.lane.b32.xlu0 %v3231, 126
        %v3277 = vpop.permute.xlu0 %3276
        %3278 = vrot.lane.b32.xlu0 %v3232, 126
        %v3279 = vpop.permute.xlu0 %3278
        %3280 = vrot.lane.b32.xlu0 %v3233, 126
        %v3281 = vpop.permute.xlu0 %3280
        %3290 = vrot.lane.b32.xlu0 %v3226, 125
        %v3291 = vpop.permute.xlu0 %3290
        %3292 = vrot.lane.b32.xlu0 %v3227, 125
        %v3293 = vpop.permute.xlu0 %3292
        %3294 = vrot.lane.b32.xlu0 %v3228, 125
        %v3295 = vpop.permute.xlu0 %3294
        %3296 = vrot.lane.b32.xlu0 %v3229, 125
        %v3297 = vpop.permute.xlu0 %3296
        %3298 = vrot.lane.b32.xlu0 %v3230, 125
        %v3299 = vpop.permute.xlu0 %3298
        %3300 = vrot.lane.b32.xlu0 %v3231, 125
        %v3301 = vpop.permute.xlu0 %3300
        %3302 = vrot.lane.b32.xlu0 %v3232, 125
        %v3303 = vpop.permute.xlu0 %3302
        %3304 = vrot.lane.b32.xlu0 %v3233, 125
        %v3305 = vpop.permute.xlu0 %3304
        %3314 = vrot.lane.b32.xlu0 %v3226, 124
        %v3315 = vpop.permute.xlu0 %3314
        %3316 = vrot.lane.b32.xlu0 %v3227, 124
        %v3317 = vpop.permute.xlu0 %3316
        %3318 = vrot.lane.b32.xlu0 %v3228, 124
        %v3319 = vpop.permute.xlu0 %3318
        %3320 = vrot.lane.b32.xlu0 %v3229, 124
        %v3321 = vpop.permute.xlu0 %3320
        %3322 = vrot.lane.b32.xlu0 %v3230, 124
        %v3323 = vpop.permute.xlu0 %3322
        %3324 = vrot.lane.b32.xlu0 %v3231, 124
        %v3325 = vpop.permute.xlu0 %3324
        %3326 = vrot.lane.b32.xlu0 %v3232, 124
        %v3327 = vpop.permute.xlu0 %3326
        %3328 = vrot.lane.b32.xlu0 %v3233, 124
        %v3329 = vpop.permute.xlu0 %3328
        %3338 = vrot.lane.b32.xlu0 %v3226, 123
        %v3339 = vpop.permute.xlu0 %3338
        %3340 = vrot.lane.b32.xlu0 %v3227, 123
        %v3341 = vpop.permute.xlu0 %3340
        %3342 = vrot.lane.b32.xlu0 %v3228, 123
        %v3343 = vpop.permute.xlu0 %3342
        %3344 = vrot.lane.b32.xlu0 %v3229, 123
        %v3345 = vpop.permute.xlu0 %3344
        %3346 = vrot.lane.b32.xlu0 %v3230, 123
        %v3347 = vpop.permute.xlu0 %3346
        %3348 = vrot.lane.b32.xlu0 %v3231, 123
        %v3349 = vpop.permute.xlu0 %3348
        %3350 = vrot.lane.b32.xlu0 %v3232, 123
        %v3351 = vpop.permute.xlu0 %3350
        %3352 = vrot.lane.b32.xlu0 %v3233, 123
        %v3353 = vpop.permute.xlu0 %3352
        %3362 = vrot.lane.b32.xlu0 %v3226, 122
        %v3363 = vpop.permute.xlu0 %3362
        %3364 = vrot.lane.b32.xlu0 %v3227, 122
        %v3365 = vpop.permute.xlu0 %3364
        %3366 = vrot.lane.b32.xlu0 %v3228, 122
        %v3367 = vpop.permute.xlu0 %3366
        %3368 = vrot.lane.b32.xlu0 %v3229, 122
        %v3369 = vpop.permute.xlu0 %3368
        %3370 = vrot.lane.b32.xlu0 %v3230, 122
        %v3371 = vpop.permute.xlu0 %3370
        %3372 = vrot.lane.b32.xlu0 %v3231, 122
        %v3373 = vpop.permute.xlu0 %3372
        %3374 = vrot.lane.b32.xlu0 %v3232, 122
        %v3375 = vpop.permute.xlu0 %3374
        %3376 = vrot.lane.b32.xlu0 %v3233, 122
        %v3377 = vpop.permute.xlu0 %3376
        %3386 = vrot.lane.b32.xlu0 %v3226, 121
        %v3387 = vpop.permute.xlu0 %3386
        %3388 = vrot.lane.b32.xlu0 %v3227, 121
        %v3389 = vpop.permute.xlu0 %3388
        %3390 = vrot.lane.b32.xlu0 %v3228, 121
        %v3391 = vpop.permute.xlu0 %3390
        %3392 = vrot.lane.b32.xlu0 %v3229, 121
        %v3393 = vpop.permute.xlu0 %3392
        %3394 = vrot.lane.b32.xlu0 %v3230, 121
        %v3395 = vpop.permute.xlu0 %3394
        %3396 = vrot.lane.b32.xlu0 %v3231, 121
        %v3397 = vpop.permute.xlu0 %3396
        %3398 = vrot.lane.b32.xlu0 %v3232, 121
        %v3399 = vpop.permute.xlu0 %3398
        %3400 = vrot.lane.b32.xlu0 %v3233, 121
        %v3401 = vpop.permute.xlu0 %3400
        %3410 = vrot.lane.b32.xlu0 %v3226, 120
        %v3411 = vpop.permute.xlu0 %3410
        %3412 = vrot.lane.b32.xlu0 %v3227, 120
        %v3413 = vpop.permute.xlu0 %3412
        %3414 = vrot.lane.b32.xlu0 %v3228, 120
        %v3415 = vpop.permute.xlu0 %3414
        %3416 = vrot.lane.b32.xlu0 %v3229, 120
        %v3417 = vpop.permute.xlu0 %3416
        %3418 = vrot.lane.b32.xlu0 %v3230, 120
        %v3419 = vpop.permute.xlu0 %3418
        %3420 = vrot.lane.b32.xlu0 %v3231, 120
        %v3421 = vpop.permute.xlu0 %3420
        %3422 = vrot.lane.b32.xlu0 %v3232, 120
        %v3423 = vpop.permute.xlu0 %3422
        %3424 = vrot.lane.b32.xlu0 %v3233, 120
        %v3425 = vpop.permute.xlu0 %3424
        %v3434 = vld [vmem:[%s13] sm:$0xff]
        %v3435 = vld [vmem:[%s13 + $0x8] sm:$0xff]
        %v3436 = vld [vmem:[%s13 + $0x10] sm:$0xff]
        %v3437 = vld [vmem:[%s13 + $0x18] sm:$0xff]
        %v3438 = vld [vmem:[%s13 + $0x20] sm:$0xff]
        %v3439 = vld [vmem:[%s13 + $0x28] sm:$0xff]
        %v3440 = vld [vmem:[%s13 + $0x30] sm:$0xff]
        %v3441 = vld [vmem:[%s13 + $0x38] sm:$0xff]
        %v3442 = vld [vmem:[%s13 + $0x40] sm:$0xff]
        %v3443 = vld [vmem:[%s13 + $0x48] sm:$0xff]
        %v3444 = vld [vmem:[%s13 + $0x50] sm:$0xff]
        %v3445 = vld [vmem:[%s13 + $0x58] sm:$0xff]
        %v3446 = vld [vmem:[%s13 + $0x60] sm:$0xff]
        %v3447 = vld [vmem:[%s13 + $0x68] sm:$0xff]
        %v3448 = vld [vmem:[%s13 + $0x70] sm:$0xff]
        %v3449 = vld [vmem:[%s13 + $0x78] sm:$0xff]
        %v3450 = vld [vmem:[%s13 + $0x80] sm:$0xff]
        %v3451 = vld [vmem:[%s13 + $0x88] sm:$0xff]
        %v3452 = vld [vmem:[%s13 + $0x90] sm:$0xff]
        %v3453 = vld [vmem:[%s13 + $0x98] sm:$0xff]
        %v3454 = vld [vmem:[%s13 + $0xa0] sm:$0xff]
        %v3455 = vld [vmem:[%s13 + $0xa8] sm:$0xff]
        %v3456 = vld [vmem:[%s13 + $0xb0] sm:$0xff]
        %v3457 = vld [vmem:[%s13 + $0xb8] sm:$0xff]
        %v3458 = vld [vmem:[%s13 + $0xc0] sm:$0xff]
        %v3459 = vld [vmem:[%s13 + $0xc8] sm:$0xff]
        %v3460 = vld [vmem:[%s13 + $0xd0] sm:$0xff]
        %v3461 = vld [vmem:[%s13 + $0xd8] sm:$0xff]
        %v3462 = vld [vmem:[%s13 + $0xe0] sm:$0xff]
        %v3463 = vld [vmem:[%s13 + $0xe8] sm:$0xff]
        %v3464 = vld [vmem:[%s13 + $0xf0] sm:$0xff]
        %v3465 = vld [vmem:[%s13 + $0xf8] sm:$0xff]
        %v3466 = vld [vmem:[%s13 + $0x100] sm:$0xff]
        %v3467 = vld [vmem:[%s13 + $0x108] sm:$0xff]
        %v3468 = vld [vmem:[%s13 + $0x110] sm:$0xff]
        %v3469 = vld [vmem:[%s13 + $0x118] sm:$0xff]
        %v3470 = vld [vmem:[%s13 + $0x120] sm:$0xff]
        %v3471 = vld [vmem:[%s13 + $0x128] sm:$0xff]
        %v3472 = vld [vmem:[%s13 + $0x130] sm:$0xff]
        %v3473 = vld [vmem:[%s13 + $0x138] sm:$0xff]
        %v3474 = vld [vmem:[%s13 + $0x140] sm:$0xff]
        %v3475 = vld [vmem:[%s13 + $0x148] sm:$0xff]
        %v3476 = vld [vmem:[%s13 + $0x150] sm:$0xff]
        %v3477 = vld [vmem:[%s13 + $0x158] sm:$0xff]
        %v3478 = vld [vmem:[%s13 + $0x160] sm:$0xff]
        %v3479 = vld [vmem:[%s13 + $0x168] sm:$0xff]
        %v3480 = vld [vmem:[%s13 + $0x170] sm:$0xff]
        %v3481 = vld [vmem:[%s13 + $0x178] sm:$0xff]
        %v3482 = vld [vmem:[%s13 + $0x180] sm:$0xff]
        %v3483 = vld [vmem:[%s13 + $0x188] sm:$0xff]
        %v3484 = vld [vmem:[%s13 + $0x190] sm:$0xff]
        %v3485 = vld [vmem:[%s13 + $0x198] sm:$0xff]
        %v3486 = vld [vmem:[%s13 + $0x1a0] sm:$0xff]
        %v3487 = vld [vmem:[%s13 + $0x1a8] sm:$0xff]
        %v3488 = vld [vmem:[%s13 + $0x1b0] sm:$0xff]
        %v3489 = vld [vmem:[%s13 + $0x1b8] sm:$0xff]
        %v3490 = vld [vmem:[%s13 + $0x1c0] sm:$0xff]
        %v3491 = vld [vmem:[%s13 + $0x1c8] sm:$0xff]
        %v3492 = vld [vmem:[%s13 + $0x1d0] sm:$0xff]
        %v3493 = vld [vmem:[%s13 + $0x1d8] sm:$0xff]
        %v3494 = vld [vmem:[%s13 + $0x1e0] sm:$0xff]
        %v3495 = vld [vmem:[%s13 + $0x1e8] sm:$0xff]
        %v3496 = vld [vmem:[%s13 + $0x1f0] sm:$0xff]
        %v3497 = vld [vmem:[%s13 + $0x1f8] sm:$0xff]
        %v3498 = vld [vmem:[%s13 + $0x200] sm:$0xff]
        %v3499 = vld [vmem:[%s13 + $0x208] sm:$0xff]
        %v3500 = vld [vmem:[%s13 + $0x210] sm:$0xff]
        %v3501 = vld [vmem:[%s13 + $0x218] sm:$0xff]
        %v3502 = vld [vmem:[%s13 + $0x220] sm:$0xff]
        %v3503 = vld [vmem:[%s13 + $0x228] sm:$0xff]
        %v3504 = vld [vmem:[%s13 + $0x230] sm:$0xff]
        %v3505 = vld [vmem:[%s13 + $0x238] sm:$0xff]
        %v3506 = vld [vmem:[%s13 + $0x240] sm:$0xff]
        %v3507 = vld [vmem:[%s13 + $0x248] sm:$0xff]
        %v3508 = vld [vmem:[%s13 + $0x250] sm:$0xff]
        %v3509 = vld [vmem:[%s13 + $0x258] sm:$0xff]
        %v3510 = vld [vmem:[%s13 + $0x260] sm:$0xff]
        %v3511 = vld [vmem:[%s13 + $0x268] sm:$0xff]
        %v3512 = vld [vmem:[%s13 + $0x270] sm:$0xff]
        %v3513 = vld [vmem:[%s13 + $0x278] sm:$0xff]
        %v3515 = vsel %vm2762, %v3438, 0
        %v3518 = vsel %vm2762, %v3443, 0
        %v3521 = vsel %vm2762, %v3448, 0
        %v3524 = vsel %vm2762, %v3453, 0
        %v3527 = vsel %vm2762, %v3458, 0
        %v3530 = vsel %vm2762, %v3463, 0
        %v3533 = vsel %vm2762, %v3468, 0
        %v3536 = vsel %vm2762, %v3473, 0
        %v3539 = vsel %vm2762, %v3478, 0
        %v3542 = vsel %vm2762, %v3483, 0
        %v3545 = vsel %vm2762, %v3488, 0
        %v3548 = vsel %vm2762, %v3493, 0
        %v3551 = vsel %vm2762, %v3498, 0
        %v3554 = vsel %vm2762, %v3503, 0
        %v3557 = vsel %vm2762, %v3508, 0
        %v3560 = vsel %vm2762, %v3513, 0
        %3562 = vmatpush.msra.mxu0 %v3257
        %3563 = vmatpush.msra.mxu0 %v3255
        %3564 = vmatpush.msra.mxu0 %v3253
        %3565 = vmatpush.msra.mxu0 %v3251
        %3566 = vmatpush.msra.mxu0 %v3249
        %3567 = vmatpush.msra.mxu0 %v3247
        %3568 = vmatpush.msra.mxu0 %v3245
        %3569 = vmatpush.msra.mxu0 %v3243
        %3570 = vmatpush.msra.mxu0 %v3233
        %3571 = vmatpush.msra.mxu0 %v3232
        %3572 = vmatpush.msra.mxu0 %v3231
        %3573 = vmatpush.msra.mxu0 %v3230
        %3574 = vmatpush.msra.mxu0 %v3229
        %3575 = vmatpush.msra.mxu0 %v3228
        %3576 = vmatpush.msra.mxu0 %v3227
        %3577 = vmatpush.msra.mxu0 %v3226
        %3578 = vmatmul.f32.gmra.mxu0 %v3434
        %v3579 = vpop.f32.mrf.mxu0
        %v3580 = vadd.f32 0.0, %v3579
        %3581 = vmatmul.f32.gmra.mxu0 %v3439
        %v3582 = vpop.f32.mrf.mxu0
        %v3583 = vadd.f32 0.0, %v3582
        %3584 = vmatmul.f32.gmra.mxu0 %v3444
        %v3585 = vpop.f32.mrf.mxu0
        %v3586 = vadd.f32 0.0, %v3585
        %3587 = vmatmul.f32.gmra.mxu0 %v3449
        %v3588 = vpop.f32.mrf.mxu0
        %v3589 = vadd.f32 0.0, %v3588
        %3590 = vmatmul.f32.gmra.mxu0 %v3454
        %v3591 = vpop.f32.mrf.mxu0
        %v3592 = vadd.f32 0.0, %v3591
        %3593 = vmatmul.f32.gmra.mxu0 %v3459
        %v3594 = vpop.f32.mrf.mxu0
        %v3595 = vadd.f32 0.0, %v3594
        %3596 = vmatmul.f32.gmra.mxu0 %v3464
        %v3597 = vpop.f32.mrf.mxu0
        %v3598 = vadd.f32 0.0, %v3597
        %3599 = vmatmul.f32.gmra.mxu0 %v3469
        %v3600 = vpop.f32.mrf.mxu0
        %v3601 = vadd.f32 0.0, %v3600
        %3602 = vmatmul.f32.gmra.mxu0 %v3474
        %v3603 = vpop.f32.mrf.mxu0
        %v3604 = vadd.f32 0.0, %v3603
        %3605 = vmatmul.f32.gmra.mxu0 %v3479
        %v3606 = vpop.f32.mrf.mxu0
        %v3607 = vadd.f32 0.0, %v3606
        %3608 = vmatmul.f32.gmra.mxu0 %v3484
        %v3609 = vpop.f32.mrf.mxu0
        %v3610 = vadd.f32 0.0, %v3609
        %3611 = vmatmul.f32.gmra.mxu0 %v3489
        %v3612 = vpop.f32.mrf.mxu0
        %v3613 = vadd.f32 0.0, %v3612
        %3614 = vmatmul.f32.gmra.mxu0 %v3494
        %v3615 = vpop.f32.mrf.mxu0
        %v3616 = vadd.f32 0.0, %v3615
        %3617 = vmatmul.f32.gmra.mxu0 %v3499
        %v3618 = vpop.f32.mrf.mxu0
        %v3619 = vadd.f32 0.0, %v3618
        %3620 = vmatmul.f32.gmra.mxu0 %v3504
        %v3621 = vpop.f32.mrf.mxu0
        %v3622 = vadd.f32 0.0, %v3621
        %3623 = vmatmul.f32.gmra.mxu0 %v3509
        %v3624 = vpop.f32.mrf.mxu0
        %v3625 = vadd.f32 0.0, %v3624
        %3626 = vdwg.mxu0
        %3627 = vmatpush.msra.mxu0 %v3305
        %3628 = vmatpush.msra.mxu0 %v3303
        %3629 = vmatpush.msra.mxu0 %v3301
        %3630 = vmatpush.msra.mxu0 %v3299
        %3631 = vmatpush.msra.mxu0 %v3297
        %3632 = vmatpush.msra.mxu0 %v3295
        %3633 = vmatpush.msra.mxu0 %v3293
        %3634 = vmatpush.msra.mxu0 %v3291
        %3635 = vmatpush.msra.mxu0 %v3281
        %3636 = vmatpush.msra.mxu0 %v3279
        %3637 = vmatpush.msra.mxu0 %v3277
        %3638 = vmatpush.msra.mxu0 %v3275
        %3639 = vmatpush.msra.mxu0 %v3273
        %3640 = vmatpush.msra.mxu0 %v3271
        %3641 = vmatpush.msra.mxu0 %v3269
        %3642 = vmatpush.msra.mxu0 %v3267
        %3643 = vmatmul.f32.gmra.mxu0 %v3435
        %v3644 = vpop.f32.mrf.mxu0
        %v3645 = vadd.f32 %v3580, %v3644
        %3646 = vmatmul.f32.gmra.mxu0 %v3440
        %v3647 = vpop.f32.mrf.mxu0
        %v3648 = vadd.f32 %v3583, %v3647
        %3649 = vmatmul.f32.gmra.mxu0 %v3445
        %v3650 = vpop.f32.mrf.mxu0
        %v3651 = vadd.f32 %v3586, %v3650
        %3652 = vmatmul.f32.gmra.mxu0 %v3450
        %v3653 = vpop.f32.mrf.mxu0
        %v3654 = vadd.f32 %v3589, %v3653
        %3655 = vmatmul.f32.gmra.mxu0 %v3455
        %v3656 = vpop.f32.mrf.mxu0
        %v3657 = vadd.f32 %v3592, %v3656
        %3658 = vmatmul.f32.gmra.mxu0 %v3460
        %v3659 = vpop.f32.mrf.mxu0
        %v3660 = vadd.f32 %v3595, %v3659
        %3661 = vmatmul.f32.gmra.mxu0 %v3465
        %v3662 = vpop.f32.mrf.mxu0
        %v3663 = vadd.f32 %v3598, %v3662
        %3664 = vmatmul.f32.gmra.mxu0 %v3470
        %v3665 = vpop.f32.mrf.mxu0
        %v3666 = vadd.f32 %v3601, %v3665
        %3667 = vmatmul.f32.gmra.mxu0 %v3475
        %v3668 = vpop.f32.mrf.mxu0
        %v3669 = vadd.f32 %v3604, %v3668
        %3670 = vmatmul.f32.gmra.mxu0 %v3480
        %v3671 = vpop.f32.mrf.mxu0
        %v3672 = vadd.f32 %v3607, %v3671
        %3673 = vmatmul.f32.gmra.mxu0 %v3485
        %v3674 = vpop.f32.mrf.mxu0
        %v3675 = vadd.f32 %v3610, %v3674
        %3676 = vmatmul.f32.gmra.mxu0 %v3490
        %v3677 = vpop.f32.mrf.mxu0
        %v3678 = vadd.f32 %v3613, %v3677
        %3679 = vmatmul.f32.gmra.mxu0 %v3495
        %v3680 = vpop.f32.mrf.mxu0
        %v3681 = vadd.f32 %v3616, %v3680
        %3682 = vmatmul.f32.gmra.mxu0 %v3500
        %v3683 = vpop.f32.mrf.mxu0
        %v3684 = vadd.f32 %v3619, %v3683
        %3685 = vmatmul.f32.gmra.mxu0 %v3505
        %v3686 = vpop.f32.mrf.mxu0
        %v3687 = vadd.f32 %v3622, %v3686
        %3688 = vmatmul.f32.gmra.mxu0 %v3510
        %v3689 = vpop.f32.mrf.mxu0
        %v3690 = vadd.f32 %v3625, %v3689
        %3691 = vdwg.mxu0
        %3692 = vmatpush.msra.mxu0 %v3353
        %3693 = vmatpush.msra.mxu0 %v3351
        %3694 = vmatpush.msra.mxu0 %v3349
        %3695 = vmatpush.msra.mxu0 %v3347
        %3696 = vmatpush.msra.mxu0 %v3345
        %3697 = vmatpush.msra.mxu0 %v3343
        %3698 = vmatpush.msra.mxu0 %v3341
        %3699 = vmatpush.msra.mxu0 %v3339
        %3700 = vmatpush.msra.mxu0 %v3329
        %3701 = vmatpush.msra.mxu0 %v3327
        %3702 = vmatpush.msra.mxu0 %v3325
        %3703 = vmatpush.msra.mxu0 %v3323
        %3704 = vmatpush.msra.mxu0 %v3321
        %3705 = vmatpush.msra.mxu0 %v3319
        %3706 = vmatpush.msra.mxu0 %v3317
        %3707 = vmatpush.msra.mxu0 %v3315
        %3708 = vmatmul.f32.gmra.mxu0 %v3436
        %v3709 = vpop.f32.mrf.mxu0
        %v3710 = vadd.f32 %v3645, %v3709
        %3711 = vmatmul.f32.gmra.mxu0 %v3441
        %v3712 = vpop.f32.mrf.mxu0
        %v3713 = vadd.f32 %v3648, %v3712
        %3714 = vmatmul.f32.gmra.mxu0 %v3446
        %v3715 = vpop.f32.mrf.mxu0
        %v3716 = vadd.f32 %v3651, %v3715
        %3717 = vmatmul.f32.gmra.mxu0 %v3451
        %v3718 = vpop.f32.mrf.mxu0
        %v3719 = vadd.f32 %v3654, %v3718
        %3720 = vmatmul.f32.gmra.mxu0 %v3456
        %v3721 = vpop.f32.mrf.mxu0
        %v3722 = vadd.f32 %v3657, %v3721
        %3723 = vmatmul.f32.gmra.mxu0 %v3461
        %v3724 = vpop.f32.mrf.mxu0
        %v3725 = vadd.f32 %v3660, %v3724
        %3726 = vmatmul.f32.gmra.mxu0 %v3466
        %v3727 = vpop.f32.mrf.mxu0
        %v3728 = vadd.f32 %v3663, %v3727
        %3729 = vmatmul.f32.gmra.mxu0 %v3471
        %v3730 = vpop.f32.mrf.mxu0
        %v3731 = vadd.f32 %v3666, %v3730
        %3732 = vmatmul.f32.gmra.mxu0 %v3476
        %v3733 = vpop.f32.mrf.mxu0
        %v3734 = vadd.f32 %v3669, %v3733
        %3735 = vmatmul.f32.gmra.mxu0 %v3481
        %v3736 = vpop.f32.mrf.mxu0
        %v3737 = vadd.f32 %v3672, %v3736
        %3738 = vmatmul.f32.gmra.mxu0 %v3486
        %v3739 = vpop.f32.mrf.mxu0
        %v3740 = vadd.f32 %v3675, %v3739
        %3741 = vmatmul.f32.gmra.mxu0 %v3491
        %v3742 = vpop.f32.mrf.mxu0
        %v3743 = vadd.f32 %v3678, %v3742
        %3744 = vmatmul.f32.gmra.mxu0 %v3496
        %v3745 = vpop.f32.mrf.mxu0
        %v3746 = vadd.f32 %v3681, %v3745
        %3747 = vmatmul.f32.gmra.mxu0 %v3501
        %v3748 = vpop.f32.mrf.mxu0
        %v3749 = vadd.f32 %v3684, %v3748
        %3750 = vmatmul.f32.gmra.mxu0 %v3506
        %v3751 = vpop.f32.mrf.mxu0
        %v3752 = vadd.f32 %v3687, %v3751
        %3753 = vmatmul.f32.gmra.mxu0 %v3511
        %v3754 = vpop.f32.mrf.mxu0
        %v3755 = vadd.f32 %v3690, %v3754
        %3756 = vdwg.mxu0
        %3757 = vmatpush.msra.mxu0 %v3401
        %3758 = vmatpush.msra.mxu0 %v3399
        %3759 = vmatpush.msra.mxu0 %v3397
        %3760 = vmatpush.msra.mxu0 %v3395
        %3761 = vmatpush.msra.mxu0 %v3393
        %3762 = vmatpush.msra.mxu0 %v3391
        %3763 = vmatpush.msra.mxu0 %v3389
        %3764 = vmatpush.msra.mxu0 %v3387
        %3765 = vmatpush.msra.mxu0 %v3377
        %3766 = vmatpush.msra.mxu0 %v3375
        %3767 = vmatpush.msra.mxu0 %v3373
        %3768 = vmatpush.msra.mxu0 %v3371
        %3769 = vmatpush.msra.mxu0 %v3369
        %3770 = vmatpush.msra.mxu0 %v3367
        %3771 = vmatpush.msra.mxu0 %v3365
        %3772 = vmatpush.msra.mxu0 %v3363
        %3773 = vmatmul.f32.gmra.mxu0 %v3437
        %v3774 = vpop.f32.mrf.mxu0
        %v3775 = vadd.f32 %v3710, %v3774
        %3776 = vmatmul.f32.gmra.mxu0 %v3442
        %v3777 = vpop.f32.mrf.mxu0
        %v3778 = vadd.f32 %v3713, %v3777
        %3779 = vmatmul.f32.gmra.mxu0 %v3447
        %v3780 = vpop.f32.mrf.mxu0
        %v3781 = vadd.f32 %v3716, %v3780
        %3782 = vmatmul.f32.gmra.mxu0 %v3452
        %v3783 = vpop.f32.mrf.mxu0
        %v3784 = vadd.f32 %v3719, %v3783
        %3785 = vmatmul.f32.gmra.mxu0 %v3457
        %v3786 = vpop.f32.mrf.mxu0
        %v3787 = vadd.f32 %v3722, %v3786
        %3788 = vmatmul.f32.gmra.mxu0 %v3462
        %v3789 = vpop.f32.mrf.mxu0
        %v3790 = vadd.f32 %v3725, %v3789
        %3791 = vmatmul.f32.gmra.mxu0 %v3467
        %v3792 = vpop.f32.mrf.mxu0
        %v3793 = vadd.f32 %v3728, %v3792
        %3794 = vmatmul.f32.gmra.mxu0 %v3472
        %v3795 = vpop.f32.mrf.mxu0
        %v3796 = vadd.f32 %v3731, %v3795
        %3797 = vmatmul.f32.gmra.mxu0 %v3477
        %v3798 = vpop.f32.mrf.mxu0
        %v3799 = vadd.f32 %v3734, %v3798
        %3800 = vmatmul.f32.gmra.mxu0 %v3482
        %v3801 = vpop.f32.mrf.mxu0
        %v3802 = vadd.f32 %v3737, %v3801
        %3803 = vmatmul.f32.gmra.mxu0 %v3487
        %v3804 = vpop.f32.mrf.mxu0
        %v3805 = vadd.f32 %v3740, %v3804
        %3806 = vmatmul.f32.gmra.mxu0 %v3492
        %v3807 = vpop.f32.mrf.mxu0
        %v3808 = vadd.f32 %v3743, %v3807
        %3809 = vmatmul.f32.gmra.mxu0 %v3497
        %v3810 = vpop.f32.mrf.mxu0
        %v3811 = vadd.f32 %v3746, %v3810
        %3812 = vmatmul.f32.gmra.mxu0 %v3502
        %v3813 = vpop.f32.mrf.mxu0
        %v3814 = vadd.f32 %v3749, %v3813
        %3815 = vmatmul.f32.gmra.mxu0 %v3507
        %v3816 = vpop.f32.mrf.mxu0
        %v3817 = vadd.f32 %v3752, %v3816
        %3818 = vmatmul.f32.gmra.mxu0 %v3512
        %v3819 = vpop.f32.mrf.mxu0
        %v3820 = vadd.f32 %v3755, %v3819
        %3821 = vdwg.mxu0
        %3822 = vmatpush.msra.mxu0 0.0
        %3823 = vmatpush.msra.mxu0 0.0
        %3824 = vmatpush.msra.mxu0 0.0
        %3825 = vmatpush.msra.mxu0 0.0
        %3826 = vmatpush.msra.mxu0 0.0
        %3827 = vmatpush.msra.mxu0 0.0
        %3828 = vmatpush.msra.mxu0 0.0
        %3829 = vmatpush.msra.mxu0 0.0
        %3830 = vmatpush.msra.mxu0 %v3425
        %3831 = vmatpush.msra.mxu0 %v3423
        %3832 = vmatpush.msra.mxu0 %v3421
        %3833 = vmatpush.msra.mxu0 %v3419
        %3834 = vmatpush.msra.mxu0 %v3417
        %3835 = vmatpush.msra.mxu0 %v3415
        %3836 = vmatpush.msra.mxu0 %v3413
        %3837 = vmatpush.msra.mxu0 %v3411
        %3838 = vmatmul.f32.gmra.mxu0 %v3515
        %v3839 = vpop.f32.mrf.mxu0
        %v3840 = vadd.f32 %v3775, %v3839
        %3841 = vmatmul.f32.gmra.mxu0 %v3518
        %v3842 = vpop.f32.mrf.mxu0
        %v3843 = vadd.f32 %v3778, %v3842
        %3844 = vmatmul.f32.gmra.mxu0 %v3521
        %v3845 = vpop.f32.mrf.mxu0
        %v3846 = vadd.f32 %v3781, %v3845
        %3847 = vmatmul.f32.gmra.mxu0 %v3524
        %v3848 = vpop.f32.mrf.mxu0
        %v3849 = vadd.f32 %v3784, %v3848
        %3850 = vmatmul.f32.gmra.mxu0 %v3527
        %v3851 = vpop.f32.mrf.mxu0
        %v3852 = vadd.f32 %v3787, %v3851
        %3853 = vmatmul.f32.gmra.mxu0 %v3530
        %v3854 = vpop.f32.mrf.mxu0
        %v3855 = vadd.f32 %v3790, %v3854
        %3856 = vmatmul.f32.gmra.mxu0 %v3533
        %v3857 = vpop.f32.mrf.mxu0
        %v3858 = vadd.f32 %v3793, %v3857
        %3859 = vmatmul.f32.gmra.mxu0 %v3536
        %v3860 = vpop.f32.mrf.mxu0
        %v3861 = vadd.f32 %v3796, %v3860
        %3862 = vmatmul.f32.gmra.mxu0 %v3539
        %v3863 = vpop.f32.mrf.mxu0
        %v3864 = vadd.f32 %v3799, %v3863
        %3865 = vmatmul.f32.gmra.mxu0 %v3542
        %v3866 = vpop.f32.mrf.mxu0
        %v3867 = vadd.f32 %v3802, %v3866
        %3868 = vmatmul.f32.gmra.mxu0 %v3545
        %v3869 = vpop.f32.mrf.mxu0
        %v3870 = vadd.f32 %v3805, %v3869
        %3871 = vmatmul.f32.gmra.mxu0 %v3548
        %v3872 = vpop.f32.mrf.mxu0
        %v3873 = vadd.f32 %v3808, %v3872
        %3874 = vmatmul.f32.gmra.mxu0 %v3551
        %v3875 = vpop.f32.mrf.mxu0
        %v3876 = vadd.f32 %v3811, %v3875
        %3877 = vmatmul.f32.gmra.mxu0 %v3554
        %v3878 = vpop.f32.mrf.mxu0
        %v3879 = vadd.f32 %v3814, %v3878
        %3880 = vmatmul.f32.gmra.mxu0 %v3557
        %v3881 = vpop.f32.mrf.mxu0
        %v3882 = vadd.f32 %v3817, %v3881
        %3883 = vmatmul.f32.gmra.mxu0 %v3560
        %v3884 = vpop.f32.mrf.mxu0
        %v3885 = vadd.f32 %v3820, %v3884
        %3886 = vdwg.mxu0
        %v3887 = vld [vmem:[%s14] sm:$0xff]
        %v3888 = vld [vmem:[%s14 + $0x8] sm:$0xff]
        %v3889 = vld [vmem:[%s14 + $0x10] sm:$0xff]
        %v3890 = vld [vmem:[%s14 + $0x18] sm:$0xff]
        %v3891 = vld [vmem:[%s14 + $0x20] sm:$0xff]
        %v3892 = vld [vmem:[%s14 + $0x28] sm:$0xff]
        %v3893 = vld [vmem:[%s14 + $0x30] sm:$0xff]
        %v3894 = vld [vmem:[%s14 + $0x38] sm:$0xff]
        %v3895 = vld [vmem:[%s14 + $0x40] sm:$0xff]
        %v3896 = vld [vmem:[%s14 + $0x48] sm:$0xff]
        %v3897 = vld [vmem:[%s14 + $0x50] sm:$0xff]
        %v3898 = vld [vmem:[%s14 + $0x58] sm:$0xff]
        %v3899 = vld [vmem:[%s14 + $0x60] sm:$0xff]
        %v3900 = vld [vmem:[%s14 + $0x68] sm:$0xff]
        %v3901 = vld [vmem:[%s14 + $0x70] sm:$0xff]
        %v3902 = vld [vmem:[%s14 + $0x78] sm:$0xff]
        %3904 = vset.pattern.permute.xlu0 0
        %3905 = vperm.xlu0 %3904, %v3887
        %v3906 = vpop.permute.xlu0 %3905
        %3909 = vset.pattern.permute.xlu0 0
        %3910 = vperm.xlu0 %3909, %v3888
        %v3911 = vpop.permute.xlu0 %3910
        %3914 = vset.pattern.permute.xlu0 0
        %3915 = vperm.xlu0 %3914, %v3889
        %v3916 = vpop.permute.xlu0 %3915
        %3919 = vset.pattern.permute.xlu0 0
        %3920 = vperm.xlu0 %3919, %v3890
        %v3921 = vpop.permute.xlu0 %3920
        %3924 = vset.pattern.permute.xlu0 0
        %3925 = vperm.xlu0 %3924, %v3891
        %v3926 = vpop.permute.xlu0 %3925
        %3929 = vset.pattern.permute.xlu0 0
        %3930 = vperm.xlu0 %3929, %v3892
        %v3931 = vpop.permute.xlu0 %3930
        %3934 = vset.pattern.permute.xlu0 0
        %3935 = vperm.xlu0 %3934, %v3893
        %v3936 = vpop.permute.xlu0 %3935
        %3939 = vset.pattern.permute.xlu0 0
        %3940 = vperm.xlu0 %3939, %v3894
        %v3941 = vpop.permute.xlu0 %3940
        %3944 = vset.pattern.permute.xlu0 0
        %3945 = vperm.xlu0 %3944, %v3895
        %v3946 = vpop.permute.xlu0 %3945
        %3949 = vset.pattern.permute.xlu0 0
        %3950 = vperm.xlu0 %3949, %v3896
        %v3951 = vpop.permute.xlu0 %3950
        %3954 = vset.pattern.permute.xlu0 0
        %3955 = vperm.xlu0 %3954, %v3897
        %v3956 = vpop.permute.xlu0 %3955
        %3959 = vset.pattern.permute.xlu0 0
        %3960 = vperm.xlu0 %3959, %v3898
        %v3961 = vpop.permute.xlu0 %3960
        %3964 = vset.pattern.permute.xlu0 0
        %3965 = vperm.xlu0 %3964, %v3899
        %v3966 = vpop.permute.xlu0 %3965
        %3969 = vset.pattern.permute.xlu0 0
        %3970 = vperm.xlu0 %3969, %v3900
        %v3971 = vpop.permute.xlu0 %3970
        %3974 = vset.pattern.permute.xlu0 0
        %3975 = vperm.xlu0 %3974, %v3901
        %v3976 = vpop.permute.xlu0 %3975
        %3979 = vset.pattern.permute.xlu0 0
        %3980 = vperm.xlu0 %3979, %v3902
        %v3981 = vpop.permute.xlu0 %3980
        %v3983 = vmul.f32 %v3840, %v3906
        %v3984 = vmul.f32 %v3843, %v3911
        %v3985 = vmul.f32 %v3846, %v3916
        %v3986 = vmul.f32 %v3849, %v3921
        %v3987 = vmul.f32 %v3852, %v3926
        %v3988 = vmul.f32 %v3855, %v3931
        %v3989 = vmul.f32 %v3858, %v3936
        %v3990 = vmul.f32 %v3861, %v3941
        %v3991 = vmul.f32 %v3864, %v3946
        %v3992 = vmul.f32 %v3867, %v3951
        %v3993 = vmul.f32 %v3870, %v3956
        %v3994 = vmul.f32 %v3873, %v3961
        %v3995 = vmul.f32 %v3876, %v3966
        %v3996 = vmul.f32 %v3879, %v3971
        %v3997 = vmul.f32 %v3882, %v3976
        %v3998 = vmul.f32 %v3885, %v3981
        %v3999 = vld [vmem:[%s15] sm:$0xff]
        %v4000 = vld [vmem:[%s15 + $0x8] sm:$0xff]
        %v4001 = vld [vmem:[%s15 + $0x10] sm:$0xff]
        %v4002 = vld [vmem:[%s15 + $0x18] sm:$0xff]
        %v4003 = vld [vmem:[%s15 + $0x20] sm:$0xff]
        %v4004 = vld [vmem:[%s15 + $0x28] sm:$0xff]
        %v4005 = vld [vmem:[%s15 + $0x30] sm:$0xff]
        %v4006 = vld [vmem:[%s15 + $0x38] sm:$0xff]
        %v4007 = vld [vmem:[%s15 + $0x40] sm:$0xff]
        %v4008 = vld [vmem:[%s15 + $0x48] sm:$0xff]
        %v4009 = vld [vmem:[%s15 + $0x50] sm:$0xff]
        %v4010 = vld [vmem:[%s15 + $0x58] sm:$0xff]
        %v4011 = vld [vmem:[%s15 + $0x60] sm:$0xff]
        %v4012 = vld [vmem:[%s15 + $0x68] sm:$0xff]
        %v4013 = vld [vmem:[%s15 + $0x70] sm:$0xff]
        %v4014 = vld [vmem:[%s15 + $0x78] sm:$0xff]
        %4016 = vset.pattern.permute.xlu0 0
        %4017 = vperm.xlu0 %4016, %v3999
        %v4018 = vpop.permute.xlu0 %4017
        %4021 = vset.pattern.permute.xlu0 0
        %4022 = vperm.xlu0 %4021, %v4000
        %v4023 = vpop.permute.xlu0 %4022
        %4026 = vset.pattern.permute.xlu0 0
        %4027 = vperm.xlu0 %4026, %v4001
        %v4028 = vpop.permute.xlu0 %4027
        %4031 = vset.pattern.permute.xlu0 0
        %4032 = vperm.xlu0 %4031, %v4002
        %v4033 = vpop.permute.xlu0 %4032
        %4036 = vset.pattern.permute.xlu0 0
        %4037 = vperm.xlu0 %4036, %v4003
        %v4038 = vpop.permute.xlu0 %4037
        %4041 = vset.pattern.permute.xlu0 0
        %4042 = vperm.xlu0 %4041, %v4004
        %v4043 = vpop.permute.xlu0 %4042
        %4046 = vset.pattern.permute.xlu0 0
        %4047 = vperm.xlu0 %4046, %v4005
        %v4048 = vpop.permute.xlu0 %4047
        %4051 = vset.pattern.permute.xlu0 0
        %4052 = vperm.xlu0 %4051, %v4006
        %v4053 = vpop.permute.xlu0 %4052
        %4056 = vset.pattern.permute.xlu0 0
        %4057 = vperm.xlu0 %4056, %v4007
        %v4058 = vpop.permute.xlu0 %4057
        %4061 = vset.pattern.permute.xlu0 0
        %4062 = vperm.xlu0 %4061, %v4008
        %v4063 = vpop.permute.xlu0 %4062
        %4066 = vset.pattern.permute.xlu0 0
        %4067 = vperm.xlu0 %4066, %v4009
        %v4068 = vpop.permute.xlu0 %4067
        %4071 = vset.pattern.permute.xlu0 0
        %4072 = vperm.xlu0 %4071, %v4010
        %v4073 = vpop.permute.xlu0 %4072
        %4076 = vset.pattern.permute.xlu0 0
        %4077 = vperm.xlu0 %4076, %v4011
        %v4078 = vpop.permute.xlu0 %4077
        %4081 = vset.pattern.permute.xlu0 0
        %4082 = vperm.xlu0 %4081, %v4012
        %v4083 = vpop.permute.xlu0 %4082
        %4086 = vset.pattern.permute.xlu0 0
        %4087 = vperm.xlu0 %4086, %v4013
        %v4088 = vpop.permute.xlu0 %4087
        %4091 = vset.pattern.permute.xlu0 0
        %4092 = vperm.xlu0 %4091, %v4014
        %v4093 = vpop.permute.xlu0 %4092
        %v4095 = vadd.f32 %v3983, %v4018
        %v4096 = vadd.f32 %v3984, %v4023
        %v4097 = vadd.f32 %v3985, %v4028
        %v4098 = vadd.f32 %v3986, %v4033
        %v4099 = vadd.f32 %v3987, %v4038
        %v4100 = vadd.f32 %v3988, %v4043
        %v4101 = vadd.f32 %v3989, %v4048
        %v4102 = vadd.f32 %v3990, %v4053
        %v4103 = vadd.f32 %v3991, %v4058
        %v4104 = vadd.f32 %v3992, %v4063
        %v4105 = vadd.f32 %v3993, %v4068
        %v4106 = vadd.f32 %v3994, %v4073
        %v4107 = vadd.f32 %v3995, %v4078
        %v4108 = vadd.f32 %v3996, %v4083
        %v4109 = vadd.f32 %v3997, %v4088
        %v4110 = vadd.f32 %v3998, %v4093
        %v4111 = vmax.f32 %v4095, 0.0
        %v4112 = vmax.f32 %v4096, 0.0
        %v4113 = vmax.f32 %v4097, 0.0
        %v4114 = vmax.f32 %v4098, 0.0
        %v4115 = vmax.f32 %v4099, 0.0
        %v4116 = vmax.f32 %v4100, 0.0
        %v4117 = vmax.f32 %v4101, 0.0
        %v4118 = vmax.f32 %v4102, 0.0
        %v4119 = vmax.f32 %v4103, 0.0
        %v4120 = vmax.f32 %v4104, 0.0
        %v4121 = vmax.f32 %v4105, 0.0
        %v4122 = vmax.f32 %v4106, 0.0
        %v4123 = vmax.f32 %v4107, 0.0
        %v4124 = vmax.f32 %v4108, 0.0
        %v4125 = vmax.f32 %v4109, 0.0
        %v4126 = vmax.f32 %v4110, 0.0
        %4143 = vrot.lane.b32.xlu0 %v4111, 127
        %v4144 = vpop.permute.xlu0 %4143
        %4145 = vrot.lane.b32.xlu0 %v4112, 127
        %v4146 = vpop.permute.xlu0 %4145
        %4147 = vrot.lane.b32.xlu0 %v4113, 127
        %v4148 = vpop.permute.xlu0 %4147
        %4149 = vrot.lane.b32.xlu0 %v4114, 127
        %v4150 = vpop.permute.xlu0 %4149
        %4151 = vrot.lane.b32.xlu0 %v4115, 127
        %v4152 = vpop.permute.xlu0 %4151
        %4153 = vrot.lane.b32.xlu0 %v4116, 127
        %v4154 = vpop.permute.xlu0 %4153
        %4155 = vrot.lane.b32.xlu0 %v4117, 127
        %v4156 = vpop.permute.xlu0 %4155
        %4157 = vrot.lane.b32.xlu0 %v4118, 127
        %v4158 = vpop.permute.xlu0 %4157
        %4159 = vrot.lane.b32.xlu0 %v4119, 127
        %v4160 = vpop.permute.xlu0 %4159
        %4161 = vrot.lane.b32.xlu0 %v4120, 127
        %v4162 = vpop.permute.xlu0 %4161
        %4163 = vrot.lane.b32.xlu0 %v4121, 127
        %v4164 = vpop.permute.xlu0 %4163
        %4165 = vrot.lane.b32.xlu0 %v4122, 127
        %v4166 = vpop.permute.xlu0 %4165
        %4167 = vrot.lane.b32.xlu0 %v4123, 127
        %v4168 = vpop.permute.xlu0 %4167
        %4169 = vrot.lane.b32.xlu0 %v4124, 127
        %v4170 = vpop.permute.xlu0 %4169
        %4171 = vrot.lane.b32.xlu0 %v4125, 127
        %v4172 = vpop.permute.xlu0 %4171
        %4173 = vrot.lane.b32.xlu0 %v4126, 127
        %v4174 = vpop.permute.xlu0 %4173
        %4191 = vrot.lane.b32.xlu0 %v4111, 126
        %v4192 = vpop.permute.xlu0 %4191
        %4193 = vrot.lane.b32.xlu0 %v4112, 126
        %v4194 = vpop.permute.xlu0 %4193
        %4195 = vrot.lane.b32.xlu0 %v4113, 126
        %v4196 = vpop.permute.xlu0 %4195
        %4197 = vrot.lane.b32.xlu0 %v4114, 126
        %v4198 = vpop.permute.xlu0 %4197
        %4199 = vrot.lane.b32.xlu0 %v4115, 126
        %v4200 = vpop.permute.xlu0 %4199
        %4201 = vrot.lane.b32.xlu0 %v4116, 126
        %v4202 = vpop.permute.xlu0 %4201
        %4203 = vrot.lane.b32.xlu0 %v4117, 126
        %v4204 = vpop.permute.xlu0 %4203
        %4205 = vrot.lane.b32.xlu0 %v4118, 126
        %v4206 = vpop.permute.xlu0 %4205
        %4207 = vrot.lane.b32.xlu0 %v4119, 126
        %v4208 = vpop.permute.xlu0 %4207
        %4209 = vrot.lane.b32.xlu0 %v4120, 126
        %v4210 = vpop.permute.xlu0 %4209
        %4211 = vrot.lane.b32.xlu0 %v4121, 126
        %v4212 = vpop.permute.xlu0 %4211
        %4213 = vrot.lane.b32.xlu0 %v4122, 126
        %v4214 = vpop.permute.xlu0 %4213
        %4215 = vrot.lane.b32.xlu0 %v4123, 126
        %v4216 = vpop.permute.xlu0 %4215
        %4217 = vrot.lane.b32.xlu0 %v4124, 126
        %v4218 = vpop.permute.xlu0 %4217
        %4219 = vrot.lane.b32.xlu0 %v4125, 126
        %v4220 = vpop.permute.xlu0 %4219
        %4221 = vrot.lane.b32.xlu0 %v4126, 126
        %v4222 = vpop.permute.xlu0 %4221
        %4239 = vrot.lane.b32.xlu0 %v4111, 125
        %v4240 = vpop.permute.xlu0 %4239
        %4241 = vrot.lane.b32.xlu0 %v4112, 125
        %v4242 = vpop.permute.xlu0 %4241
        %4243 = vrot.lane.b32.xlu0 %v4113, 125
        %v4244 = vpop.permute.xlu0 %4243
        %4245 = vrot.lane.b32.xlu0 %v4114, 125
        %v4246 = vpop.permute.xlu0 %4245
        %4247 = vrot.lane.b32.xlu0 %v4115, 125
        %v4248 = vpop.permute.xlu0 %4247
        %4249 = vrot.lane.b32.xlu0 %v4116, 125
        %v4250 = vpop.permute.xlu0 %4249
        %4251 = vrot.lane.b32.xlu0 %v4117, 125
        %v4252 = vpop.permute.xlu0 %4251
        %4253 = vrot.lane.b32.xlu0 %v4118, 125
        %v4254 = vpop.permute.xlu0 %4253
        %4255 = vrot.lane.b32.xlu0 %v4119, 125
        %v4256 = vpop.permute.xlu0 %4255
        %4257 = vrot.lane.b32.xlu0 %v4120, 125
        %v4258 = vpop.permute.xlu0 %4257
        %4259 = vrot.lane.b32.xlu0 %v4121, 125
        %v4260 = vpop.permute.xlu0 %4259
        %4261 = vrot.lane.b32.xlu0 %v4122, 125
        %v4262 = vpop.permute.xlu0 %4261
        %4263 = vrot.lane.b32.xlu0 %v4123, 125
        %v4264 = vpop.permute.xlu0 %4263
        %4265 = vrot.lane.b32.xlu0 %v4124, 125
        %v4266 = vpop.permute.xlu0 %4265
        %4267 = vrot.lane.b32.xlu0 %v4125, 125
        %v4268 = vpop.permute.xlu0 %4267
        %4269 = vrot.lane.b32.xlu0 %v4126, 125
        %v4270 = vpop.permute.xlu0 %4269
        %4287 = vrot.lane.b32.xlu0 %v4111, 124
        %v4288 = vpop.permute.xlu0 %4287
        %4289 = vrot.lane.b32.xlu0 %v4112, 124
        %v4290 = vpop.permute.xlu0 %4289
        %4291 = vrot.lane.b32.xlu0 %v4113, 124
        %v4292 = vpop.permute.xlu0 %4291
        %4293 = vrot.lane.b32.xlu0 %v4114, 124
        %v4294 = vpop.permute.xlu0 %4293
        %4295 = vrot.lane.b32.xlu0 %v4115, 124
        %v4296 = vpop.permute.xlu0 %4295
        %4297 = vrot.lane.b32.xlu0 %v4116, 124
        %v4298 = vpop.permute.xlu0 %4297
        %4299 = vrot.lane.b32.xlu0 %v4117, 124
        %v4300 = vpop.permute.xlu0 %4299
        %4301 = vrot.lane.b32.xlu0 %v4118, 124
        %v4302 = vpop.permute.xlu0 %4301
        %4303 = vrot.lane.b32.xlu0 %v4119, 124
        %v4304 = vpop.permute.xlu0 %4303
        %4305 = vrot.lane.b32.xlu0 %v4120, 124
        %v4306 = vpop.permute.xlu0 %4305
        %4307 = vrot.lane.b32.xlu0 %v4121, 124
        %v4308 = vpop.permute.xlu0 %4307
        %4309 = vrot.lane.b32.xlu0 %v4122, 124
        %v4310 = vpop.permute.xlu0 %4309
        %4311 = vrot.lane.b32.xlu0 %v4123, 124
        %v4312 = vpop.permute.xlu0 %4311
        %4313 = vrot.lane.b32.xlu0 %v4124, 124
        %v4314 = vpop.permute.xlu0 %4313
        %4315 = vrot.lane.b32.xlu0 %v4125, 124
        %v4316 = vpop.permute.xlu0 %4315
        %4317 = vrot.lane.b32.xlu0 %v4126, 124
        %v4318 = vpop.permute.xlu0 %4317
        %4335 = vrot.lane.b32.xlu0 %v4111, 123
        %v4336 = vpop.permute.xlu0 %4335
        %4337 = vrot.lane.b32.xlu0 %v4112, 123
        %v4338 = vpop.permute.xlu0 %4337
        %4339 = vrot.lane.b32.xlu0 %v4113, 123
        %v4340 = vpop.permute.xlu0 %4339
        %4341 = vrot.lane.b32.xlu0 %v4114, 123
        %v4342 = vpop.permute.xlu0 %4341
        %4343 = vrot.lane.b32.xlu0 %v4115, 123
        %v4344 = vpop.permute.xlu0 %4343
        %4345 = vrot.lane.b32.xlu0 %v4116, 123
        %v4346 = vpop.permute.xlu0 %4345
        %4347 = vrot.lane.b32.xlu0 %v4117, 123
        %v4348 = vpop.permute.xlu0 %4347
        %4349 = vrot.lane.b32.xlu0 %v4118, 123
        %v4350 = vpop.permute.xlu0 %4349
        %4351 = vrot.lane.b32.xlu0 %v4119, 123
        %v4352 = vpop.permute.xlu0 %4351
        %4353 = vrot.lane.b32.xlu0 %v4120, 123
        %v4354 = vpop.permute.xlu0 %4353
        %4355 = vrot.lane.b32.xlu0 %v4121, 123
        %v4356 = vpop.permute.xlu0 %4355
        %4357 = vrot.lane.b32.xlu0 %v4122, 123
        %v4358 = vpop.permute.xlu0 %4357
        %4359 = vrot.lane.b32.xlu0 %v4123, 123
        %v4360 = vpop.permute.xlu0 %4359
        %4361 = vrot.lane.b32.xlu0 %v4124, 123
        %v4362 = vpop.permute.xlu0 %4361
        %4363 = vrot.lane.b32.xlu0 %v4125, 123
        %v4364 = vpop.permute.xlu0 %4363
        %4365 = vrot.lane.b32.xlu0 %v4126, 123
        %v4366 = vpop.permute.xlu0 %4365
        %4383 = vrot.lane.b32.xlu0 %v4111, 122
        %v4384 = vpop.permute.xlu0 %4383
        %4385 = vrot.lane.b32.xlu0 %v4112, 122
        %v4386 = vpop.permute.xlu0 %4385
        %4387 = vrot.lane.b32.xlu0 %v4113, 122
        %v4388 = vpop.permute.xlu0 %4387
        %4389 = vrot.lane.b32.xlu0 %v4114, 122
        %v4390 = vpop.permute.xlu0 %4389
        %4391 = vrot.lane.b32.xlu0 %v4115, 122
        %v4392 = vpop.permute.xlu0 %4391
        %4393 = vrot.lane.b32.xlu0 %v4116, 122
        %v4394 = vpop.permute.xlu0 %4393
        %4395 = vrot.lane.b32.xlu0 %v4117, 122
        %v4396 = vpop.permute.xlu0 %4395
        %4397 = vrot.lane.b32.xlu0 %v4118, 122
        %v4398 = vpop.permute.xlu0 %4397
        %4399 = vrot.lane.b32.xlu0 %v4119, 122
        %v4400 = vpop.permute.xlu0 %4399
        %4401 = vrot.lane.b32.xlu0 %v4120, 122
        %v4402 = vpop.permute.xlu0 %4401
        %4403 = vrot.lane.b32.xlu0 %v4121, 122
        %v4404 = vpop.permute.xlu0 %4403
        %4405 = vrot.lane.b32.xlu0 %v4122, 122
        %v4406 = vpop.permute.xlu0 %4405
        %4407 = vrot.lane.b32.xlu0 %v4123, 122
        %v4408 = vpop.permute.xlu0 %4407
        %4409 = vrot.lane.b32.xlu0 %v4124, 122
        %v4410 = vpop.permute.xlu0 %4409
        %4411 = vrot.lane.b32.xlu0 %v4125, 122
        %v4412 = vpop.permute.xlu0 %4411
        %4413 = vrot.lane.b32.xlu0 %v4126, 122
        %v4414 = vpop.permute.xlu0 %4413
        %4431 = vrot.lane.b32.xlu0 %v4111, 121
        %v4432 = vpop.permute.xlu0 %4431
        %4433 = vrot.lane.b32.xlu0 %v4112, 121
        %v4434 = vpop.permute.xlu0 %4433
        %4435 = vrot.lane.b32.xlu0 %v4113, 121
        %v4436 = vpop.permute.xlu0 %4435
        %4437 = vrot.lane.b32.xlu0 %v4114, 121
        %v4438 = vpop.permute.xlu0 %4437
        %4439 = vrot.lane.b32.xlu0 %v4115, 121
        %v4440 = vpop.permute.xlu0 %4439
        %4441 = vrot.lane.b32.xlu0 %v4116, 121
        %v4442 = vpop.permute.xlu0 %4441
        %4443 = vrot.lane.b32.xlu0 %v4117, 121
        %v4444 = vpop.permute.xlu0 %4443
        %4445 = vrot.lane.b32.xlu0 %v4118, 121
        %v4446 = vpop.permute.xlu0 %4445
        %4447 = vrot.lane.b32.xlu0 %v4119, 121
        %v4448 = vpop.permute.xlu0 %4447
        %4449 = vrot.lane.b32.xlu0 %v4120, 121
        %v4450 = vpop.permute.xlu0 %4449
        %4451 = vrot.lane.b32.xlu0 %v4121, 121
        %v4452 = vpop.permute.xlu0 %4451
        %4453 = vrot.lane.b32.xlu0 %v4122, 121
        %v4454 = vpop.permute.xlu0 %4453
        %4455 = vrot.lane.b32.xlu0 %v4123, 121
        %v4456 = vpop.permute.xlu0 %4455
        %4457 = vrot.lane.b32.xlu0 %v4124, 121
        %v4458 = vpop.permute.xlu0 %4457
        %4459 = vrot.lane.b32.xlu0 %v4125, 121
        %v4460 = vpop.permute.xlu0 %4459
        %4461 = vrot.lane.b32.xlu0 %v4126, 121
        %v4462 = vpop.permute.xlu0 %4461
        %4479 = vrot.lane.b32.xlu0 %v4111, 120
        %v4480 = vpop.permute.xlu0 %4479
        %4481 = vrot.lane.b32.xlu0 %v4112, 120
        %v4482 = vpop.permute.xlu0 %4481
        %4483 = vrot.lane.b32.xlu0 %v4113, 120
        %v4484 = vpop.permute.xlu0 %4483
        %4485 = vrot.lane.b32.xlu0 %v4114, 120
        %v4486 = vpop.permute.xlu0 %4485
        %4487 = vrot.lane.b32.xlu0 %v4115, 120
        %v4488 = vpop.permute.xlu0 %4487
        %4489 = vrot.lane.b32.xlu0 %v4116, 120
        %v4490 = vpop.permute.xlu0 %4489
        %4491 = vrot.lane.b32.xlu0 %v4117, 120
        %v4492 = vpop.permute.xlu0 %4491
        %4493 = vrot.lane.b32.xlu0 %v4118, 120
        %v4494 = vpop.permute.xlu0 %4493
        %4495 = vrot.lane.b32.xlu0 %v4119, 120
        %v4496 = vpop.permute.xlu0 %4495
        %4497 = vrot.lane.b32.xlu0 %v4120, 120
        %v4498 = vpop.permute.xlu0 %4497
        %4499 = vrot.lane.b32.xlu0 %v4121, 120
        %v4500 = vpop.permute.xlu0 %4499
        %4501 = vrot.lane.b32.xlu0 %v4122, 120
        %v4502 = vpop.permute.xlu0 %4501
        %4503 = vrot.lane.b32.xlu0 %v4123, 120
        %v4504 = vpop.permute.xlu0 %4503
        %4505 = vrot.lane.b32.xlu0 %v4124, 120
        %v4506 = vpop.permute.xlu0 %4505
        %4507 = vrot.lane.b32.xlu0 %v4125, 120
        %v4508 = vpop.permute.xlu0 %4507
        %4509 = vrot.lane.b32.xlu0 %v4126, 120
        %v4510 = vpop.permute.xlu0 %4509
        %v4527 = vld [vmem:[%s16] sm:$0xff]
        %v4528 = vld [vmem:[%s16 + $0x8] sm:$0xff]
        %v4529 = vld [vmem:[%s16 + $0x10] sm:$0xff]
        %v4530 = vld [vmem:[%s16 + $0x18] sm:$0xff]
        %v4531 = vld [vmem:[%s16 + $0x20] sm:$0xff]
        %v4532 = vld [vmem:[%s16 + $0x28] sm:$0xff]
        %v4533 = vld [vmem:[%s16 + $0x30] sm:$0xff]
        %v4534 = vld [vmem:[%s16 + $0x38] sm:$0xff]
        %v4535 = vld [vmem:[%s16 + $0x40] sm:$0xff]
        %v4536 = vld [vmem:[%s16 + $0x48] sm:$0xff]
        %v4537 = vld [vmem:[%s16 + $0x50] sm:$0xff]
        %v4538 = vld [vmem:[%s16 + $0x58] sm:$0xff]
        %v4539 = vld [vmem:[%s16 + $0x60] sm:$0xff]
        %v4540 = vld [vmem:[%s16 + $0x68] sm:$0xff]
        %v4541 = vld [vmem:[%s16 + $0x70] sm:$0xff]
        %v4542 = vld [vmem:[%s16 + $0x78] sm:$0xff]
        %v4543 = vld [vmem:[%s16 + $0x80] sm:$0xff]
        %v4544 = vld [vmem:[%s16 + $0x88] sm:$0xff]
        %v4545 = vld [vmem:[%s16 + $0x90] sm:$0xff]
        %v4546 = vld [vmem:[%s16 + $0x98] sm:$0xff]
        %v4547 = vld [vmem:[%s16 + $0xa0] sm:$0xff]
        %v4548 = vld [vmem:[%s16 + $0xa8] sm:$0xff]
        %v4549 = vld [vmem:[%s16 + $0xb0] sm:$0xff]
        %v4550 = vld [vmem:[%s16 + $0xb8] sm:$0xff]
        %v4551 = vld [vmem:[%s16 + $0xc0] sm:$0xff]
        %v4552 = vld [vmem:[%s16 + $0xc8] sm:$0xff]
        %v4553 = vld [vmem:[%s16 + $0xd0] sm:$0xff]
        %v4554 = vld [vmem:[%s16 + $0xd8] sm:$0xff]
        %v4555 = vld [vmem:[%s16 + $0xe0] sm:$0xff]
        %v4556 = vld [vmem:[%s16 + $0xe8] sm:$0xff]
        %v4557 = vld [vmem:[%s16 + $0xf0] sm:$0xff]
        %v4558 = vld [vmem:[%s16 + $0xf8] sm:$0xff]
        %v4559 = vld [vmem:[%s16 + $0x100] sm:$0xff]
        %v4560 = vld [vmem:[%s16 + $0x108] sm:$0xff]
        %v4561 = vld [vmem:[%s16 + $0x110] sm:$0xff]
        %v4562 = vld [vmem:[%s16 + $0x118] sm:$0xff]
        %v4563 = vld [vmem:[%s16 + $0x120] sm:$0xff]
        %v4564 = vld [vmem:[%s16 + $0x128] sm:$0xff]
        %v4565 = vld [vmem:[%s16 + $0x130] sm:$0xff]
        %v4566 = vld [vmem:[%s16 + $0x138] sm:$0xff]
        %v4567 = vld [vmem:[%s16 + $0x140] sm:$0xff]
        %v4568 = vld [vmem:[%s16 + $0x148] sm:$0xff]
        %v4569 = vld [vmem:[%s16 + $0x150] sm:$0xff]
        %v4570 = vld [vmem:[%s16 + $0x158] sm:$0xff]
        %v4571 = vld [vmem:[%s16 + $0x160] sm:$0xff]
        %v4572 = vld [vmem:[%s16 + $0x168] sm:$0xff]
        %v4573 = vld [vmem:[%s16 + $0x170] sm:$0xff]
        %v4574 = vld [vmem:[%s16 + $0x178] sm:$0xff]
        %v4575 = vld [vmem:[%s16 + $0x180] sm:$0xff]
        %v4576 = vld [vmem:[%s16 + $0x188] sm:$0xff]
        %v4577 = vld [vmem:[%s16 + $0x190] sm:$0xff]
        %v4578 = vld [vmem:[%s16 + $0x198] sm:$0xff]
        %v4579 = vld [vmem:[%s16 + $0x1a0] sm:$0xff]
        %v4580 = vld [vmem:[%s16 + $0x1a8] sm:$0xff]
        %v4581 = vld [vmem:[%s16 + $0x1b0] sm:$0xff]
        %v4582 = vld [vmem:[%s16 + $0x1b8] sm:$0xff]
        %v4583 = vld [vmem:[%s16 + $0x1c0] sm:$0xff]
        %v4584 = vld [vmem:[%s16 + $0x1c8] sm:$0xff]
        %v4585 = vld [vmem:[%s16 + $0x1d0] sm:$0xff]
        %v4586 = vld [vmem:[%s16 + $0x1d8] sm:$0xff]
        %v4587 = vld [vmem:[%s16 + $0x1e0] sm:$0xff]
        %v4588 = vld [vmem:[%s16 + $0x1e8] sm:$0xff]
        %v4589 = vld [vmem:[%s16 + $0x1f0] sm:$0xff]
        %v4590 = vld [vmem:[%s16 + $0x1f8] sm:$0xff]
        %v4591 = vld [vmem:[%s16 + $0x200] sm:$0xff]
        %v4592 = vld [vmem:[%s16 + $0x208] sm:$0xff]
        %v4593 = vld [vmem:[%s16 + $0x210] sm:$0xff]
        %v4594 = vld [vmem:[%s16 + $0x218] sm:$0xff]
        %v4595 = vld [vmem:[%s16 + $0x220] sm:$0xff]
        %v4596 = vld [vmem:[%s16 + $0x228] sm:$0xff]
        %v4597 = vld [vmem:[%s16 + $0x230] sm:$0xff]
        %v4598 = vld [vmem:[%s16 + $0x238] sm:$0xff]
        %v4599 = vld [vmem:[%s16 + $0x240] sm:$0xff]
        %v4600 = vld [vmem:[%s16 + $0x248] sm:$0xff]
        %v4601 = vld [vmem:[%s16 + $0x250] sm:$0xff]
        %v4602 = vld [vmem:[%s16 + $0x258] sm:$0xff]
        %v4603 = vld [vmem:[%s16 + $0x260] sm:$0xff]
        %v4604 = vld [vmem:[%s16 + $0x268] sm:$0xff]
        %v4605 = vld [vmem:[%s16 + $0x270] sm:$0xff]
        %v4606 = vld [vmem:[%s16 + $0x278] sm:$0xff]
        %v4607 = vld [vmem:[%s16 + $0x280] sm:$0xff]
        %v4608 = vld [vmem:[%s16 + $0x288] sm:$0xff]
        %v4609 = vld [vmem:[%s16 + $0x290] sm:$0xff]
        %v4610 = vld [vmem:[%s16 + $0x298] sm:$0xff]
        %v4611 = vld [vmem:[%s16 + $0x2a0] sm:$0xff]
        %v4612 = vld [vmem:[%s16 + $0x2a8] sm:$0xff]
        %v4613 = vld [vmem:[%s16 + $0x2b0] sm:$0xff]
        %v4614 = vld [vmem:[%s16 + $0x2b8] sm:$0xff]
        %v4615 = vld [vmem:[%s16 + $0x2c0] sm:$0xff]
        %v4616 = vld [vmem:[%s16 + $0x2c8] sm:$0xff]
        %v4617 = vld [vmem:[%s16 + $0x2d0] sm:$0xff]
        %v4618 = vld [vmem:[%s16 + $0x2d8] sm:$0xff]
        %v4619 = vld [vmem:[%s16 + $0x2e0] sm:$0xff]
        %v4620 = vld [vmem:[%s16 + $0x2e8] sm:$0xff]
        %v4621 = vld [vmem:[%s16 + $0x2f0] sm:$0xff]
        %v4622 = vld [vmem:[%s16 + $0x2f8] sm:$0xff]
        %v4623 = vld [vmem:[%s16 + $0x300] sm:$0xff]
        %v4624 = vld [vmem:[%s16 + $0x308] sm:$0xff]
        %v4625 = vld [vmem:[%s16 + $0x310] sm:$0xff]
        %v4626 = vld [vmem:[%s16 + $0x318] sm:$0xff]
        %v4627 = vld [vmem:[%s16 + $0x320] sm:$0xff]
        %v4628 = vld [vmem:[%s16 + $0x328] sm:$0xff]
        %v4629 = vld [vmem:[%s16 + $0x330] sm:$0xff]
        %v4630 = vld [vmem:[%s16 + $0x338] sm:$0xff]
        %v4631 = vld [vmem:[%s16 + $0x340] sm:$0xff]
        %v4632 = vld [vmem:[%s16 + $0x348] sm:$0xff]
        %v4633 = vld [vmem:[%s16 + $0x350] sm:$0xff]
        %v4634 = vld [vmem:[%s16 + $0x358] sm:$0xff]
        %v4635 = vld [vmem:[%s16 + $0x360] sm:$0xff]
        %v4636 = vld [vmem:[%s16 + $0x368] sm:$0xff]
        %v4637 = vld [vmem:[%s16 + $0x370] sm:$0xff]
        %v4638 = vld [vmem:[%s16 + $0x378] sm:$0xff]
        %v4639 = vld [vmem:[%s16 + $0x380] sm:$0xff]
        %v4640 = vld [vmem:[%s16 + $0x388] sm:$0xff]
        %v4641 = vld [vmem:[%s16 + $0x390] sm:$0xff]
        %v4642 = vld [vmem:[%s16 + $0x398] sm:$0xff]
        %v4643 = vld [vmem:[%s16 + $0x3a0] sm:$0xff]
        %v4644 = vld [vmem:[%s16 + $0x3a8] sm:$0xff]
        %v4645 = vld [vmem:[%s16 + $0x3b0] sm:$0xff]
        %v4646 = vld [vmem:[%s16 + $0x3b8] sm:$0xff]
        %v4647 = vld [vmem:[%s16 + $0x3c0] sm:$0xff]
        %v4648 = vld [vmem:[%s16 + $0x3c8] sm:$0xff]
        %v4649 = vld [vmem:[%s16 + $0x3d0] sm:$0xff]
        %v4650 = vld [vmem:[%s16 + $0x3d8] sm:$0xff]
        %v4651 = vld [vmem:[%s16 + $0x3e0] sm:$0xff]
        %v4652 = vld [vmem:[%s16 + $0x3e8] sm:$0xff]
        %v4653 = vld [vmem:[%s16 + $0x3f0] sm:$0xff]
        %v4654 = vld [vmem:[%s16 + $0x3f8] sm:$0xff]
        %v4655 = vld [vmem:[%s16 + $0x400] sm:$0xff]
        %v4656 = vld [vmem:[%s16 + $0x408] sm:$0xff]
        %v4657 = vld [vmem:[%s16 + $0x410] sm:$0xff]
        %v4658 = vld [vmem:[%s16 + $0x418] sm:$0xff]
        %v4659 = vld [vmem:[%s16 + $0x420] sm:$0xff]
        %v4660 = vld [vmem:[%s16 + $0x428] sm:$0xff]
        %v4661 = vld [vmem:[%s16 + $0x430] sm:$0xff]
        %v4662 = vld [vmem:[%s16 + $0x438] sm:$0xff]
        %v4663 = vld [vmem:[%s16 + $0x440] sm:$0xff]
        %v4664 = vld [vmem:[%s16 + $0x448] sm:$0xff]
        %v4665 = vld [vmem:[%s16 + $0x450] sm:$0xff]
        %v4666 = vld [vmem:[%s16 + $0x458] sm:$0xff]
        %v4667 = vld [vmem:[%s16 + $0x460] sm:$0xff]
        %v4668 = vld [vmem:[%s16 + $0x468] sm:$0xff]
        %v4669 = vld [vmem:[%s16 + $0x470] sm:$0xff]
        %v4670 = vld [vmem:[%s16 + $0x478] sm:$0xff]
        %4671 = vmatpush.msra.mxu0 %v4126
        %4672 = vmatpush.msra.mxu0 %v4125
        %4673 = vmatpush.msra.mxu0 %v4124
        %4674 = vmatpush.msra.mxu0 %v4123
        %4675 = vmatpush.msra.mxu0 %v4122
        %4676 = vmatpush.msra.mxu0 %v4121
        %4677 = vmatpush.msra.mxu0 %v4120
        %4678 = vmatpush.msra.mxu0 %v4119
        %4679 = vmatpush.msra.mxu0 %v4118
        %4680 = vmatpush.msra.mxu0 %v4117
        %4681 = vmatpush.msra.mxu0 %v4116
        %4682 = vmatpush.msra.mxu0 %v4115
        %4683 = vmatpush.msra.mxu0 %v4114
        %4684 = vmatpush.msra.mxu0 %v4113
        %4685 = vmatpush.msra.mxu0 %v4112
        %4686 = vmatpush.msra.mxu0 %v4111
        %4687 = vmatmul.f32.gmra.mxu0 %v4527
        %v4688 = vpop.f32.mrf.mxu0
        %v4689 = vadd.f32 0.0, %v4688
        %4690 = vmatmul.f32.gmra.mxu0 %v4536
        %v4691 = vpop.f32.mrf.mxu0
        %v4692 = vadd.f32 0.0, %v4691
        %4693 = vmatmul.f32.gmra.mxu0 %v4545
        %v4694 = vpop.f32.mrf.mxu0
        %v4695 = vadd.f32 0.0, %v4694
        %4696 = vmatmul.f32.gmra.mxu0 %v4554
        %v4697 = vpop.f32.mrf.mxu0
        %v4698 = vadd.f32 0.0, %v4697
        %4699 = vmatmul.f32.gmra.mxu0 %v4563
        %v4700 = vpop.f32.mrf.mxu0
        %v4701 = vadd.f32 0.0, %v4700
        %4702 = vmatmul.f32.gmra.mxu0 %v4572
        %v4703 = vpop.f32.mrf.mxu0
        %v4704 = vadd.f32 0.0, %v4703
        %4705 = vmatmul.f32.gmra.mxu0 %v4581
        %v4706 = vpop.f32.mrf.mxu0
        %v4707 = vadd.f32 0.0, %v4706
        %4708 = vmatmul.f32.gmra.mxu0 %v4590
        %v4709 = vpop.f32.mrf.mxu0
        %v4710 = vadd.f32 0.0, %v4709
        %4711 = vmatmul.f32.gmra.mxu0 %v4599
        %v4712 = vpop.f32.mrf.mxu0
        %v4713 = vadd.f32 0.0, %v4712
        %4714 = vmatmul.f32.gmra.mxu0 %v4608
        %v4715 = vpop.f32.mrf.mxu0
        %v4716 = vadd.f32 0.0, %v4715
        %4717 = vmatmul.f32.gmra.mxu0 %v4617
        %v4718 = vpop.f32.mrf.mxu0
        %v4719 = vadd.f32 0.0, %v4718
        %4720 = vmatmul.f32.gmra.mxu0 %v4626
        %v4721 = vpop.f32.mrf.mxu0
        %v4722 = vadd.f32 0.0, %v4721
        %4723 = vmatmul.f32.gmra.mxu0 %v4635
        %v4724 = vpop.f32.mrf.mxu0
        %v4725 = vadd.f32 0.0, %v4724
        %4726 = vmatmul.f32.gmra.mxu0 %v4644
        %v4727 = vpop.f32.mrf.mxu0
        %v4728 = vadd.f32 0.0, %v4727
        %4729 = vmatmul.f32.gmra.mxu0 %v4653
        %v4730 = vpop.f32.mrf.mxu0
        %v4731 = vadd.f32 0.0, %v4730
        %4732 = vmatmul.f32.gmra.mxu0 %v4662
        %v4733 = vpop.f32.mrf.mxu0
        %v4734 = vadd.f32 0.0, %v4733
        %4735 = vdwg.mxu0
        %4736 = vmatpush.msra.mxu0 %v4174
        %4737 = vmatpush.msra.mxu0 %v4172
        %4738 = vmatpush.msra.mxu0 %v4170
        %4739 = vmatpush.msra.mxu0 %v4168
        %4740 = vmatpush.msra.mxu0 %v4166
        %4741 = vmatpush.msra.mxu0 %v4164
        %4742 = vmatpush.msra.mxu0 %v4162
        %4743 = vmatpush.msra.mxu0 %v4160
        %4744 = vmatpush.msra.mxu0 %v4158
        %4745 = vmatpush.msra.mxu0 %v4156
        %4746 = vmatpush.msra.mxu0 %v4154
        %4747 = vmatpush.msra.mxu0 %v4152
        %4748 = vmatpush.msra.mxu0 %v4150
        %4749 = vmatpush.msra.mxu0 %v4148
        %4750 = vmatpush.msra.mxu0 %v4146
        %4751 = vmatpush.msra.mxu0 %v4144
        %4752 = vmatmul.f32.gmra.mxu0 %v4528
        %v4753 = vpop.f32.mrf.mxu0
        %v4754 = vadd.f32 %v4689, %v4753
        %4755 = vmatmul.f32.gmra.mxu0 %v4537
        %v4756 = vpop.f32.mrf.mxu0
        %v4757 = vadd.f32 %v4692, %v4756
        %4758 = vmatmul.f32.gmra.mxu0 %v4546
        %v4759 = vpop.f32.mrf.mxu0
        %v4760 = vadd.f32 %v4695, %v4759
        %4761 = vmatmul.f32.gmra.mxu0 %v4555
        %v4762 = vpop.f32.mrf.mxu0
        %v4763 = vadd.f32 %v4698, %v4762
        %4764 = vmatmul.f32.gmra.mxu0 %v4564
        %v4765 = vpop.f32.mrf.mxu0
        %v4766 = vadd.f32 %v4701, %v4765
        %4767 = vmatmul.f32.gmra.mxu0 %v4573
        %v4768 = vpop.f32.mrf.mxu0
        %v4769 = vadd.f32 %v4704, %v4768
        %4770 = vmatmul.f32.gmra.mxu0 %v4582
        %v4771 = vpop.f32.mrf.mxu0
        %v4772 = vadd.f32 %v4707, %v4771
        %4773 = vmatmul.f32.gmra.mxu0 %v4591
        %v4774 = vpop.f32.mrf.mxu0
        %v4775 = vadd.f32 %v4710, %v4774
        %4776 = vmatmul.f32.gmra.mxu0 %v4600
        %v4777 = vpop.f32.mrf.mxu0
        %v4778 = vadd.f32 %v4713, %v4777
        %4779 = vmatmul.f32.gmra.mxu0 %v4609
        %v4780 = vpop.f32.mrf.mxu0
        %v4781 = vadd.f32 %v4716, %v4780
        %4782 = vmatmul.f32.gmra.mxu0 %v4618
        %v4783 = vpop.f32.mrf.mxu0
        %v4784 = vadd.f32 %v4719, %v4783
        %4785 = vmatmul.f32.gmra.mxu0 %v4627
        %v4786 = vpop.f32.mrf.mxu0
        %v4787 = vadd.f32 %v4722, %v4786
        %4788 = vmatmul.f32.gmra.mxu0 %v4636
        %v4789 = vpop.f32.mrf.mxu0
        %v4790 = vadd.f32 %v4725, %v4789
        %4791 = vmatmul.f32.gmra.mxu0 %v4645
        %v4792 = vpop.f32.mrf.mxu0
        %v4793 = vadd.f32 %v4728, %v4792
        %4794 = vmatmul.f32.gmra.mxu0 %v4654
        %v4795 = vpop.f32.mrf.mxu0
        %v4796 = vadd.f32 %v4731, %v4795
        %4797 = vmatmul.f32.gmra.mxu0 %v4663
        %v4798 = vpop.f32.mrf.mxu0
        %v4799 = vadd.f32 %v4734, %v4798
        %4800 = vdwg.mxu0
        %4801 = vmatpush.msra.mxu0 %v4222
        %4802 = vmatpush.msra.mxu0 %v4220
        %4803 = vmatpush.msra.mxu0 %v4218
        %4804 = vmatpush.msra.mxu0 %v4216
        %4805 = vmatpush.msra.mxu0 %v4214
        %4806 = vmatpush.msra.mxu0 %v4212
        %4807 = vmatpush.msra.mxu0 %v4210
        %4808 = vmatpush.msra.mxu0 %v4208
        %4809 = vmatpush.msra.mxu0 %v4206
        %4810 = vmatpush.msra.mxu0 %v4204
        %4811 = vmatpush.msra.mxu0 %v4202
        %4812 = vmatpush.msra.mxu0 %v4200
        %4813 = vmatpush.msra.mxu0 %v4198
        %4814 = vmatpush.msra.mxu0 %v4196
        %4815 = vmatpush.msra.mxu0 %v4194
        %4816 = vmatpush.msra.mxu0 %v4192
        %4817 = vmatmul.f32.gmra.mxu0 %v4529
        %v4818 = vpop.f32.mrf.mxu0
        %v4819 = vadd.f32 %v4754, %v4818
        %4820 = vmatmul.f32.gmra.mxu0 %v4538
        %v4821 = vpop.f32.mrf.mxu0
        %v4822 = vadd.f32 %v4757, %v4821
        %4823 = vmatmul.f32.gmra.mxu0 %v4547
        %v4824 = vpop.f32.mrf.mxu0
        %v4825 = vadd.f32 %v4760, %v4824
        %4826 = vmatmul.f32.gmra.mxu0 %v4556
        %v4827 = vpop.f32.mrf.mxu0
        %v4828 = vadd.f32 %v4763, %v4827
        %4829 = vmatmul.f32.gmra.mxu0 %v4565
        %v4830 = vpop.f32.mrf.mxu0
        %v4831 = vadd.f32 %v4766, %v4830
        %4832 = vmatmul.f32.gmra.mxu0 %v4574
        %v4833 = vpop.f32.mrf.mxu0
        %v4834 = vadd.f32 %v4769, %v4833
        %4835 = vmatmul.f32.gmra.mxu0 %v4583
        %v4836 = vpop.f32.mrf.mxu0
        %v4837 = vadd.f32 %v4772, %v4836
        %4838 = vmatmul.f32.gmra.mxu0 %v4592
        %v4839 = vpop.f32.mrf.mxu0
        %v4840 = vadd.f32 %v4775, %v4839
        %4841 = vmatmul.f32.gmra.mxu0 %v4601
        %v4842 = vpop.f32.mrf.mxu0
        %v4843 = vadd.f32 %v4778, %v4842
        %4844 = vmatmul.f32.gmra.mxu0 %v4610
        %v4845 = vpop.f32.mrf.mxu0
        %v4846 = vadd.f32 %v4781, %v4845
        %4847 = vmatmul.f32.gmra.mxu0 %v4619
        %v4848 = vpop.f32.mrf.mxu0
        %v4849 = vadd.f32 %v4784, %v4848
        %4850 = vmatmul.f32.gmra.mxu0 %v4628
        %v4851 = vpop.f32.mrf.mxu0
        %v4852 = vadd.f32 %v4787, %v4851
        %4853 = vmatmul.f32.gmra.mxu0 %v4637
        %v4854 = vpop.f32.mrf.mxu0
        %v4855 = vadd.f32 %v4790, %v4854
        %4856 = vmatmul.f32.gmra.mxu0 %v4646
        %v4857 = vpop.f32.mrf.mxu0
        %v4858 = vadd.f32 %v4793, %v4857
        %4859 = vmatmul.f32.gmra.mxu0 %v4655
        %v4860 = vpop.f32.mrf.mxu0
        %v4861 = vadd.f32 %v4796, %v4860
        %4862 = vmatmul.f32.gmra.mxu0 %v4664
        %v4863 = vpop.f32.mrf.mxu0
        %v4864 = vadd.f32 %v4799, %v4863
        %4865 = vdwg.mxu0
        %4866 = vmatpush.msra.mxu0 %v4270
        %4867 = vmatpush.msra.mxu0 %v4268
        %4868 = vmatpush.msra.mxu0 %v4266
        %4869 = vmatpush.msra.mxu0 %v4264
        %4870 = vmatpush.msra.mxu0 %v4262
        %4871 = vmatpush.msra.mxu0 %v4260
        %4872 = vmatpush.msra.mxu0 %v4258
        %4873 = vmatpush.msra.mxu0 %v4256
        %4874 = vmatpush.msra.mxu0 %v4254
        %4875 = vmatpush.msra.mxu0 %v4252
        %4876 = vmatpush.msra.mxu0 %v4250
        %4877 = vmatpush.msra.mxu0 %v4248
        %4878 = vmatpush.msra.mxu0 %v4246
        %4879 = vmatpush.msra.mxu0 %v4244
        %4880 = vmatpush.msra.mxu0 %v4242
        %4881 = vmatpush.msra.mxu0 %v4240
        %4882 = vmatmul.f32.gmra.mxu0 %v4530
        %v4883 = vpop.f32.mrf.mxu0
        %v4884 = vadd.f32 %v4819, %v4883
        %4885 = vmatmul.f32.gmra.mxu0 %v4539
        %v4886 = vpop.f32.mrf.mxu0
        %v4887 = vadd.f32 %v4822, %v4886
        %4888 = vmatmul.f32.gmra.mxu0 %v4548
        %v4889 = vpop.f32.mrf.mxu0
        %v4890 = vadd.f32 %v4825, %v4889
        %4891 = vmatmul.f32.gmra.mxu0 %v4557
        %v4892 = vpop.f32.mrf.mxu0
        %v4893 = vadd.f32 %v4828, %v4892
        %4894 = vmatmul.f32.gmra.mxu0 %v4566
        %v4895 = vpop.f32.mrf.mxu0
        %v4896 = vadd.f32 %v4831, %v4895
        %4897 = vmatmul.f32.gmra.mxu0 %v4575
        %v4898 = vpop.f32.mrf.mxu0
        %v4899 = vadd.f32 %v4834, %v4898
        %4900 = vmatmul.f32.gmra.mxu0 %v4584
        %v4901 = vpop.f32.mrf.mxu0
        %v4902 = vadd.f32 %v4837, %v4901
        %4903 = vmatmul.f32.gmra.mxu0 %v4593
        %v4904 = vpop.f32.mrf.mxu0
        %v4905 = vadd.f32 %v4840, %v4904
        %4906 = vmatmul.f32.gmra.mxu0 %v4602
        %v4907 = vpop.f32.mrf.mxu0
        %v4908 = vadd.f32 %v4843, %v4907
        %4909 = vmatmul.f32.gmra.mxu0 %v4611
        %v4910 = vpop.f32.mrf.mxu0
        %v4911 = vadd.f32 %v4846, %v4910
        %4912 = vmatmul.f32.gmra.mxu0 %v4620
        %v4913 = vpop.f32.mrf.mxu0
        %v4914 = vadd.f32 %v4849, %v4913
        %4915 = vmatmul.f32.gmra.mxu0 %v4629
        %v4916 = vpop.f32.mrf.mxu0
        %v4917 = vadd.f32 %v4852, %v4916
        %4918 = vmatmul.f32.gmra.mxu0 %v4638
        %v4919 = vpop.f32.mrf.mxu0
        %v4920 = vadd.f32 %v4855, %v4919
        %4921 = vmatmul.f32.gmra.mxu0 %v4647
        %v4922 = vpop.f32.mrf.mxu0
        %v4923 = vadd.f32 %v4858, %v4922
        %4924 = vmatmul.f32.gmra.mxu0 %v4656
        %v4925 = vpop.f32.mrf.mxu0
        %v4926 = vadd.f32 %v4861, %v4925
        %4927 = vmatmul.f32.gmra.mxu0 %v4665
        %v4928 = vpop.f32.mrf.mxu0
        %v4929 = vadd.f32 %v4864, %v4928
        %4930 = vdwg.mxu0
        %4931 = vmatpush.msra.mxu0 %v4318
        %4932 = vmatpush.msra.mxu0 %v4316
        %4933 = vmatpush.msra.mxu0 %v4314
        %4934 = vmatpush.msra.mxu0 %v4312
        %4935 = vmatpush.msra.mxu0 %v4310
        %4936 = vmatpush.msra.mxu0 %v4308
        %4937 = vmatpush.msra.mxu0 %v4306
        %4938 = vmatpush.msra.mxu0 %v4304
        %4939 = vmatpush.msra.mxu0 %v4302
        %4940 = vmatpush.msra.mxu0 %v4300
        %4941 = vmatpush.msra.mxu0 %v4298
        %4942 = vmatpush.msra.mxu0 %v4296
        %4943 = vmatpush.msra.mxu0 %v4294
        %4944 = vmatpush.msra.mxu0 %v4292
        %4945 = vmatpush.msra.mxu0 %v4290
        %4946 = vmatpush.msra.mxu0 %v4288
        %4947 = vmatmul.f32.gmra.mxu0 %v4531
        %v4948 = vpop.f32.mrf.mxu0
        %v4949 = vadd.f32 %v4884, %v4948
        %4950 = vmatmul.f32.gmra.mxu0 %v4540
        %v4951 = vpop.f32.mrf.mxu0
        %v4952 = vadd.f32 %v4887, %v4951
        %4953 = vmatmul.f32.gmra.mxu0 %v4549
        %v4954 = vpop.f32.mrf.mxu0
        %v4955 = vadd.f32 %v4890, %v4954
        %4956 = vmatmul.f32.gmra.mxu0 %v4558
        %v4957 = vpop.f32.mrf.mxu0
        %v4958 = vadd.f32 %v4893, %v4957
        %4959 = vmatmul.f32.gmra.mxu0 %v4567
        %v4960 = vpop.f32.mrf.mxu0
        %v4961 = vadd.f32 %v4896, %v4960
        %4962 = vmatmul.f32.gmra.mxu0 %v4576
        %v4963 = vpop.f32.mrf.mxu0
        %v4964 = vadd.f32 %v4899, %v4963
        %4965 = vmatmul.f32.gmra.mxu0 %v4585
        %v4966 = vpop.f32.mrf.mxu0
        %v4967 = vadd.f32 %v4902, %v4966
        %4968 = vmatmul.f32.gmra.mxu0 %v4594
        %v4969 = vpop.f32.mrf.mxu0
        %v4970 = vadd.f32 %v4905, %v4969
        %4971 = vmatmul.f32.gmra.mxu0 %v4603
        %v4972 = vpop.f32.mrf.mxu0
        %v4973 = vadd.f32 %v4908, %v4972
        %4974 = vmatmul.f32.gmra.mxu0 %v4612
        %v4975 = vpop.f32.mrf.mxu0
        %v4976 = vadd.f32 %v4911, %v4975
        %4977 = vmatmul.f32.gmra.mxu0 %v4621
        %v4978 = vpop.f32.mrf.mxu0
        %v4979 = vadd.f32 %v4914, %v4978
        %4980 = vmatmul.f32.gmra.mxu0 %v4630
        %v4981 = vpop.f32.mrf.mxu0
        %v4982 = vadd.f32 %v4917, %v4981
        %4983 = vmatmul.f32.gmra.mxu0 %v4639
        %v4984 = vpop.f32.mrf.mxu0
        %v4985 = vadd.f32 %v4920, %v4984
        %4986 = vmatmul.f32.gmra.mxu0 %v4648
        %v4987 = vpop.f32.mrf.mxu0
        %v4988 = vadd.f32 %v4923, %v4987
        %4989 = vmatmul.f32.gmra.mxu0 %v4657
        %v4990 = vpop.f32.mrf.mxu0
        %v4991 = vadd.f32 %v4926, %v4990
        %4992 = vmatmul.f32.gmra.mxu0 %v4666
        %v4993 = vpop.f32.mrf.mxu0
        %v4994 = vadd.f32 %v4929, %v4993
        %4995 = vdwg.mxu0
        %4996 = vmatpush.msra.mxu0 %v4366
        %4997 = vmatpush.msra.mxu0 %v4364
        %4998 = vmatpush.msra.mxu0 %v4362
        %4999 = vmatpush.msra.mxu0 %v4360
        %5000 = vmatpush.msra.mxu0 %v4358
        %5001 = vmatpush.msra.mxu0 %v4356
        %5002 = vmatpush.msra.mxu0 %v4354
        %5003 = vmatpush.msra.mxu0 %v4352
        %5004 = vmatpush.msra.mxu0 %v4350
        %5005 = vmatpush.msra.mxu0 %v4348
        %5006 = vmatpush.msra.mxu0 %v4346
        %5007 = vmatpush.msra.mxu0 %v4344
        %5008 = vmatpush.msra.mxu0 %v4342
        %5009 = vmatpush.msra.mxu0 %v4340
        %5010 = vmatpush.msra.mxu0 %v4338
        %5011 = vmatpush.msra.mxu0 %v4336
        %5012 = vmatmul.f32.gmra.mxu0 %v4532
        %v5013 = vpop.f32.mrf.mxu0
        %v5014 = vadd.f32 %v4949, %v5013
        %5015 = vmatmul.f32.gmra.mxu0 %v4541
        %v5016 = vpop.f32.mrf.mxu0
        %v5017 = vadd.f32 %v4952, %v5016
        %5018 = vmatmul.f32.gmra.mxu0 %v4550
        %v5019 = vpop.f32.mrf.mxu0
        %v5020 = vadd.f32 %v4955, %v5019
        %5021 = vmatmul.f32.gmra.mxu0 %v4559
        %v5022 = vpop.f32.mrf.mxu0
        %v5023 = vadd.f32 %v4958, %v5022
        %5024 = vmatmul.f32.gmra.mxu0 %v4568
        %v5025 = vpop.f32.mrf.mxu0
        %v5026 = vadd.f32 %v4961, %v5025
        %5027 = vmatmul.f32.gmra.mxu0 %v4577
        %v5028 = vpop.f32.mrf.mxu0
        %v5029 = vadd.f32 %v4964, %v5028
        %5030 = vmatmul.f32.gmra.mxu0 %v4586
        %v5031 = vpop.f32.mrf.mxu0
        %v5032 = vadd.f32 %v4967, %v5031
        %5033 = vmatmul.f32.gmra.mxu0 %v4595
        %v5034 = vpop.f32.mrf.mxu0
        %v5035 = vadd.f32 %v4970, %v5034
        %5036 = vmatmul.f32.gmra.mxu0 %v4604
        %v5037 = vpop.f32.mrf.mxu0
        %v5038 = vadd.f32 %v4973, %v5037
        %5039 = vmatmul.f32.gmra.mxu0 %v4613
        %v5040 = vpop.f32.mrf.mxu0
        %v5041 = vadd.f32 %v4976, %v5040
        %5042 = vmatmul.f32.gmra.mxu0 %v4622
        %v5043 = vpop.f32.mrf.mxu0
        %v5044 = vadd.f32 %v4979, %v5043
        %5045 = vmatmul.f32.gmra.mxu0 %v4631
        %v5046 = vpop.f32.mrf.mxu0
        %v5047 = vadd.f32 %v4982, %v5046
        %5048 = vmatmul.f32.gmra.mxu0 %v4640
        %v5049 = vpop.f32.mrf.mxu0
        %v5050 = vadd.f32 %v4985, %v5049
        %5051 = vmatmul.f32.gmra.mxu0 %v4649
        %v5052 = vpop.f32.mrf.mxu0
        %v5053 = vadd.f32 %v4988, %v5052
        %5054 = vmatmul.f32.gmra.mxu0 %v4658
        %v5055 = vpop.f32.mrf.mxu0
        %v5056 = vadd.f32 %v4991, %v5055
        %5057 = vmatmul.f32.gmra.mxu0 %v4667
        %v5058 = vpop.f32.mrf.mxu0
        %v5059 = vadd.f32 %v4994, %v5058
        %5060 = vdwg.mxu0
        %5061 = vmatpush.msra.mxu0 %v4414
        %5062 = vmatpush.msra.mxu0 %v4412
        %5063 = vmatpush.msra.mxu0 %v4410
        %5064 = vmatpush.msra.mxu0 %v4408
        %5065 = vmatpush.msra.mxu0 %v4406
        %5066 = vmatpush.msra.mxu0 %v4404
        %5067 = vmatpush.msra.mxu0 %v4402
        %5068 = vmatpush.msra.mxu0 %v4400
        %5069 = vmatpush.msra.mxu0 %v4398
        %5070 = vmatpush.msra.mxu0 %v4396
        %5071 = vmatpush.msra.mxu0 %v4394
        %5072 = vmatpush.msra.mxu0 %v4392
        %5073 = vmatpush.msra.mxu0 %v4390
        %5074 = vmatpush.msra.mxu0 %v4388
        %5075 = vmatpush.msra.mxu0 %v4386
        %5076 = vmatpush.msra.mxu0 %v4384
        %5077 = vmatmul.f32.gmra.mxu0 %v4533
        %v5078 = vpop.f32.mrf.mxu0
        %v5079 = vadd.f32 %v5014, %v5078
        %5080 = vmatmul.f32.gmra.mxu0 %v4542
        %v5081 = vpop.f32.mrf.mxu0
        %v5082 = vadd.f32 %v5017, %v5081
        %5083 = vmatmul.f32.gmra.mxu0 %v4551
        %v5084 = vpop.f32.mrf.mxu0
        %v5085 = vadd.f32 %v5020, %v5084
        %5086 = vmatmul.f32.gmra.mxu0 %v4560
        %v5087 = vpop.f32.mrf.mxu0
        %v5088 = vadd.f32 %v5023, %v5087
        %5089 = vmatmul.f32.gmra.mxu0 %v4569
        %v5090 = vpop.f32.mrf.mxu0
        %v5091 = vadd.f32 %v5026, %v5090
        %5092 = vmatmul.f32.gmra.mxu0 %v4578
        %v5093 = vpop.f32.mrf.mxu0
        %v5094 = vadd.f32 %v5029, %v5093
        %5095 = vmatmul.f32.gmra.mxu0 %v4587
        %v5096 = vpop.f32.mrf.mxu0
        %v5097 = vadd.f32 %v5032, %v5096
        %5098 = vmatmul.f32.gmra.mxu0 %v4596
        %v5099 = vpop.f32.mrf.mxu0
        %v5100 = vadd.f32 %v5035, %v5099
        %5101 = vmatmul.f32.gmra.mxu0 %v4605
        %v5102 = vpop.f32.mrf.mxu0
        %v5103 = vadd.f32 %v5038, %v5102
        %5104 = vmatmul.f32.gmra.mxu0 %v4614
        %v5105 = vpop.f32.mrf.mxu0
        %v5106 = vadd.f32 %v5041, %v5105
        %5107 = vmatmul.f32.gmra.mxu0 %v4623
        %v5108 = vpop.f32.mrf.mxu0
        %v5109 = vadd.f32 %v5044, %v5108
        %5110 = vmatmul.f32.gmra.mxu0 %v4632
        %v5111 = vpop.f32.mrf.mxu0
        %v5112 = vadd.f32 %v5047, %v5111
        %5113 = vmatmul.f32.gmra.mxu0 %v4641
        %v5114 = vpop.f32.mrf.mxu0
        %v5115 = vadd.f32 %v5050, %v5114
        %5116 = vmatmul.f32.gmra.mxu0 %v4650
        %v5117 = vpop.f32.mrf.mxu0
        %v5118 = vadd.f32 %v5053, %v5117
        %5119 = vmatmul.f32.gmra.mxu0 %v4659
        %v5120 = vpop.f32.mrf.mxu0
        %v5121 = vadd.f32 %v5056, %v5120
        %5122 = vmatmul.f32.gmra.mxu0 %v4668
        %v5123 = vpop.f32.mrf.mxu0
        %v5124 = vadd.f32 %v5059, %v5123
        %5125 = vdwg.mxu0
        %5126 = vmatpush.msra.mxu0 %v4462
        %5127 = vmatpush.msra.mxu0 %v4460
        %5128 = vmatpush.msra.mxu0 %v4458
        %5129 = vmatpush.msra.mxu0 %v4456
        %5130 = vmatpush.msra.mxu0 %v4454
        %5131 = vmatpush.msra.mxu0 %v4452
        %5132 = vmatpush.msra.mxu0 %v4450
        %5133 = vmatpush.msra.mxu0 %v4448
        %5134 = vmatpush.msra.mxu0 %v4446
        %5135 = vmatpush.msra.mxu0 %v4444
        %5136 = vmatpush.msra.mxu0 %v4442
        %5137 = vmatpush.msra.mxu0 %v4440
        %5138 = vmatpush.msra.mxu0 %v4438
        %5139 = vmatpush.msra.mxu0 %v4436
        %5140 = vmatpush.msra.mxu0 %v4434
        %5141 = vmatpush.msra.mxu0 %v4432
        %5142 = vmatmul.f32.gmra.mxu0 %v4534
        %v5143 = vpop.f32.mrf.mxu0
        %v5144 = vadd.f32 %v5079, %v5143
        %5145 = vmatmul.f32.gmra.mxu0 %v4543
        %v5146 = vpop.f32.mrf.mxu0
        %v5147 = vadd.f32 %v5082, %v5146
        %5148 = vmatmul.f32.gmra.mxu0 %v4552
        %v5149 = vpop.f32.mrf.mxu0
        %v5150 = vadd.f32 %v5085, %v5149
        %5151 = vmatmul.f32.gmra.mxu0 %v4561
        %v5152 = vpop.f32.mrf.mxu0
        %v5153 = vadd.f32 %v5088, %v5152
        %5154 = vmatmul.f32.gmra.mxu0 %v4570
        %v5155 = vpop.f32.mrf.mxu0
        %v5156 = vadd.f32 %v5091, %v5155
        %5157 = vmatmul.f32.gmra.mxu0 %v4579
        %v5158 = vpop.f32.mrf.mxu0
        %v5159 = vadd.f32 %v5094, %v5158
        %5160 = vmatmul.f32.gmra.mxu0 %v4588
        %v5161 = vpop.f32.mrf.mxu0
        %v5162 = vadd.f32 %v5097, %v5161
        %5163 = vmatmul.f32.gmra.mxu0 %v4597
        %v5164 = vpop.f32.mrf.mxu0
        %v5165 = vadd.f32 %v5100, %v5164
        %5166 = vmatmul.f32.gmra.mxu0 %v4606
        %v5167 = vpop.f32.mrf.mxu0
        %v5168 = vadd.f32 %v5103, %v5167
        %5169 = vmatmul.f32.gmra.mxu0 %v4615
        %v5170 = vpop.f32.mrf.mxu0
        %v5171 = vadd.f32 %v5106, %v5170
        %5172 = vmatmul.f32.gmra.mxu0 %v4624
        %v5173 = vpop.f32.mrf.mxu0
        %v5174 = vadd.f32 %v5109, %v5173
        %5175 = vmatmul.f32.gmra.mxu0 %v4633
        %v5176 = vpop.f32.mrf.mxu0
        %v5177 = vadd.f32 %v5112, %v5176
        %5178 = vmatmul.f32.gmra.mxu0 %v4642
        %v5179 = vpop.f32.mrf.mxu0
        %v5180 = vadd.f32 %v5115, %v5179
        %5181 = vmatmul.f32.gmra.mxu0 %v4651
        %v5182 = vpop.f32.mrf.mxu0
        %v5183 = vadd.f32 %v5118, %v5182
        %5184 = vmatmul.f32.gmra.mxu0 %v4660
        %v5185 = vpop.f32.mrf.mxu0
        %v5186 = vadd.f32 %v5121, %v5185
        %5187 = vmatmul.f32.gmra.mxu0 %v4669
        %v5188 = vpop.f32.mrf.mxu0
        %v5189 = vadd.f32 %v5124, %v5188
        %5190 = vdwg.mxu0
        %5191 = vmatpush.msra.mxu0 %v4510
        %5192 = vmatpush.msra.mxu0 %v4508
        %5193 = vmatpush.msra.mxu0 %v4506
        %5194 = vmatpush.msra.mxu0 %v4504
        %5195 = vmatpush.msra.mxu0 %v4502
        %5196 = vmatpush.msra.mxu0 %v4500
        %5197 = vmatpush.msra.mxu0 %v4498
        %5198 = vmatpush.msra.mxu0 %v4496
        %5199 = vmatpush.msra.mxu0 %v4494
        %5200 = vmatpush.msra.mxu0 %v4492
        %5201 = vmatpush.msra.mxu0 %v4490
        %5202 = vmatpush.msra.mxu0 %v4488
        %5203 = vmatpush.msra.mxu0 %v4486
        %5204 = vmatpush.msra.mxu0 %v4484
        %5205 = vmatpush.msra.mxu0 %v4482
        %5206 = vmatpush.msra.mxu0 %v4480
        %5207 = vmatmul.f32.gmra.mxu0 %v4535
        %v5208 = vpop.f32.mrf.mxu0
        %v5209 = vadd.f32 %v5144, %v5208
        %5210 = vmatmul.f32.gmra.mxu0 %v4544
        %v5211 = vpop.f32.mrf.mxu0
        %v5212 = vadd.f32 %v5147, %v5211
        %5213 = vmatmul.f32.gmra.mxu0 %v4553
        %v5214 = vpop.f32.mrf.mxu0
        %v5215 = vadd.f32 %v5150, %v5214
        %5216 = vmatmul.f32.gmra.mxu0 %v4562
        %v5217 = vpop.f32.mrf.mxu0
        %v5218 = vadd.f32 %v5153, %v5217
        %5219 = vmatmul.f32.gmra.mxu0 %v4571
        %v5220 = vpop.f32.mrf.mxu0
        %v5221 = vadd.f32 %v5156, %v5220
        %5222 = vmatmul.f32.gmra.mxu0 %v4580
        %v5223 = vpop.f32.mrf.mxu0
        %v5224 = vadd.f32 %v5159, %v5223
        %5225 = vmatmul.f32.gmra.mxu0 %v4589
        %v5226 = vpop.f32.mrf.mxu0
        %v5227 = vadd.f32 %v5162, %v5226
        %5228 = vmatmul.f32.gmra.mxu0 %v4598
        %v5229 = vpop.f32.mrf.mxu0
        %v5230 = vadd.f32 %v5165, %v5229
        %5231 = vmatmul.f32.gmra.mxu0 %v4607
        %v5232 = vpop.f32.mrf.mxu0
        %v5233 = vadd.f32 %v5168, %v5232
        %5234 = vmatmul.f32.gmra.mxu0 %v4616
        %v5235 = vpop.f32.mrf.mxu0
        %v5236 = vadd.f32 %v5171, %v5235
        %5237 = vmatmul.f32.gmra.mxu0 %v4625
        %v5238 = vpop.f32.mrf.mxu0
        %v5239 = vadd.f32 %v5174, %v5238
        %5240 = vmatmul.f32.gmra.mxu0 %v4634
        %v5241 = vpop.f32.mrf.mxu0
        %v5242 = vadd.f32 %v5177, %v5241
        %5243 = vmatmul.f32.gmra.mxu0 %v4643
        %v5244 = vpop.f32.mrf.mxu0
        %v5245 = vadd.f32 %v5180, %v5244
        %5246 = vmatmul.f32.gmra.mxu0 %v4652
        %v5247 = vpop.f32.mrf.mxu0
        %v5248 = vadd.f32 %v5183, %v5247
        %5249 = vmatmul.f32.gmra.mxu0 %v4661
        %v5250 = vpop.f32.mrf.mxu0
        %v5251 = vadd.f32 %v5186, %v5250
        %5252 = vmatmul.f32.gmra.mxu0 %v4670
        %v5253 = vpop.f32.mrf.mxu0
        %v5254 = vadd.f32 %v5189, %v5253
        %5255 = vdwg.mxu0
        %v5256 = vld [vmem:[%s17] sm:$0xff]
        %v5257 = vld [vmem:[%s17 + $0x8] sm:$0xff]
        %v5258 = vld [vmem:[%s17 + $0x10] sm:$0xff]
        %v5259 = vld [vmem:[%s17 + $0x18] sm:$0xff]
        %v5260 = vld [vmem:[%s17 + $0x20] sm:$0xff]
        %v5261 = vld [vmem:[%s17 + $0x28] sm:$0xff]
        %v5262 = vld [vmem:[%s17 + $0x30] sm:$0xff]
        %v5263 = vld [vmem:[%s17 + $0x38] sm:$0xff]
        %v5264 = vld [vmem:[%s17 + $0x40] sm:$0xff]
        %v5265 = vld [vmem:[%s17 + $0x48] sm:$0xff]
        %v5266 = vld [vmem:[%s17 + $0x50] sm:$0xff]
        %v5267 = vld [vmem:[%s17 + $0x58] sm:$0xff]
        %v5268 = vld [vmem:[%s17 + $0x60] sm:$0xff]
        %v5269 = vld [vmem:[%s17 + $0x68] sm:$0xff]
        %v5270 = vld [vmem:[%s17 + $0x70] sm:$0xff]
        %v5271 = vld [vmem:[%s17 + $0x78] sm:$0xff]
        %5273 = vset.pattern.permute.xlu0 0
        %5274 = vperm.xlu0 %5273, %v5256
        %v5275 = vpop.permute.xlu0 %5274
        %5278 = vset.pattern.permute.xlu0 0
        %5279 = vperm.xlu0 %5278, %v5257
        %v5280 = vpop.permute.xlu0 %5279
        %5283 = vset.pattern.permute.xlu0 0
        %5284 = vperm.xlu0 %5283, %v5258
        %v5285 = vpop.permute.xlu0 %5284
        %5288 = vset.pattern.permute.xlu0 0
        %5289 = vperm.xlu0 %5288, %v5259
        %v5290 = vpop.permute.xlu0 %5289
        %5293 = vset.pattern.permute.xlu0 0
        %5294 = vperm.xlu0 %5293, %v5260
        %v5295 = vpop.permute.xlu0 %5294
        %5298 = vset.pattern.permute.xlu0 0
        %5299 = vperm.xlu0 %5298, %v5261
        %v5300 = vpop.permute.xlu0 %5299
        %5303 = vset.pattern.permute.xlu0 0
        %5304 = vperm.xlu0 %5303, %v5262
        %v5305 = vpop.permute.xlu0 %5304
        %5308 = vset.pattern.permute.xlu0 0
        %5309 = vperm.xlu0 %5308, %v5263
        %v5310 = vpop.permute.xlu0 %5309
        %5313 = vset.pattern.permute.xlu0 0
        %5314 = vperm.xlu0 %5313, %v5264
        %v5315 = vpop.permute.xlu0 %5314
        %5318 = vset.pattern.permute.xlu0 0
        %5319 = vperm.xlu0 %5318, %v5265
        %v5320 = vpop.permute.xlu0 %5319
        %5323 = vset.pattern.permute.xlu0 0
        %5324 = vperm.xlu0 %5323, %v5266
        %v5325 = vpop.permute.xlu0 %5324
        %5328 = vset.pattern.permute.xlu0 0
        %5329 = vperm.xlu0 %5328, %v5267
        %v5330 = vpop.permute.xlu0 %5329
        %5333 = vset.pattern.permute.xlu0 0
        %5334 = vperm.xlu0 %5333, %v5268
        %v5335 = vpop.permute.xlu0 %5334
        %5338 = vset.pattern.permute.xlu0 0
        %5339 = vperm.xlu0 %5338, %v5269
        %v5340 = vpop.permute.xlu0 %5339
        %5343 = vset.pattern.permute.xlu0 0
        %5344 = vperm.xlu0 %5343, %v5270
        %v5345 = vpop.permute.xlu0 %5344
        %5348 = vset.pattern.permute.xlu0 0
        %5349 = vperm.xlu0 %5348, %v5271
        %v5350 = vpop.permute.xlu0 %5349
        %v5352 = vmul.f32 %v5209, %v5275
        %v5353 = vmul.f32 %v5212, %v5280
        %v5354 = vmul.f32 %v5215, %v5285
        %v5355 = vmul.f32 %v5218, %v5290
        %v5356 = vmul.f32 %v5221, %v5295
        %v5357 = vmul.f32 %v5224, %v5300
        %v5358 = vmul.f32 %v5227, %v5305
        %v5359 = vmul.f32 %v5230, %v5310
        %v5360 = vmul.f32 %v5233, %v5315
        %v5361 = vmul.f32 %v5236, %v5320
        %v5362 = vmul.f32 %v5239, %v5325
        %v5363 = vmul.f32 %v5242, %v5330
        %v5364 = vmul.f32 %v5245, %v5335
        %v5365 = vmul.f32 %v5248, %v5340
        %v5366 = vmul.f32 %v5251, %v5345
        %v5367 = vmul.f32 %v5254, %v5350
        %v5368 = vld [vmem:[%s18] sm:$0xff]
        %v5369 = vld [vmem:[%s18 + $0x8] sm:$0xff]
        %v5370 = vld [vmem:[%s18 + $0x10] sm:$0xff]
        %v5371 = vld [vmem:[%s18 + $0x18] sm:$0xff]
        %v5372 = vld [vmem:[%s18 + $0x20] sm:$0xff]
        %v5373 = vld [vmem:[%s18 + $0x28] sm:$0xff]
        %v5374 = vld [vmem:[%s18 + $0x30] sm:$0xff]
        %v5375 = vld [vmem:[%s18 + $0x38] sm:$0xff]
        %v5376 = vld [vmem:[%s18 + $0x40] sm:$0xff]
        %v5377 = vld [vmem:[%s18 + $0x48] sm:$0xff]
        %v5378 = vld [vmem:[%s18 + $0x50] sm:$0xff]
        %v5379 = vld [vmem:[%s18 + $0x58] sm:$0xff]
        %v5380 = vld [vmem:[%s18 + $0x60] sm:$0xff]
        %v5381 = vld [vmem:[%s18 + $0x68] sm:$0xff]
        %v5382 = vld [vmem:[%s18 + $0x70] sm:$0xff]
        %v5383 = vld [vmem:[%s18 + $0x78] sm:$0xff]
        %5385 = vset.pattern.permute.xlu0 0
        %5386 = vperm.xlu0 %5385, %v5368
        %v5387 = vpop.permute.xlu0 %5386
        %5390 = vset.pattern.permute.xlu0 0
        %5391 = vperm.xlu0 %5390, %v5369
        %v5392 = vpop.permute.xlu0 %5391
        %5395 = vset.pattern.permute.xlu0 0
        %5396 = vperm.xlu0 %5395, %v5370
        %v5397 = vpop.permute.xlu0 %5396
        %5400 = vset.pattern.permute.xlu0 0
        %5401 = vperm.xlu0 %5400, %v5371
        %v5402 = vpop.permute.xlu0 %5401
        %5405 = vset.pattern.permute.xlu0 0
        %5406 = vperm.xlu0 %5405, %v5372
        %v5407 = vpop.permute.xlu0 %5406
        %5410 = vset.pattern.permute.xlu0 0
        %5411 = vperm.xlu0 %5410, %v5373
        %v5412 = vpop.permute.xlu0 %5411
        %5415 = vset.pattern.permute.xlu0 0
        %5416 = vperm.xlu0 %5415, %v5374
        %v5417 = vpop.permute.xlu0 %5416
        %5420 = vset.pattern.permute.xlu0 0
        %5421 = vperm.xlu0 %5420, %v5375
        %v5422 = vpop.permute.xlu0 %5421
        %5425 = vset.pattern.permute.xlu0 0
        %5426 = vperm.xlu0 %5425, %v5376
        %v5427 = vpop.permute.xlu0 %5426
        %5430 = vset.pattern.permute.xlu0 0
        %5431 = vperm.xlu0 %5430, %v5377
        %v5432 = vpop.permute.xlu0 %5431
        %5435 = vset.pattern.permute.xlu0 0
        %5436 = vperm.xlu0 %5435, %v5378
        %v5437 = vpop.permute.xlu0 %5436
        %5440 = vset.pattern.permute.xlu0 0
        %5441 = vperm.xlu0 %5440, %v5379
        %v5442 = vpop.permute.xlu0 %5441
        %5445 = vset.pattern.permute.xlu0 0
        %5446 = vperm.xlu0 %5445, %v5380
        %v5447 = vpop.permute.xlu0 %5446
        %5450 = vset.pattern.permute.xlu0 0
        %5451 = vperm.xlu0 %5450, %v5381
        %v5452 = vpop.permute.xlu0 %5451
        %5455 = vset.pattern.permute.xlu0 0
        %5456 = vperm.xlu0 %5455, %v5382
        %v5457 = vpop.permute.xlu0 %5456
        %5460 = vset.pattern.permute.xlu0 0
        %5461 = vperm.xlu0 %5460, %v5383
        %v5462 = vpop.permute.xlu0 %5461
        %v5464 = vadd.f32 %v5352, %v5387
        %v5465 = vadd.f32 %v5353, %v5392
        %v5466 = vadd.f32 %v5354, %v5397
        %v5467 = vadd.f32 %v5355, %v5402
        %v5468 = vadd.f32 %v5356, %v5407
        %v5469 = vadd.f32 %v5357, %v5412
        %v5470 = vadd.f32 %v5358, %v5417
        %v5471 = vadd.f32 %v5359, %v5422
        %v5472 = vadd.f32 %v5360, %v5427
        %v5473 = vadd.f32 %v5361, %v5432
        %v5474 = vadd.f32 %v5362, %v5437
        %v5475 = vadd.f32 %v5363, %v5442
        %v5476 = vadd.f32 %v5364, %v5447
        %v5477 = vadd.f32 %v5365, %v5452
        %v5478 = vadd.f32 %v5366, %v5457
        %v5479 = vadd.f32 %v5367, %v5462
        %v5480 = vmax.f32 %v5464, 0.0
        %v5481 = vmax.f32 %v5465, 0.0
        %v5482 = vmax.f32 %v5466, 0.0
        %v5483 = vmax.f32 %v5467, 0.0
        %v5484 = vmax.f32 %v5468, 0.0
        %v5485 = vmax.f32 %v5469, 0.0
        %v5486 = vmax.f32 %v5470, 0.0
        %v5487 = vmax.f32 %v5471, 0.0
        %v5488 = vmax.f32 %v5472, 0.0
        %v5489 = vmax.f32 %v5473, 0.0
        %v5490 = vmax.f32 %v5474, 0.0
        %v5491 = vmax.f32 %v5475, 0.0
        %v5492 = vmax.f32 %v5476, 0.0
        %v5493 = vmax.f32 %v5477, 0.0
        %v5494 = vmax.f32 %v5478, 0.0
        %v5495 = vmax.f32 %v5479, 0.0
        %vm5496 = vcmask 277504
        %v5498 = vsel %vm5496, %v5480, 0
        %v5501 = vsel %vm5496, %v5481, 0
        %v5504 = vsel %vm5496, %v5482, 0
        %v5507 = vsel %vm5496, %v5483, 0
        %v5510 = vsel %vm5496, %v5484, 0
        %v5513 = vsel %vm5496, %v5485, 0
        %v5516 = vsel %vm5496, %v5486, 0
        %v5519 = vsel %vm5496, %v5487, 0
        %v5522 = vsel %vm5496, %v5488, 0
        %v5525 = vsel %vm5496, %v5489, 0
        %v5528 = vsel %vm5496, %v5490, 0
        %v5531 = vsel %vm5496, %v5491, 0
        %v5534 = vsel %vm5496, %v5492, 0
        %v5537 = vsel %vm5496, %v5493, 0
        %v5540 = vsel %vm5496, %v5494, 0
        %v5543 = vsel %vm5496, %v5495, 0
        %vm5545 = vcmask 1041408
        %v5547 = vsel %vm5545, %v1885, 0
        %5549 = vmatpush.msra.mxu0 0.0
        %5550 = vmatpush.msra.mxu0 0.0
        %5551 = vmatpush.msra.mxu0 0.0
        %5552 = vmatpush.msra.mxu0 0.0
        %5553 = vmatpush.msra.mxu0 0.0
        %5554 = vmatpush.msra.mxu0 0.0
        %5555 = vmatpush.msra.mxu0 0.0
        %5556 = vmatpush.msra.mxu0 0.0
        %5557 = vmatpush.msra.mxu0 0.0
        %5558 = vmatpush.msra.mxu0 0.0
        %5559 = vmatpush.msra.mxu0 0.0
        %5560 = vmatpush.msra.mxu0 %v5547
        %5561 = vmatpush.msra.mxu0 %v1884
        %5562 = vmatpush.msra.mxu0 %v1883
        %5563 = vmatpush.msra.mxu0 %v1882
        %5564 = vmatpush.msra.mxu0 %v1881
        %5565 = vmatmul.f32.gmra.mxu0 %v5498
        %v5566 = vpop.f32.mrf.mxu0
        %v5567 = vadd.f32 0.0, %v5566
        %5568 = vmatmul.f32.gmra.mxu0 %v5501
        %v5569 = vpop.f32.mrf.mxu0
        %v5570 = vadd.f32 0.0, %v5569
        %5571 = vmatmul.f32.gmra.mxu0 %v5504
        %v5572 = vpop.f32.mrf.mxu0
        %v5573 = vadd.f32 0.0, %v5572
        %5574 = vmatmul.f32.gmra.mxu0 %v5507
        %v5575 = vpop.f32.mrf.mxu0
        %v5576 = vadd.f32 0.0, %v5575
        %5577 = vmatmul.f32.gmra.mxu0 %v5510
        %v5578 = vpop.f32.mrf.mxu0
        %v5579 = vadd.f32 0.0, %v5578
        %5580 = vmatmul.f32.gmra.mxu0 %v5513
        %v5581 = vpop.f32.mrf.mxu0
        %v5582 = vadd.f32 0.0, %v5581
        %5583 = vmatmul.f32.gmra.mxu0 %v5516
        %v5584 = vpop.f32.mrf.mxu0
        %v5585 = vadd.f32 0.0, %v5584
        %5586 = vmatmul.f32.gmra.mxu0 %v5519
        %v5587 = vpop.f32.mrf.mxu0
        %v5588 = vadd.f32 0.0, %v5587
        %5589 = vmatmul.f32.gmra.mxu0 %v5522
        %v5590 = vpop.f32.mrf.mxu0
        %v5591 = vadd.f32 0.0, %v5590
        %5592 = vmatmul.f32.gmra.mxu0 %v5525
        %v5593 = vpop.f32.mrf.mxu0
        %v5594 = vadd.f32 0.0, %v5593
        %5595 = vmatmul.f32.gmra.mxu0 %v5528
        %v5596 = vpop.f32.mrf.mxu0
        %v5597 = vadd.f32 0.0, %v5596
        %5598 = vmatmul.f32.gmra.mxu0 %v5531
        %v5599 = vpop.f32.mrf.mxu0
        %v5600 = vadd.f32 0.0, %v5599
        %5601 = vmatmul.f32.gmra.mxu0 %v5534
        %v5602 = vpop.f32.mrf.mxu0
        %v5603 = vadd.f32 0.0, %v5602
        %5604 = vmatmul.f32.gmra.mxu0 %v5537
        %v5605 = vpop.f32.mrf.mxu0
        %v5606 = vadd.f32 0.0, %v5605
        %5607 = vmatmul.f32.gmra.mxu0 %v5540
        %v5608 = vpop.f32.mrf.mxu0
        %v5609 = vadd.f32 0.0, %v5608
        %5610 = vmatmul.f32.gmra.mxu0 %v5543
        %v5611 = vpop.f32.mrf.mxu0
        %v5612 = vadd.f32 0.0, %v5611
        %5613 = vdwg.mxu0
        %v5615 = vsel %vm5545, %v1973, 0
        %5617 = vmatpush.msra.mxu0 0.0
        %5618 = vmatpush.msra.mxu0 0.0
        %5619 = vmatpush.msra.mxu0 0.0
        %5620 = vmatpush.msra.mxu0 0.0
        %5621 = vmatpush.msra.mxu0 0.0
        %5622 = vmatpush.msra.mxu0 0.0
        %5623 = vmatpush.msra.mxu0 0.0
        %5624 = vmatpush.msra.mxu0 0.0
        %5625 = vmatpush.msra.mxu0 0.0
        %5626 = vmatpush.msra.mxu0 0.0
        %5627 = vmatpush.msra.mxu0 0.0
        %5628 = vmatpush.msra.mxu0 %v5615
        %5629 = vmatpush.msra.mxu0 %v1972
        %5630 = vmatpush.msra.mxu0 %v1971
        %5631 = vmatpush.msra.mxu0 %v1970
        %5632 = vmatpush.msra.mxu0 %v1969
        %5633 = vmatmul.f32.gmra.mxu0 %v5498
        %v5634 = vpop.f32.mrf.mxu0
        %v5635 = vadd.f32 0.0, %v5634
        %5636 = vmatmul.f32.gmra.mxu0 %v5501
        %v5637 = vpop.f32.mrf.mxu0
        %v5638 = vadd.f32 0.0, %v5637
        %5639 = vmatmul.f32.gmra.mxu0 %v5504
        %v5640 = vpop.f32.mrf.mxu0
        %v5641 = vadd.f32 0.0, %v5640
        %5642 = vmatmul.f32.gmra.mxu0 %v5507
        %v5643 = vpop.f32.mrf.mxu0
        %v5644 = vadd.f32 0.0, %v5643
        %5645 = vmatmul.f32.gmra.mxu0 %v5510
        %v5646 = vpop.f32.mrf.mxu0
        %v5647 = vadd.f32 0.0, %v5646
        %5648 = vmatmul.f32.gmra.mxu0 %v5513
        %v5649 = vpop.f32.mrf.mxu0
        %v5650 = vadd.f32 0.0, %v5649
        %5651 = vmatmul.f32.gmra.mxu0 %v5516
        %v5652 = vpop.f32.mrf.mxu0
        %v5653 = vadd.f32 0.0, %v5652
        %5654 = vmatmul.f32.gmra.mxu0 %v5519
        %v5655 = vpop.f32.mrf.mxu0
        %v5656 = vadd.f32 0.0, %v5655
        %5657 = vmatmul.f32.gmra.mxu0 %v5522
        %v5658 = vpop.f32.mrf.mxu0
        %v5659 = vadd.f32 0.0, %v5658
        %5660 = vmatmul.f32.gmra.mxu0 %v5525
        %v5661 = vpop.f32.mrf.mxu0
        %v5662 = vadd.f32 0.0, %v5661
        %5663 = vmatmul.f32.gmra.mxu0 %v5528
        %v5664 = vpop.f32.mrf.mxu0
        %v5665 = vadd.f32 0.0, %v5664
        %5666 = vmatmul.f32.gmra.mxu0 %v5531
        %v5667 = vpop.f32.mrf.mxu0
        %v5668 = vadd.f32 0.0, %v5667
        %5669 = vmatmul.f32.gmra.mxu0 %v5534
        %v5670 = vpop.f32.mrf.mxu0
        %v5671 = vadd.f32 0.0, %v5670
        %5672 = vmatmul.f32.gmra.mxu0 %v5537
        %v5673 = vpop.f32.mrf.mxu0
        %v5674 = vadd.f32 0.0, %v5673
        %5675 = vmatmul.f32.gmra.mxu0 %v5540
        %v5676 = vpop.f32.mrf.mxu0
        %v5677 = vadd.f32 0.0, %v5676
        %5678 = vmatmul.f32.gmra.mxu0 %v5543
        %v5679 = vpop.f32.mrf.mxu0
        %v5680 = vadd.f32 0.0, %v5679
        %5681 = vdwg.mxu0
        %v5682 = vmax.f32 %v5567, %v5635
        %v5683 = vmax.f32 %v5570, %v5638
        %v5684 = vmax.f32 %v5573, %v5641
        %v5685 = vmax.f32 %v5576, %v5644
        %v5686 = vmax.f32 %v5579, %v5647
        %v5687 = vmax.f32 %v5582, %v5650
        %v5688 = vmax.f32 %v5585, %v5653
        %v5689 = vmax.f32 %v5588, %v5656
        %v5690 = vmax.f32 %v5591, %v5659
        %v5691 = vmax.f32 %v5594, %v5662
        %v5692 = vmax.f32 %v5597, %v5665
        %v5693 = vmax.f32 %v5600, %v5668
        %v5694 = vmax.f32 %v5603, %v5671
        %v5695 = vmax.f32 %v5606, %v5674
        %v5696 = vmax.f32 %v5609, %v5677
        %v5697 = vmax.f32 %v5612, %v5680
        %vm5698 = vcmask 138240
        %5699 = vst.msk [vmem:[%s616] sm:$0xff] %vm5698, %v5682
        %5700 = vst.msk [vmem:[%s616 + $0x8] sm:$0xff] %vm5698, %v5683
        %5701 = vst.msk [vmem:[%s616 + $0x10] sm:$0xff] %vm5698, %v5684
        %5702 = vst.msk [vmem:[%s616 + $0x18] sm:$0xff] %vm5698, %v5685
        %5703 = vst.msk [vmem:[%s616 + $0x20] sm:$0xff] %vm5698, %v5686
        %5704 = vst.msk [vmem:[%s616 + $0x28] sm:$0xff] %vm5698, %v5687
        %5705 = vst.msk [vmem:[%s616 + $0x30] sm:$0xff] %vm5698, %v5688
        %5706 = vst.msk [vmem:[%s616 + $0x38] sm:$0xff] %vm5698, %v5689
        %5707 = vst.msk [vmem:[%s616 + $0x40] sm:$0xff] %vm5698, %v5690
        %5708 = vst.msk [vmem:[%s616 + $0x48] sm:$0xff] %vm5698, %v5691
        %5709 = vst.msk [vmem:[%s616 + $0x50] sm:$0xff] %vm5698, %v5692
        %5710 = vst.msk [vmem:[%s616 + $0x58] sm:$0xff] %vm5698, %v5693
        %5711 = vst.msk [vmem:[%s616 + $0x60] sm:$0xff] %vm5698, %v5694
        %5712 = vst.msk [vmem:[%s616 + $0x68] sm:$0xff] %vm5698, %v5695
        %5713 = vst.msk [vmem:[%s616 + $0x70] sm:$0xff] %vm5698, %v5696
        %5714 = vst.msk [vmem:[%s616 + $0x78] sm:$0xff] %vm5698, %v5697
        %p5715 = scmp.lt.s32.totalorder %s31, 1
        %s5716 = scalar_select %p5715, %s31, 1
        %s5717 = smul.addr %s5716, 16
        %s5718 = smul.addr %s5717, 8
        %s5719 = scalar_lea.vmem %s19, %s5718
        // Predicated region
        $region101: #{tpu_custom_call.1} parent=95 // pred_check
          %p5720 = pneg %p453
        $region102: #{tpu_custom_call.1} parent=95 // pred_check_branch
          %5722 = sbr.rel (%p5720) target = $region104
        $region103: #{tpu_custom_call.1} parent=95 // pred_region
          _
        $region104: #{tpu_custom_call.1} parent=95 // pred_fallthru
          _
      $region96: #{tpu_custom_call.1} parent=5 // pred_fallthru
        _
      %p5723 = scmp.le.s32.totalorder 2, %s26
      // Predicated region
      $region105: #{tpu_custom_call.1} parent=5 // pred_check
        %p5724 = pneg %p5723
      $region106: #{tpu_custom_call.1} parent=5 // pred_check_branch
        %5726 = sbr.rel (%p5724) target = $region108
      $region107: #{tpu_custom_call.1} parent=5 // pred_region
        %s5727 = ssub.s32 %s26, 2
        // Predicated region
        $region109: #{tpu_custom_call.1} parent=107 // pred_check
          %p5728 = pneg %p459
        $region110: #{tpu_custom_call.1} parent=107 // pred_check_branch
          %5730 = sbr.rel (%p5728) target = $region112
        $region111: #{tpu_custom_call.1} parent=107 // pred_region
          %p5731 = scmp.lt.s32.totalorder %s32, 1
          %s5732 = scalar_select %p5731, %s32, 1
          %s5733 = smul.addr %s5732, 16
          %s5734 = smul.addr %s5733, 8
          %s5735 = scalar_lea.vmem %s19, %s5734
        $region112: #{tpu_custom_call.1} parent=107 // pred_fallthru
          _
      $region108: #{tpu_custom_call.1} parent=5 // pred_fallthru
        _
    $region6: #{tpu_custom_call.1} parent=1 // loop_footer
      %s30 = sadd.s32 1, %s26
    $region7: #{tpu_custom_call.1} parent=1 // loop_footer_branch
      %25 = sbr.rel target = $region3
    $region8: #{tpu_custom_call.1} parent=1 // loop_exit
      _
    %5736 = vsyncpa [#allocation3], 1
    %s5737 = scalar_lea.sflag [#allocation3], 1
    %5738 = vsyncpa %s5737, 1

</llo_original>
